<compile_context>
chip_gen: v6e
topology: v6e:2x2x1
jax: 0.10.0
libtpu: 0.0.40
codegen_flags: <defaults>
</compile_context>

<pallas_src>
import functools

import jax
import jax.numpy as jnp
from jax.experimental import pallas as pl
from jax.experimental.pallas import tpu as pltpu


def _rnn_decoder_kernel(x_ref, hx_ref, cx_ref,
                        wih_ref, whh_ref, b_ref,
                        wblk_ref, bblk_ref,
                        out_ref, acts_ref, *, times, hidden):
    """One row-tile of the decoder.

    x_ref    : [TM, C]            bf16  flattened input rows (same input every step)
    hx_ref   : [TM, H]            f32   initial hidden state for these rows
    cx_ref   : [TM, H]            f32   initial cell state for these rows
    wih_ref  : [C, 4H]            bf16  W_ih^T (gate order i, f, g, o; g rows pre-scaled by 2)
    whh_ref  : [H, 4H]            bf16  W_hh^T (g rows pre-scaled by 2)
    b_ref    : [1, 4H]            f32   b_ih + b_hh (g entries pre-scaled by 2)
    wblk_ref : [times*H, times*O] bf16  block-diag of linear1.weight^T
    bblk_ref : [1, times*O]       f32   linear1.bias tiled `times` times
    out_ref  : [TM, times*O]      f32   row-major outputs, column index = t*O + o
    acts_ref : [TM, times*H]      bf16  VMEM scratch — per-timestep LeakyReLU(hx)
    """
    H = hidden

    # Loop-invariant loads, hoisted out of the unrolled recurrence.
    x = x_ref[...]
    whh = whh_ref[...]
    cx = cx_ref[...].astype(jnp.float32)
    hx = hx_ref[...].astype(jnp.float32)

    # Input contribution to the gates is identical every timestep — compute once.
    # g-gate columns carry 2*z thanks to the pre-scaled weights/bias, so one
    # sigmoid pass per step is enough: tanh(z) = 2*sigmoid(2z) - 1.
    x_gates = (jnp.dot(x, wih_ref[...], preferred_element_type=jnp.float32)
               + b_ref[...])                                        # [TM, 4H] f32

    for t in range(times):      # static unroll: `times` is a compile-time constant
        gates = x_gates + jnp.dot(hx.astype(jnp.bfloat16), whh,
                                  preferred_element_type=jnp.float32)  # [TM, 4H]

        # Single full-width EUP pass per step.
        sig = jax.nn.sigmoid(gates)
        i_g = sig[:, 0 * H:1 * H]
        f_g = sig[:, 1 * H:2 * H]
        g_g = 2.0 * sig[:, 2 * H:3 * H] - 1.0       # = tanh(z_g)
        o_g = sig[:, 3 * H:4 * H]

        cx = f_g * cx + i_g * g_g
        hx = o_g * jnp.tanh(cx)

        # TODO(synk): nn.Dropout(0.1) is identity in eval mode; training-mode
        # dropout masks are not applied here.
        act = jnp.maximum(hx, 0.01 * hx)            # LeakyReLU(0.01)
        # Stream into VMEM scratch (bounds vreg live ranges to one timestep).
        acts_ref[:, t * H:(t + 1) * H] = act.astype(jnp.bfloat16)

    # Single wide linear over all timesteps (one MXU call, one lane-dense store):
    #   out[r, t*O + o] = sum_h act_t[r, h] * W_lin^T[h, o] + b_lin[o]
    y = (jnp.dot(acts_ref[...], wblk_ref[...], preferred_element_type=jnp.float32)
         + bblk_ref[...])                                            # [TM, times*O]
    out_ref[...] = y.astype(out_ref.dtype)


def _tensorcores_per_chip():
    """Best-effort TensorCore-per-chip count; never raises."""
    try:
        kind = jax.devices()[0].device_kind.lower()
    except Exception:
        return 2
    # Single-TC chips: v5e / v6e (a.k.a. "v5 lite" / "v6 lite").
    if any(t in kind for t in ("v5e", "v5 lite", "v5lite", "v6e", "v6 lite", "v6lite")):
        return 1
    # v7x (2 TCs/chip) and megacore chips (v4/v5p): keep 2-way grid sharding.
    return 2


def rnn_decoder_forward(x, hidden, params, *, times, tile_rows=None):
    """Pallas implementation of RNN_Decoder.forward (eval mode).

    x      : [bs, C, h, w]   (NCHW, like the PyTorch module)
    hidden : (hx, cx), each [bs*h*w, H]
    returns: [bs, h, w, times, O]
    """
    hx, cx = hidden
    bs, c, h, w = x.shape
    H = hx.shape[-1]
    O = params["w_lin"].shape[0]

    # NCHW -> (N, C) rows, same as x.permute(0,2,3,1).reshape(-1, C)
    x_rows = jnp.transpose(x, (0, 2, 3, 1)).reshape(-1, c)
    N = x_rows.shape[0]

    # Per-chip tile choice: one big tile on single-TC chips, N // num_TC on
    # 2-TC chips so both cores get a "parallel" grid step.
    if tile_rows is None:
        n_tc = _tensorcores_per_chip()
        tile_rows = N if n_tc <= 1 else N // n_tc
    tile_rows = min(tile_rows, N)
    if N % tile_rows != 0 or tile_rows % 8 != 0:
        tile_rows = N                      # safe fallback: single tile
    assert N % tile_rows == 0, "row count must be a multiple of the row tile"

    # Pre-transpose weights / fuse biases; MXU operands in bf16.
    # Fold the tanh(z) = 2*sigmoid(2z) - 1 rewrite into the (already existing)
    # weight prep: double the g-gate rows of W_ih, W_hh and the fused bias so
    # the kernel's single sigmoid pass sees 2z on the g-gate columns.  The *2
    # is exact in bf16 (exponent bump), so no extra rounding vs. in-kernel.
    gate_scale = jnp.ones((4 * H, 1), jnp.float32).at[2 * H:3 * H].set(2.0)
    wih_t = (params["w_ih"] * gate_scale).T.astype(jnp.bfloat16)     # [C, 4H]
    whh_t = (params["w_hh"] * gate_scale).T.astype(jnp.bfloat16)     # [H, 4H]
    b = ((params["b_ih"] + params["b_hh"]) * gate_scale[:, 0]
         ).reshape(1, 4 * H).astype(jnp.float32)

    # Block-diagonal linear weight so the per-timestep projection becomes one
    # wide matmul producing the [TM, times*O] output directly (no transpose).
    wlin_t = params["w_lin"].T                                       # [H, O]
    w_blk = jnp.kron(jnp.eye(times, dtype=wlin_t.dtype),
                     wlin_t).astype(jnp.bfloat16)                    # [times*H, times*O]
    b_blk = jnp.tile(params["b_lin"].reshape(1, O),
                     (1, times)).astype(jnp.float32)                 # [1, times*O]

    x_rows = x_rows.astype(jnp.bfloat16)

    kernel = functools.partial(_rnn_decoder_kernel, times=times, hidden=H)

    out = pl.pallas_call(
        kernel,
        out_shape=jax.ShapeDtypeStruct((N, times * O), jnp.float32),
        grid_spec=pltpu.PrefetchScalarGridSpec(
            num_scalar_prefetch=0,
            grid=(N // tile_rows,),
            in_specs=[
                pl.BlockSpec((tile_rows, c), lambda i: (i, 0)),          # x rows
                pl.BlockSpec((tile_rows, H), lambda i: (i, 0)),          # hx
                pl.BlockSpec((tile_rows, H), lambda i: (i, 0)),          # cx
                pl.BlockSpec((c, 4 * H), lambda i: (0, 0)),              # W_ih^T (g rows *2)
                pl.BlockSpec((H, 4 * H), lambda i: (0, 0)),              # W_hh^T (g rows *2)
                pl.BlockSpec((1, 4 * H), lambda i: (0, 0)),              # fused bias (g *2)
                pl.BlockSpec((times * H, times * O), lambda i: (0, 0)),  # block-diag W_lin^T
                pl.BlockSpec((1, times * O), lambda i: (0, 0)),          # tiled b_lin
            ],
            out_specs=pl.BlockSpec((tile_rows, times * O), lambda i: (i, 0)),
            scratch_shapes=[
                pltpu.VMEM((tile_rows, times * H), jnp.bfloat16),        # streamed activations
            ],
        ),
        compiler_params=pltpu.CompilerParams(
            dimension_semantics=("parallel",)),
    )(x_rows, hx, cx, wih_t, whh_t, b, w_blk, b_blk)

    # [N, times*O] -> (bs, h, w, times, O): pure reshape, no data movement.
    return out.reshape(bs, h, w, times, O)


def _reference_forward(x, hidden, params, *, times):
    """Pure-JAX f32 reference mirroring the PyTorch forward (eval mode)."""
    hx, cx = hidden
    bs, c, h, w = x.shape
    H = hx.shape[-1]
    x_rows = jnp.transpose(x, (0, 2, 3, 1)).reshape(-1, c)

    w_ih, w_hh = params["w_ih"], params["w_hh"]
    b = params["b_ih"] + params["b_hh"]
    outs = []
    for _ in range(times):
        gates = x_rows @ w_ih.T + hx @ w_hh.T + b
        i_g = jax.nn.sigmoid(gates[:, 0 * H:1 * H])
        f_g = jax.nn.sigmoid(gates[:, 1 * H:2 * H])
        g_g = jnp.tanh(gates[:, 2 * H:3 * H])
        o_g = jax.nn.sigmoid(gates[:, 3 * H:4 * H])
        cx = f_g * cx + i_g * g_g
        hx = o_g * jnp.tanh(cx)
        outs.append(hx)
    lin_in = jnp.stack(outs, axis=0).reshape(-1, H)
    act = jnp.where(lin_in > 0, lin_in, 0.01 * lin_in)
    y = act @ params["w_lin"].T + params["b_lin"]
    y = y.reshape(times, bs, h, w, -1)
    return jnp.transpose(y, (1, 2, 3, 0, 4))


def init_params(key, input_size, hidden_size, output_size):
    """Deterministic parameter init (PyTorch-style uniform(-1/sqrt(H), 1/sqrt(H)))."""
    ks = jax.random.split(key, 6)
    k = 1.0 / jnp.sqrt(hidden_size)
    u = lambda kk, shape: jax.random.uniform(kk, shape, jnp.float32, -k, k)
    return {
        "w_ih": u(ks[0], (4 * hidden_size, input_size)),
        "w_hh": u(ks[1], (4 * hidden_size, hidden_size)),
        "b_ih": u(ks[2], (4 * hidden_size,)),
        "b_hh": u(ks[3], (4 * hidden_size,)),
        "w_lin": u(ks[4], (output_size, hidden_size)),
        "b_lin": u(ks[5], (output_size,)),
    }


if __name__ == "__main__":
    # Small shapes consistent with the module (x: BS x C x H x W).
    bs, c, h, w = 2, 4, 16, 16          # input_size = c = 4
    hidden_size = 32
    output_size = 8
    times = 4
    N = bs * h * w                      # samples_size = 512

    key = jax.random.PRNGKey(0)
    kx, kh, kc, kp = jax.random.split(key, 4)

    x = jax.random.normal(kx, (bs, c, h, w), jnp.float32)
    hx0 = jax.random.normal(kh, (N, hidden_size), jnp.float32) * 0.1
    cx0 = jax.random.normal(kc, (N, hidden_size), jnp.float32) * 0.1
    params = init_params(kp, c, hidden_size, output_size)

    out = rnn_decoder_forward(x, (hx0, cx0), params, times=times)
    out = jax.block_until_ready(out)

    ref = _reference_forward(x, (hx0, cx0), params, times=times)
    assert out.shape == (bs, h, w, times, output_size), out.shape
    # Tolerance accounts for bf16 MXU operands vs. the pure-f32 reference
    # (accumulation is f32 in both); tanh(z)=2*sigmoid(2z)-1 is exact in math,
    # only adds rounding at the EUP output level.
    assert jnp.allclose(out, ref, atol=3e-2, rtol=3e-2), \
        float(jnp.max(jnp.abs(out - ref)))

    print("KERNEL_OK")
</pallas_src>

<mosaic_0001>
module attributes {stable_mosaic.version = 11 : i64} {
  func.func @_rnn_decoder_kernel(%arg0: i32, %arg1: memref<256x4xbf16, #tpu.memory_space<vmem>>, %arg2: memref<256x32xf32, #tpu.memory_space<vmem>>, %arg3: memref<256x32xf32, #tpu.memory_space<vmem>>, %arg4: memref<4x128xbf16, #tpu.memory_space<vmem>>, %arg5: memref<32x128xbf16, #tpu.memory_space<vmem>>, %arg6: memref<1x128xf32, #tpu.memory_space<vmem>>, %arg7: memref<128x32xbf16, #tpu.memory_space<vmem>>, %arg8: memref<1x32xf32, #tpu.memory_space<vmem>>, %arg9: memref<256x32xf32, #tpu.memory_space<vmem>>, %arg10: memref<256x128xbf16, #tpu.memory_space<vmem>>) attributes {dimension_semantics = [#tpu.dimension_semantics<parallel>], iteration_bounds = array<i64: 2>, scalar_prefetch = 0 : i64, scratch_operands = 1 : i64, tpu.core_type = #tpu.core_type<tc>, window_params = [{transform_indices = @transform_0, window_bounds = array<i64: 256, 4>}, {transform_indices = @transform_1, window_bounds = array<i64: 256, 32>}, {transform_indices = @transform_2, window_bounds = array<i64: 256, 32>}, {pipeline_mode = #tpu.pipeline_mode<synchronous>, transform_indices = @transform_3, window_bounds = array<i64: 4, 128>}, {pipeline_mode = #tpu.pipeline_mode<synchronous>, transform_indices = @transform_4, window_bounds = array<i64: 32, 128>}, {pipeline_mode = #tpu.pipeline_mode<synchronous>, transform_indices = @transform_5, window_bounds = array<i64: 1, 128>}, {pipeline_mode = #tpu.pipeline_mode<synchronous>, transform_indices = @transform_6, window_bounds = array<i64: 128, 32>}, {pipeline_mode = #tpu.pipeline_mode<synchronous>, transform_indices = @transform_7, window_bounds = array<i64: 1, 32>}, {transform_indices = @transform_8, window_bounds = array<i64: 256, 32>}]} {
    %c0 = arith.constant 0 : index
    %c0_0 = arith.constant 0 : index
    %0 = vector.load %arg1[%c0, %c0_0] : memref<256x4xbf16, #tpu.memory_space<vmem>>, vector<256x4xbf16>
    %c0_1 = arith.constant 0 : index
    %c0_2 = arith.constant 0 : index
    %1 = vector.load %arg5[%c0_1, %c0_2] : memref<32x128xbf16, #tpu.memory_space<vmem>>, vector<32x128xbf16>
    %c0_3 = arith.constant 0 : index
    %c0_4 = arith.constant 0 : index
    %2 = vector.load %arg3[%c0_3, %c0_4] : memref<256x32xf32, #tpu.memory_space<vmem>>, vector<256x32xf32>
    %c0_5 = arith.constant 0 : index
    %c0_6 = arith.constant 0 : index
    %3 = vector.load %arg2[%c0_5, %c0_6] : memref<256x32xf32, #tpu.memory_space<vmem>>, vector<256x32xf32>
    %c0_7 = arith.constant 0 : index
    %c0_8 = arith.constant 0 : index
    %4 = vector.load %arg4[%c0_7, %c0_8] : memref<4x128xbf16, #tpu.memory_space<vmem>>, vector<4x128xbf16>
    %cst = arith.constant dense<0.000000e+00> : vector<256x128xf32>
    %5 = tpu.matmul %0, %4, %cst {dimension_numbers = #tpu.dot_dimension_numbers<[1], [0], [0], [1], [0, 0, 1, 1], [], []>} : vector<256x4xbf16>, vector<4x128xbf16>, vector<256x128xf32> -> vector<256x128xf32>
    %c0_9 = arith.constant 0 : index
    %c0_10 = arith.constant 0 : index
    %6 = vector.load %arg6[%c0_9, %c0_10] : memref<1x128xf32, #tpu.memory_space<vmem>>, vector<1x128xf32>
    %7 = vector.broadcast %6 : vector<1x128xf32> to vector<256x128xf32>
    %8 = arith.addf %5, %7 : vector<256x128xf32>
    %9 = arith.truncf %3 : vector<256x32xf32> to vector<256x32xbf16>
    %cst_11 = arith.constant dense<0.000000e+00> : vector<256x128xf32>
    %10 = tpu.matmul %9, %1, %cst_11 {dimension_numbers = #tpu.dot_dimension_numbers<[1], [0], [0], [1], [0, 0, 1, 1], [], []>} : vector<256x32xbf16>, vector<32x128xbf16>, vector<256x128xf32> -> vector<256x128xf32>
    %11 = arith.addf %8, %10 : vector<256x128xf32>
    %12 = arith.negf %11 : vector<256x128xf32>
    %13 = math.exp %12 : vector<256x128xf32>
    %cst_12 = arith.constant 1.000000e+00 : f32
    %14 = vector.broadcast %cst_12 : f32 to vector<256x128xf32>
    %15 = arith.addf %14, %13 : vector<256x128xf32>
    %16 = arith.divf %14, %15 : vector<256x128xf32>
    %17 = vector.extract_strided_slice %16 {offsets = [0, 0], sizes = [256, 32], strides = [1, 1]} : vector<256x128xf32> to vector<256x32xf32>
    %18 = vector.extract_strided_slice %16 {offsets = [0, 32], sizes = [256, 32], strides = [1, 1]} : vector<256x128xf32> to vector<256x32xf32>
    %19 = vector.extract_strided_slice %16 {offsets = [0, 64], sizes = [256, 32], strides = [1, 1]} : vector<256x128xf32> to vector<256x32xf32>
    %cst_13 = arith.constant 2.000000e+00 : f32
    %20 = vector.broadcast %cst_13 : f32 to vector<256x32xf32>
    %21 = arith.mulf %20, %19 : vector<256x32xf32>
    %cst_14 = arith.constant 1.000000e+00 : f32
    %22 = vector.broadcast %cst_14 : f32 to vector<256x32xf32>
    %23 = arith.subf %21, %22 : vector<256x32xf32>
    %24 = vector.extract_strided_slice %16 {offsets = [0, 96], sizes = [256, 32], strides = [1, 1]} : vector<256x128xf32> to vector<256x32xf32>
    %25 = arith.mulf %18, %2 : vector<256x32xf32>
    %26 = arith.mulf %17, %23 : vector<256x32xf32>
    %27 = arith.addf %25, %26 : vector<256x32xf32>
    %28 = math.tanh %27 : vector<256x32xf32>
    %29 = arith.mulf %24, %28 : vector<256x32xf32>
    %cst_15 = arith.constant 0.00999999977 : f32
    %30 = vector.broadcast %cst_15 : f32 to vector<256x32xf32>
    %31 = arith.mulf %30, %29 : vector<256x32xf32>
    %32 = arith.maximumf %29, %31 : vector<256x32xf32>
    %33 = arith.truncf %32 : vector<256x32xf32> to vector<256x32xbf16>
    %c0_16 = arith.constant 0 : index
    %c0_17 = arith.constant 0 : index
    %34 = vector.load %arg10[%c0_16, %c0_17] : memref<256x128xbf16, #tpu.memory_space<vmem>>, vector<256x32xbf16>
    tpu.vector_store %arg10[%c0_16, %c0_17], %33 {strides = array<i32>} : memref<256x128xbf16, #tpu.memory_space<vmem>>, vector<256x32xbf16>,
    %35 = arith.truncf %29 : vector<256x32xf32> to vector<256x32xbf16>
    %cst_18 = arith.constant dense<0.000000e+00> : vector<256x128xf32>
    %36 = tpu.matmul %35, %1, %cst_18 {dimension_numbers = #tpu.dot_dimension_numbers<[1], [0], [0], [1], [0, 0, 1, 1], [], []>} : vector<256x32xbf16>, vector<32x128xbf16>, vector<256x128xf32> -> vector<256x128xf32>
    %37 = arith.addf %8, %36 : vector<256x128xf32>
    %38 = arith.negf %37 : vector<256x128xf32>
    %39 = math.exp %38 : vector<256x128xf32>
    %cst_19 = arith.constant 1.000000e+00 : f32
    %40 = vector.broadcast %cst_19 : f32 to vector<256x128xf32>
    %41 = arith.addf %40, %39 : vector<256x128xf32>
    %42 = arith.divf %40, %41 : vector<256x128xf32>
    %43 = vector.extract_strided_slice %42 {offsets = [0, 0], sizes = [256, 32], strides = [1, 1]} : vector<256x128xf32> to vector<256x32xf32>
    %44 = vector.extract_strided_slice %42 {offsets = [0, 32], sizes = [256, 32], strides = [1, 1]} : vector<256x128xf32> to vector<256x32xf32>
    %45 = vector.extract_strided_slice %42 {offsets = [0, 64], sizes = [256, 32], strides = [1, 1]} : vector<256x128xf32> to vector<256x32xf32>
    %cst_20 = arith.constant 2.000000e+00 : f32
    %46 = vector.broadcast %cst_20 : f32 to vector<256x32xf32>
    %47 = arith.mulf %46, %45 : vector<256x32xf32>
    %cst_21 = arith.constant 1.000000e+00 : f32
    %48 = vector.broadcast %cst_21 : f32 to vector<256x32xf32>
    %49 = arith.subf %47, %48 : vector<256x32xf32>
    %50 = vector.extract_strided_slice %42 {offsets = [0, 96], sizes = [256, 32], strides = [1, 1]} : vector<256x128xf32> to vector<256x32xf32>
    %51 = arith.mulf %44, %27 : vector<256x32xf32>
    %52 = arith.mulf %43, %49 : vector<256x32xf32>
    %53 = arith.addf %51, %52 : vector<256x32xf32>
    %54 = math.tanh %53 : vector<256x32xf32>
    %55 = arith.mulf %50, %54 : vector<256x32xf32>
    %cst_22 = arith.constant 0.00999999977 : f32
    %56 = vector.broadcast %cst_22 : f32 to vector<256x32xf32>
    %57 = arith.mulf %56, %55 : vector<256x32xf32>
    %58 = arith.maximumf %55, %57 : vector<256x32xf32>
    %59 = arith.truncf %58 : vector<256x32xf32> to vector<256x32xbf16>
    %c0_23 = arith.constant 0 : index
    %c32 = arith.constant 32 : index
    %60 = vector.load %arg10[%c0_23, %c32] : memref<256x128xbf16, #tpu.memory_space<vmem>>, vector<256x32xbf16>
    tpu.vector_store %arg10[%c0_23, %c32], %59 {strides = array<i32>} : memref<256x128xbf16, #tpu.memory_space<vmem>>, vector<256x32xbf16>,
    %61 = arith.truncf %55 : vector<256x32xf32> to vector<256x32xbf16>
    %cst_24 = arith.constant dense<0.000000e+00> : vector<256x128xf32>
    %62 = tpu.matmul %61, %1, %cst_24 {dimension_numbers = #tpu.dot_dimension_numbers<[1], [0], [0], [1], [0, 0, 1, 1], [], []>} : vector<256x32xbf16>, vector<32x128xbf16>, vector<256x128xf32> -> vector<256x128xf32>
    %63 = arith.addf %8, %62 : vector<256x128xf32>
    %64 = arith.negf %63 : vector<256x128xf32>
    %65 = math.exp %64 : vector<256x128xf32>
    %cst_25 = arith.constant 1.000000e+00 : f32
    %66 = vector.broadcast %cst_25 : f32 to vector<256x128xf32>
    %67 = arith.addf %66, %65 : vector<256x128xf32>
    %68 = arith.divf %66, %67 : vector<256x128xf32>
    %69 = vector.extract_strided_slice %68 {offsets = [0, 0], sizes = [256, 32], strides = [1, 1]} : vector<256x128xf32> to vector<256x32xf32>
    %70 = vector.extract_strided_slice %68 {offsets = [0, 32], sizes = [256, 32], strides = [1, 1]} : vector<256x128xf32> to vector<256x32xf32>
    %71 = vector.extract_strided_slice %68 {offsets = [0, 64], sizes = [256, 32], strides = [1, 1]} : vector<256x128xf32> to vector<256x32xf32>
    %cst_26 = arith.constant 2.000000e+00 : f32
    %72 = vector.broadcast %cst_26 : f32 to vector<256x32xf32>
    %73 = arith.mulf %72, %71 : vector<256x32xf32>
    %cst_27 = arith.constant 1.000000e+00 : f32
    %74 = vector.broadcast %cst_27 : f32 to vector<256x32xf32>
    %75 = arith.subf %73, %74 : vector<256x32xf32>
    %76 = vector.extract_strided_slice %68 {offsets = [0, 96], sizes = [256, 32], strides = [1, 1]} : vector<256x128xf32> to vector<256x32xf32>
    %77 = arith.mulf %70, %53 : vector<256x32xf32>
    %78 = arith.mulf %69, %75 : vector<256x32xf32>
    %79 = arith.addf %77, %78 : vector<256x32xf32>
    %80 = math.tanh %79 : vector<256x32xf32>
    %81 = arith.mulf %76, %80 : vector<256x32xf32>
    %cst_28 = arith.constant 0.00999999977 : f32
    %82 = vector.broadcast %cst_28 : f32 to vector<256x32xf32>
    %83 = arith.mulf %82, %81 : vector<256x32xf32>
    %84 = arith.maximumf %81, %83 : vector<256x32xf32>
    %85 = arith.truncf %84 : vector<256x32xf32> to vector<256x32xbf16>
    %c0_29 = arith.constant 0 : index
    %c64 = arith.constant 64 : index
    %86 = vector.load %arg10[%c0_29, %c64] : memref<256x128xbf16, #tpu.memory_space<vmem>>, vector<256x32xbf16>
    tpu.vector_store %arg10[%c0_29, %c64], %85 {strides = array<i32>} : memref<256x128xbf16, #tpu.memory_space<vmem>>, vector<256x32xbf16>,
    %87 = arith.truncf %81 : vector<256x32xf32> to vector<256x32xbf16>
    %cst_30 = arith.constant dense<0.000000e+00> : vector<256x128xf32>
    %88 = tpu.matmul %87, %1, %cst_30 {dimension_numbers = #tpu.dot_dimension_numbers<[1], [0], [0], [1], [0, 0, 1, 1], [], []>} : vector<256x32xbf16>, vector<32x128xbf16>, vector<256x128xf32> -> vector<256x128xf32>
    %89 = arith.addf %8, %88 : vector<256x128xf32>
    %90 = arith.negf %89 : vector<256x128xf32>
    %91 = math.exp %90 : vector<256x128xf32>
    %cst_31 = arith.constant 1.000000e+00 : f32
    %92 = vector.broadcast %cst_31 : f32 to vector<256x128xf32>
    %93 = arith.addf %92, %91 : vector<256x128xf32>
    %94 = arith.divf %92, %93 : vector<256x128xf32>
    %95 = vector.extract_strided_slice %94 {offsets = [0, 0], sizes = [256, 32], strides = [1, 1]} : vector<256x128xf32> to vector<256x32xf32>
    %96 = vector.extract_strided_slice %94 {offsets = [0, 32], sizes = [256, 32], strides = [1, 1]} : vector<256x128xf32> to vector<256x32xf32>
    %97 = vector.extract_strided_slice %94 {offsets = [0, 64], sizes = [256, 32], strides = [1, 1]} : vector<256x128xf32> to vector<256x32xf32>
    %cst_32 = arith.constant 2.000000e+00 : f32
    %98 = vector.broadcast %cst_32 : f32 to vector<256x32xf32>
    %99 = arith.mulf %98, %97 : vector<256x32xf32>
    %cst_33 = arith.constant 1.000000e+00 : f32
    %100 = vector.broadcast %cst_33 : f32 to vector<256x32xf32>
    %101 = arith.subf %99, %100 : vector<256x32xf32>
    %102 = vector.extract_strided_slice %94 {offsets = [0, 96], sizes = [256, 32], strides = [1, 1]} : vector<256x128xf32> to vector<256x32xf32>
    %103 = arith.mulf %96, %79 : vector<256x32xf32>
    %104 = arith.mulf %95, %101 : vector<256x32xf32>
    %105 = arith.addf %103, %104 : vector<256x32xf32>
    %106 = math.tanh %105 : vector<256x32xf32>
    %107 = arith.mulf %102, %106 : vector<256x32xf32>
    %cst_34 = arith.constant 0.00999999977 : f32
    %108 = vector.broadcast %cst_34 : f32 to vector<256x32xf32>
    %109 = arith.mulf %108, %107 : vector<256x32xf32>
    %110 = arith.maximumf %107, %109 : vector<256x32xf32>
    %111 = arith.truncf %110 : vector<256x32xf32> to vector<256x32xbf16>
    %c0_35 = arith.constant 0 : index
    %c96 = arith.constant 96 : index
    %112 = vector.load %arg10[%c0_35, %c96] : memref<256x128xbf16, #tpu.memory_space<vmem>>, vector<256x32xbf16>
    tpu.vector_store %arg10[%c0_35, %c96], %111 {strides = array<i32>} : memref<256x128xbf16, #tpu.memory_space<vmem>>, vector<256x32xbf16>,
    %c0_36 = arith.constant 0 : index
    %c0_37 = arith.constant 0 : index
    %113 = vector.load %arg10[%c0_36, %c0_37] : memref<256x128xbf16, #tpu.memory_space<vmem>>, vector<256x128xbf16>
    %c0_38 = arith.constant 0 : index
    %c0_39 = arith.constant 0 : index
    %114 = vector.load %arg7[%c0_38, %c0_39] : memref<128x32xbf16, #tpu.memory_space<vmem>>, vector<128x32xbf16>
    %cst_40 = arith.constant dense<0.000000e+00> : vector<256x32xf32>
    %115 = tpu.matmul %113, %114, %cst_40 {dimension_numbers = #tpu.dot_dimension_numbers<[1], [0], [0], [1], [0, 0, 1, 1], [], []>} : vector<256x128xbf16>, vector<128x32xbf16>, vector<256x32xf32> -> vector<256x32xf32>
    %c0_41 = arith.constant 0 : index
    %c0_42 = arith.constant 0 : index
    %116 = vector.load %arg8[%c0_41, %c0_42] : memref<1x32xf32, #tpu.memory_space<vmem>>, vector<1x32xf32>
    %117 = vector.broadcast %116 : vector<1x32xf32> to vector<256x32xf32>
    %118 = arith.addf %115, %117 : vector<256x32xf32>
    %c0_43 = arith.constant 0 : index
    %c0_44 = arith.constant 0 : index
    %119 = vector.load %arg9[%c0_43, %c0_44] : memref<256x32xf32, #tpu.memory_space<vmem>>, vector<256x32xf32>
    tpu.vector_store %arg9[%c0_43, %c0_44], %118 {strides = array<i32>} : memref<256x32xf32, #tpu.memory_space<vmem>>, vector<256x32xf32>,
    return
  }
  func.func @transform_0(%arg0: i32) -> (i32, i32) {
    %c0_i32 = arith.constant 0 : i32
    %c0_i32_0 = arith.constant 0 : i32
    return %arg0, %c0_i32 : i32, i32
  }
  func.func @transform_1(%arg0: i32) -> (i32, i32) {
    %c0_i32 = arith.constant 0 : i32
    %c0_i32_0 = arith.constant 0 : i32
    return %arg0, %c0_i32 : i32, i32
  }
  func.func @transform_2(%arg0: i32) -> (i32, i32) {
    %c0_i32 = arith.constant 0 : i32
    %c0_i32_0 = arith.constant 0 : i32
    return %arg0, %c0_i32 : i32, i32
  }
  func.func @transform_3(%arg0: i32) -> (i32, i32) {
    %c0_i32 = arith.constant 0 : i32
    %c0_i32_0 = arith.constant 0 : i32
    %c0_i32_1 = arith.constant 0 : i32
    return %c0_i32, %c0_i32_0 : i32, i32
  }
  func.func @transform_4(%arg0: i32) -> (i32, i32) {
    %c0_i32 = arith.constant 0 : i32
    %c0_i32_0 = arith.constant 0 : i32
    %c0_i32_1 = arith.constant 0 : i32
    return %c0_i32, %c0_i32_0 : i32, i32
  }
  func.func @transform_5(%arg0: i32) -> (i32, i32) {
    %c0_i32 = arith.constant 0 : i32
    %c0_i32_0 = arith.constant 0 : i32
    %c0_i32_1 = arith.constant 0 : i32
    return %c0_i32, %c0_i32_0 : i32, i32
  }
  func.func @transform_6(%arg0: i32) -> (i32, i32) {
    %c0_i32 = arith.constant 0 : i32
    %c0_i32_0 = arith.constant 0 : i32
    %c0_i32_1 = arith.constant 0 : i32
    return %c0_i32, %c0_i32_0 : i32, i32
  }
  func.func @transform_7(%arg0: i32) -> (i32, i32) {
    %c0_i32 = arith.constant 0 : i32
    %c0_i32_0 = arith.constant 0 : i32
    %c0_i32_1 = arith.constant 0 : i32
    return %c0_i32, %c0_i32_0 : i32, i32
  }
  func.func @transform_8(%arg0: i32) -> (i32, i32) {
    %c0_i32 = arith.constant 0 : i32
    %c0_i32_0 = arith.constant 0 : i32
    return %arg0, %c0_i32 : i32, i32
  }
}

</mosaic_0001>

<llo_original>
// kernel: tpu_custom_call.1
$region0: #{tpu_custom_call.1}
  #allocation0 [shape = 'u32[]', space=smem, size = 0x4, offset = 0x4, fixed_abs, tag = 'smem constant byte address 0x4 - core index']
  #allocation1 [shape = 'u32[144,128]{1,0:T(1,128)}', space=vmem, size = 0x12000, scoped, tag = 'internal scratch']
  #allocation2 [shape = 'bf16[256,128]{1,0:T(8,128)(2,1)}', space=vmem, size = 0x10000, scoped, tag = 'scratch operand']
  %s0 = inlined_call_operand.vmem [shape: bf16[512,4], index: 0, kind: input, shape index: {}]
  %s1 = inlined_call_operand.vmem [shape: f32[512,32], index: 1, kind: input, shape index: {}]
  %s2 = inlined_call_operand.vmem [shape: f32[512,32], index: 2, kind: input, shape index: {}]
  %s3 = inlined_call_operand.vmem [shape: bf16[4,128], index: 3, kind: input, shape index: {}]
  %s4 = inlined_call_operand.vmem [shape: bf16[32,128], index: 4, kind: input, shape index: {}]
  %s5 = inlined_call_operand.vmem [shape: f32[1,128], index: 5, kind: input, shape index: {}]
  %s6 = inlined_call_operand.vmem [shape: bf16[128,32], index: 6, kind: input, shape index: {}]
  %s7 = inlined_call_operand.vmem [shape: f32[1,32], index: 7, kind: input, shape index: {}]
  %s8 = inlined_call_operand.vmem [shape: f32[512,32], index: 8, kind: output, shape index: {}]
  %s9 = sld [smem:[#allocation0]]
  $region65: #{tpu_custom_call.1} parent=0
    _
  %s11 = ssub.s32 1, %s9
  %s12 = scalar_select 0, %s11, %s9
  loop: start=0, step=1, limit=4
  $region2: #{tpu_custom_call.1} parent=0 // loop_pre_header
    _
  $region3: #{tpu_custom_call.1} parent=0 // loop_header
    %s14 = sphi 0, %s18
    %p15 = scmp.ge.s32.totalorder %s14, 4
    %s24 = sphi 0, %s26
    %s27 = sphi 0, %s24
    %s28 = sphi 0, %s27
    %s44 = sphi 0, %s28
    %s50 = sphi 0, %s52
    %s53 = sphi 0, %s50
    %s54 = sphi 0, %s53
    %s70 = sphi 0, %s54
    %s76 = sphi 0, %s78
    %s79 = sphi 0, %s76
    %s80 = sphi 0, %s79
    %s96 = sphi 0, %s80
    %s100 = sphi 0, %s100
    %s102 = sphi 0, %s100
    %s103 = sphi 0, %s102
    %s117 = sphi 0, %s103
    %s121 = sphi 0, %s121
    %s123 = sphi 0, %s121
    %s124 = sphi 0, %s123
    %s138 = sphi 0, %s124
    %s142 = sphi 0, %s142
    %s144 = sphi 0, %s142
    %s145 = sphi 0, %s144
    %s159 = sphi 0, %s145
    %s163 = sphi 0, %s163
    %s165 = sphi 0, %s163
    %s166 = sphi 0, %s165
    %s180 = sphi 0, %s166
    %s184 = sphi 0, %s184
    %s186 = sphi 0, %s184
    %s187 = sphi 0, %s186
    %s201 = sphi 0, %s187
    %s207 = sphi 0, %s209
    %s210 = sphi 0, %s207
    %s211 = sphi 0, %s210
    %s227 = sphi 0, %s211
  $region4: #{tpu_custom_call.1} parent=0 // loop_header_branch
    %17 = sbr.rel (%p15) target = $region8
  $region5: #{tpu_custom_call.1} parent=0 // loop_body
    %s19 = ssub.s32 %s14, 1
    %s20 = ssub.s32 %s14, 2
    %s21 = sadd.s32 %s14, 1
    %s22 = ssub.s32 %s14, %s21
    %p23 = scmp.eq.s32.totalorder %s22, 0
    %s25 = sadd.s32 %s24, 1
    %s26 = scalar_select %p23, %s24, %s25
    %p29 = pneg %p23
    %p30 = scmp.eq.s32.totalorder %s14, 1
    %p31 = por %p29, %p30
    %p32 = scmp.ne.s32.totalorder %s24, %s27
    %p33 = scmp.eq.s32.totalorder %s14, 0
    %p34 = por %p32, %p33
    %p35 = scmp.ne.s32.totalorder %s24, %s27
    %p36 = scmp.eq.s32.totalorder %s19, 1
    %p37 = por %p35, %p36
    %p38 = scmp.ne.s32.totalorder %s27, %s28
    %p39 = scmp.eq.s32.totalorder %s19, 0
    %p40 = por %p38, %p39
    %p41 = scmp.ne.s32.totalorder %s27, %s28
    %p42 = scmp.eq.s32.totalorder %s20, 1
    %p43 = por %p41, %p42
    %p45 = scmp.ne.s32.totalorder %s28, %s44
    %p46 = scmp.eq.s32.totalorder %s20, 0
    %p47 = por %p45, %p46
    %s48 = ssub.s32 %s14, %s21
    %p49 = scmp.eq.s32.totalorder %s48, 0
    %s51 = sadd.s32 %s50, 1
    %s52 = scalar_select %p49, %s50, %s51
    %p55 = pneg %p49
    %p56 = scmp.eq.s32.totalorder %s14, 1
    %p57 = por %p55, %p56
    %p58 = scmp.ne.s32.totalorder %s50, %s53
    %p59 = scmp.eq.s32.totalorder %s14, 0
    %p60 = por %p58, %p59
    %p61 = scmp.ne.s32.totalorder %s50, %s53
    %p62 = scmp.eq.s32.totalorder %s19, 1
    %p63 = por %p61, %p62
    %p64 = scmp.ne.s32.totalorder %s53, %s54
    %p65 = scmp.eq.s32.totalorder %s19, 0
    %p66 = por %p64, %p65
    %p67 = scmp.ne.s32.totalorder %s53, %s54
    %p68 = scmp.eq.s32.totalorder %s20, 1
    %p69 = por %p67, %p68
    %p71 = scmp.ne.s32.totalorder %s54, %s70
    %p72 = scmp.eq.s32.totalorder %s20, 0
    %p73 = por %p71, %p72
    %s74 = ssub.s32 %s14, %s21
    %p75 = scmp.eq.s32.totalorder %s74, 0
    %s77 = sadd.s32 %s76, 1
    %s78 = scalar_select %p75, %s76, %s77
    %p81 = pneg %p75
    %p82 = scmp.eq.s32.totalorder %s14, 1
    %p83 = por %p81, %p82
    %p84 = scmp.ne.s32.totalorder %s76, %s79
    %p85 = scmp.eq.s32.totalorder %s14, 0
    %p86 = por %p84, %p85
    %p87 = scmp.ne.s32.totalorder %s76, %s79
    %p88 = scmp.eq.s32.totalorder %s19, 1
    %p89 = por %p87, %p88
    %p90 = scmp.ne.s32.totalorder %s79, %s80
    %p91 = scmp.eq.s32.totalorder %s19, 0
    %p92 = por %p90, %p91
    %p93 = scmp.ne.s32.totalorder %s79, %s80
    %p94 = scmp.eq.s32.totalorder %s20, 1
    %p95 = por %p93, %p94
    %p97 = scmp.ne.s32.totalorder %s80, %s96
    %p98 = scmp.eq.s32.totalorder %s20, 0
    %p99 = por %p97, %p98
    %s101 = sadd.s32 %s100, 1
    %p104 = scmp.eq.s32.totalorder %s14, 1
    %p105 = scmp.ne.s32.totalorder %s100, %s102
    %p106 = scmp.eq.s32.totalorder %s14, 0
    %p107 = por %p105, %p106
    %p108 = scmp.ne.s32.totalorder %s100, %s102
    %p109 = scmp.eq.s32.totalorder %s19, 1
    %p110 = por %p108, %p109
    %p111 = scmp.ne.s32.totalorder %s102, %s103
    %p112 = scmp.eq.s32.totalorder %s19, 0
    %p113 = por %p111, %p112
    %p114 = scmp.ne.s32.totalorder %s102, %s103
    %p115 = scmp.eq.s32.totalorder %s20, 1
    %p116 = por %p114, %p115
    %p118 = scmp.ne.s32.totalorder %s103, %s117
    %p119 = scmp.eq.s32.totalorder %s20, 0
    %p120 = por %p118, %p119
    %s122 = sadd.s32 %s121, 1
    %p125 = scmp.eq.s32.totalorder %s14, 1
    %p126 = scmp.ne.s32.totalorder %s121, %s123
    %p127 = scmp.eq.s32.totalorder %s14, 0
    %p128 = por %p126, %p127
    %p129 = scmp.ne.s32.totalorder %s121, %s123
    %p130 = scmp.eq.s32.totalorder %s19, 1
    %p131 = por %p129, %p130
    %p132 = scmp.ne.s32.totalorder %s123, %s124
    %p133 = scmp.eq.s32.totalorder %s19, 0
    %p134 = por %p132, %p133
    %p135 = scmp.ne.s32.totalorder %s123, %s124
    %p136 = scmp.eq.s32.totalorder %s20, 1
    %p137 = por %p135, %p136
    %p139 = scmp.ne.s32.totalorder %s124, %s138
    %p140 = scmp.eq.s32.totalorder %s20, 0
    %p141 = por %p139, %p140
    %s143 = sadd.s32 %s142, 1
    %p146 = scmp.eq.s32.totalorder %s14, 1
    %p147 = scmp.ne.s32.totalorder %s142, %s144
    %p148 = scmp.eq.s32.totalorder %s14, 0
    %p149 = por %p147, %p148
    %p150 = scmp.ne.s32.totalorder %s142, %s144
    %p151 = scmp.eq.s32.totalorder %s19, 1
    %p152 = por %p150, %p151
    %p153 = scmp.ne.s32.totalorder %s144, %s145
    %p154 = scmp.eq.s32.totalorder %s19, 0
    %p155 = por %p153, %p154
    %p156 = scmp.ne.s32.totalorder %s144, %s145
    %p157 = scmp.eq.s32.totalorder %s20, 1
    %p158 = por %p156, %p157
    %p160 = scmp.ne.s32.totalorder %s145, %s159
    %p161 = scmp.eq.s32.totalorder %s20, 0
    %p162 = por %p160, %p161
    %s164 = sadd.s32 %s163, 1
    %p167 = scmp.eq.s32.totalorder %s14, 1
    %p168 = scmp.ne.s32.totalorder %s163, %s165
    %p169 = scmp.eq.s32.totalorder %s14, 0
    %p170 = por %p168, %p169
    %p171 = scmp.ne.s32.totalorder %s163, %s165
    %p172 = scmp.eq.s32.totalorder %s19, 1
    %p173 = por %p171, %p172
    %p174 = scmp.ne.s32.totalorder %s165, %s166
    %p175 = scmp.eq.s32.totalorder %s19, 0
    %p176 = por %p174, %p175
    %p177 = scmp.ne.s32.totalorder %s165, %s166
    %p178 = scmp.eq.s32.totalorder %s20, 1
    %p179 = por %p177, %p178
    %p181 = scmp.ne.s32.totalorder %s166, %s180
    %p182 = scmp.eq.s32.totalorder %s20, 0
    %p183 = por %p181, %p182
    %s185 = sadd.s32 %s184, 1
    %p188 = scmp.eq.s32.totalorder %s14, 1
    %p189 = scmp.ne.s32.totalorder %s184, %s186
    %p190 = scmp.eq.s32.totalorder %s14, 0
    %p191 = por %p189, %p190
    %p192 = scmp.ne.s32.totalorder %s184, %s186
    %p193 = scmp.eq.s32.totalorder %s19, 1
    %p194 = por %p192, %p193
    %p195 = scmp.ne.s32.totalorder %s186, %s187
    %p196 = scmp.eq.s32.totalorder %s19, 0
    %p197 = por %p195, %p196
    %p198 = scmp.ne.s32.totalorder %s186, %s187
    %p199 = scmp.eq.s32.totalorder %s20, 1
    %p200 = por %p198, %p199
    %p202 = scmp.ne.s32.totalorder %s187, %s201
    %p203 = scmp.eq.s32.totalorder %s20, 0
    %p204 = por %p202, %p203
    %s205 = ssub.s32 %s14, %s21
    %p206 = scmp.eq.s32.totalorder %s205, 0
    %s208 = sadd.s32 %s207, 1
    %s209 = scalar_select %p206, %s207, %s208
    %p212 = pneg %p206
    %p213 = scmp.eq.s32.totalorder %s14, 1
    %p214 = por %p212, %p213
    %p215 = scmp.ne.s32.totalorder %s207, %s210
    %p216 = scmp.eq.s32.totalorder %s14, 0
    %p217 = por %p215, %p216
    %p218 = scmp.ne.s32.totalorder %s207, %s210
    %p219 = scmp.eq.s32.totalorder %s19, 1
    %p220 = por %p218, %p219
    %p221 = scmp.ne.s32.totalorder %s210, %s211
    %p222 = scmp.eq.s32.totalorder %s19, 0
    %p223 = por %p221, %p222
    %p224 = scmp.ne.s32.totalorder %s210, %s211
    %p225 = scmp.eq.s32.totalorder %s20, 1
    %p226 = por %p224, %p225
    %p228 = scmp.ne.s32.totalorder %s211, %s227
    %p229 = scmp.eq.s32.totalorder %s20, 0
    %p230 = por %p228, %p229
    %p231 = scmp.le.s32.totalorder 1, %s14
    %p232 = scmp.lt.s32.totalorder %s14, 3
    %p233 = pnand %p231, %p232
    %p234 = pneg %p233
    // Predicated region
    $region9: #{tpu_custom_call.1} parent=5 // pred_check
      _
    $region10: #{tpu_custom_call.1} parent=5 // pred_check_branch
      %236 = sbr.rel (%p233) target = $region12
    $region11: #{tpu_custom_call.1} parent=5 // pred_region
      %s237 = ssub.s32 %s14, 1
      // Predicated region
      $region13: #{tpu_custom_call.1} parent=11 // pred_check
        %p238 = pneg %p113
      $region14: #{tpu_custom_call.1} parent=11 // pred_check_branch
        %240 = sbr.rel (%p238) target = $region16
      $region15: #{tpu_custom_call.1} parent=11 // pred_region
        _
      $region16: #{tpu_custom_call.1} parent=11 // pred_fallthru
        _
      // Predicated region
      $region17: #{tpu_custom_call.1} parent=11 // pred_check
        %p241 = pneg %p134
      $region18: #{tpu_custom_call.1} parent=11 // pred_check_branch
        %243 = sbr.rel (%p241) target = $region20
      $region19: #{tpu_custom_call.1} parent=11 // pred_region
        _
      $region20: #{tpu_custom_call.1} parent=11 // pred_fallthru
        _
      // Predicated region
      $region21: #{tpu_custom_call.1} parent=11 // pred_check
        %p244 = pneg %p155
      $region22: #{tpu_custom_call.1} parent=11 // pred_check_branch
        %246 = sbr.rel (%p244) target = $region24
      $region23: #{tpu_custom_call.1} parent=11 // pred_region
        _
      $region24: #{tpu_custom_call.1} parent=11 // pred_fallthru
        _
      // Predicated region
      $region25: #{tpu_custom_call.1} parent=11 // pred_check
        %p247 = pneg %p176
      $region26: #{tpu_custom_call.1} parent=11 // pred_check_branch
        %249 = sbr.rel (%p247) target = $region28
      $region27: #{tpu_custom_call.1} parent=11 // pred_region
        _
      $region28: #{tpu_custom_call.1} parent=11 // pred_fallthru
        _
      // Predicated region
      $region29: #{tpu_custom_call.1} parent=11 // pred_check
        %p250 = pneg %p197
      $region30: #{tpu_custom_call.1} parent=11 // pred_check_branch
        %252 = sbr.rel (%p250) target = $region32
      $region31: #{tpu_custom_call.1} parent=11 // pred_region
        _
      $region32: #{tpu_custom_call.1} parent=11 // pred_fallthru
        _
    $region12: #{tpu_custom_call.1} parent=5 // pred_fallthru
      _
    %p253 = scmp.lt.s32.totalorder %s14, 2
    // Predicated region
    $region33: #{tpu_custom_call.1} parent=5 // pred_check
      %p254 = pneg %p253
    $region34: #{tpu_custom_call.1} parent=5 // pred_check_branch
      %256 = sbr.rel (%p254) target = $region36
    $region35: #{tpu_custom_call.1} parent=5 // pred_region
      // Predicated region
      $region37: #{tpu_custom_call.1} parent=35 // pred_check
        %p257 = pneg %p34
      $region38: #{tpu_custom_call.1} parent=35 // pred_check_branch
        %259 = sbr.rel (%p257) target = $region40
      $region39: #{tpu_custom_call.1} parent=35 // pred_region
        %s260 = smul.u32 32, %s14
        %p261 = scmp.lt.s32.totalorder %s260, 63
        %s262 = scalar_select %p261, %s260, 63
        %s263 = smul.addr %s262, 4
        %s264 = scalar_lea.vmem %s0, %s263
        %s265 = smul.u32 32, %s14
      $region40: #{tpu_custom_call.1} parent=35 // pred_fallthru
        _
      // Predicated region
      $region41: #{tpu_custom_call.1} parent=35 // pred_check
        %p266 = pneg %p60
      $region42: #{tpu_custom_call.1} parent=35 // pred_check_branch
        %268 = sbr.rel (%p266) target = $region44
      $region43: #{tpu_custom_call.1} parent=35 // pred_region
        %s269 = smul.u32 32, %s14
        %p270 = scmp.lt.s32.totalorder %s269, 63
        %s271 = scalar_select %p270, %s269, 63
        %s272 = smul.addr %s271, 8
        %s273 = scalar_lea.vmem %s1, %s272
        %s274 = smul.u32 32, %s14
      $region44: #{tpu_custom_call.1} parent=35 // pred_fallthru
        _
      // Predicated region
      $region45: #{tpu_custom_call.1} parent=35 // pred_check
        %p275 = pneg %p86
      $region46: #{tpu_custom_call.1} parent=35 // pred_check_branch
        %277 = sbr.rel (%p275) target = $region48
      $region47: #{tpu_custom_call.1} parent=35 // pred_region
        %s278 = smul.u32 32, %s14
        %p279 = scmp.lt.s32.totalorder %s278, 63
        %s280 = scalar_select %p279, %s278, 63
        %s281 = smul.addr %s280, 8
        %s282 = scalar_lea.vmem %s2, %s281
        %s283 = smul.u32 32, %s14
      $region48: #{tpu_custom_call.1} parent=35 // pred_fallthru
        _
    $region36: #{tpu_custom_call.1} parent=5 // pred_fallthru
      _
    %p284 = scmp.le.s32.totalorder 1, %s14
    %p285 = scmp.lt.s32.totalorder %s14, 3
    %p286 = pnand %p284, %p285
    %p287 = pneg %p286
    // Predicated region
    $region49: #{tpu_custom_call.1} parent=5 // pred_check
      _
    $region50: #{tpu_custom_call.1} parent=5 // pred_check_branch
      %289 = sbr.rel (%p286) target = $region52
    $region51: #{tpu_custom_call.1} parent=5 // pred_region
      %s290 = ssub.s32 %s14, 1
      %s291 = smul.u32 32, %s19
      %p292 = scmp.lt.s32.totalorder %s291, 63
      %s293 = scalar_select %p292, %s291, 63
      %s294 = smul.addr %s293, 4
      %s295 = scalar_lea.vmem %s0, %s294
      %p296 = pneg %p40
      %p297 = pneg %p37
      %s298 = smul.u32 32, %s19
      %p299 = scmp.lt.s32.totalorder %s298, 63
      %s300 = scalar_select %p299, %s298, 63
      %s301 = smul.addr %s300, 8
      %s302 = scalar_lea.vmem %s1, %s301
      %p303 = pneg %p66
      %p304 = pneg %p63
      %s305 = smul.u32 32, %s19
      %p306 = scmp.lt.s32.totalorder %s305, 63
      %s307 = scalar_select %p306, %s305, 63
      %s308 = smul.addr %s307, 8
      %s309 = scalar_lea.vmem %s2, %s308
      %p310 = pneg %p92
      %p311 = pneg %p89
      %p312 = pneg %p113
      %p313 = pneg %p110
      %p314 = pneg %p134
      %p315 = pneg %p131
      %p316 = pneg %p155
      %p317 = pneg %p152
      %p318 = pneg %p176
      %p319 = pneg %p173
      %p320 = pneg %p197
      %p321 = pneg %p194
      %p322 = pneg %p223
      %p323 = pneg %p220
      %s324 = smul.u32 32, %s19
      %p325 = scmp.lt.s32.totalorder %s324, 63
      %s326 = scalar_select %p325, %s324, 63
      %s327 = smul.addr %s326, 8
      %s328 = scalar_lea.vmem %s8, %s327
      %s329 = smul.u32 32, %s19
      %p330 = scmp.lt.s32.totalorder %s329, 63
      %s331 = scalar_select %p330, %s329, 63
      %s332 = smul.addr %s331, 4
      %s333 = scalar_lea.vmem %s0, %s332
      %s334 = smul.u32 32, %s19
      %s335 = smul.u32 32, %s19
      %p336 = scmp.lt.s32.totalorder %s335, 63
      %s337 = scalar_select %p336, %s335, 63
      %s338 = smul.addr %s337, 8
      %s339 = scalar_lea.vmem %s1, %s338
      %s340 = smul.u32 32, %s19
      %s341 = smul.u32 32, %s19
      %p342 = scmp.lt.s32.totalorder %s341, 63
      %s343 = scalar_select %p342, %s341, 63
      %s344 = smul.addr %s343, 8
      %s345 = scalar_lea.vmem %s2, %s344
      %s346 = smul.u32 32, %s19
      %s347 = smul.u32 32, %s19
      %p348 = scmp.lt.s32.totalorder %s347, 63
      %s349 = scalar_select %p348, %s347, 63
      %s350 = smul.addr %s349, 8
      %s351 = scalar_lea.vmem %s8, %s350
      %s352 = smul.u32 32, %s19
      %v354 = vld [vmem:[%s333] sm:$0xf]
      %v355 = vld [vmem:[%s333 + $0x4] sm:$0xf]
      %v356 = vld [vmem:[%s333 + $0x8] sm:$0xf]
      %v357 = vld [vmem:[%s333 + $0xc] sm:$0xf]
      %v358 = vld [vmem:[%s333 + $0x10] sm:$0xf]
      %v359 = vld [vmem:[%s333 + $0x14] sm:$0xf]
      %v360 = vld [vmem:[%s333 + $0x18] sm:$0xf]
      %v361 = vld [vmem:[%s333 + $0x1c] sm:$0xf]
      %v362 = vld [vmem:[%s333 + $0x20] sm:$0xf]
      %v363 = vld [vmem:[%s333 + $0x24] sm:$0xf]
      %v364 = vld [vmem:[%s333 + $0x28] sm:$0xf]
      %v365 = vld [vmem:[%s333 + $0x2c] sm:$0xf]
      %v366 = vld [vmem:[%s333 + $0x30] sm:$0xf]
      %v367 = vld [vmem:[%s333 + $0x34] sm:$0xf]
      %v368 = vld [vmem:[%s333 + $0x38] sm:$0xf]
      %v369 = vld [vmem:[%s333 + $0x3c] sm:$0xf]
      %v370 = vld [vmem:[%s333 + $0x40] sm:$0xf]
      %v371 = vld [vmem:[%s333 + $0x44] sm:$0xf]
      %v372 = vld [vmem:[%s333 + $0x48] sm:$0xf]
      %v373 = vld [vmem:[%s333 + $0x4c] sm:$0xf]
      %v374 = vld [vmem:[%s333 + $0x50] sm:$0xf]
      %v375 = vld [vmem:[%s333 + $0x54] sm:$0xf]
      %v376 = vld [vmem:[%s333 + $0x58] sm:$0xf]
      %v377 = vld [vmem:[%s333 + $0x5c] sm:$0xf]
      %v378 = vld [vmem:[%s333 + $0x60] sm:$0xf]
      %v379 = vld [vmem:[%s333 + $0x64] sm:$0xf]
      %v380 = vld [vmem:[%s333 + $0x68] sm:$0xf]
      %v381 = vld [vmem:[%s333 + $0x6c] sm:$0xf]
      %v382 = vld [vmem:[%s333 + $0x70] sm:$0xf]
      %v383 = vld [vmem:[%s333 + $0x74] sm:$0xf]
      %v384 = vld [vmem:[%s333 + $0x78] sm:$0xf]
      %v385 = vld [vmem:[%s333 + $0x7c] sm:$0xf]
      %v386 = vld [vmem:[%s4] sm:$0xf]
      %v387 = vld [vmem:[%s4 + $0x4] sm:$0xf]
      %v388 = vld [vmem:[%s4 + $0x8] sm:$0xf]
      %v389 = vld [vmem:[%s4 + $0xc] sm:$0xf]
      %v390 = vld [vmem:[%s345] sm:$0xff]
      %v391 = vld [vmem:[%s345 + $0x8] sm:$0xff]
      %v392 = vld [vmem:[%s345 + $0x10] sm:$0xff]
      %v393 = vld [vmem:[%s345 + $0x18] sm:$0xff]
      %v394 = vld [vmem:[%s345 + $0x20] sm:$0xff]
      %v395 = vld [vmem:[%s345 + $0x28] sm:$0xff]
      %v396 = vld [vmem:[%s345 + $0x30] sm:$0xff]
      %v397 = vld [vmem:[%s345 + $0x38] sm:$0xff]
      %v398 = vld [vmem:[%s345 + $0x40] sm:$0xff]
      %v399 = vld [vmem:[%s345 + $0x48] sm:$0xff]
      %v400 = vld [vmem:[%s345 + $0x50] sm:$0xff]
      %v401 = vld [vmem:[%s345 + $0x58] sm:$0xff]
      %v402 = vld [vmem:[%s345 + $0x60] sm:$0xff]
      %v403 = vld [vmem:[%s345 + $0x68] sm:$0xff]
      %v404 = vld [vmem:[%s345 + $0x70] sm:$0xff]
      %v405 = vld [vmem:[%s345 + $0x78] sm:$0xff]
      %v406 = vld [vmem:[%s345 + $0x80] sm:$0xff]
      %v407 = vld [vmem:[%s345 + $0x88] sm:$0xff]
      %v408 = vld [vmem:[%s345 + $0x90] sm:$0xff]
      %v409 = vld [vmem:[%s345 + $0x98] sm:$0xff]
      %v410 = vld [vmem:[%s345 + $0xa0] sm:$0xff]
      %v411 = vld [vmem:[%s345 + $0xa8] sm:$0xff]
      %v412 = vld [vmem:[%s345 + $0xb0] sm:$0xff]
      %v413 = vld [vmem:[%s345 + $0xb8] sm:$0xff]
      %v414 = vld [vmem:[%s345 + $0xc0] sm:$0xff]
      %v415 = vld [vmem:[%s345 + $0xc8] sm:$0xff]
      %v416 = vld [vmem:[%s345 + $0xd0] sm:$0xff]
      %v417 = vld [vmem:[%s345 + $0xd8] sm:$0xff]
      %v418 = vld [vmem:[%s345 + $0xe0] sm:$0xff]
      %v419 = vld [vmem:[%s345 + $0xe8] sm:$0xff]
      %v420 = vld [vmem:[%s345 + $0xf0] sm:$0xff]
      %v421 = vld [vmem:[%s345 + $0xf8] sm:$0xff]
      %v422 = vld [vmem:[%s339] sm:$0xff]
      %v423 = vld [vmem:[%s339 + $0x8] sm:$0xff]
      %v424 = vld [vmem:[%s339 + $0x10] sm:$0xff]
      %v425 = vld [vmem:[%s339 + $0x18] sm:$0xff]
      %v426 = vld [vmem:[%s339 + $0x20] sm:$0xff]
      %v427 = vld [vmem:[%s339 + $0x28] sm:$0xff]
      %v428 = vld [vmem:[%s339 + $0x30] sm:$0xff]
      %v429 = vld [vmem:[%s339 + $0x38] sm:$0xff]
      %v430 = vld [vmem:[%s339 + $0x40] sm:$0xff]
      %v431 = vld [vmem:[%s339 + $0x48] sm:$0xff]
      %v432 = vld [vmem:[%s339 + $0x50] sm:$0xff]
      %v433 = vld [vmem:[%s339 + $0x58] sm:$0xff]
      %v434 = vld [vmem:[%s339 + $0x60] sm:$0xff]
      %v435 = vld [vmem:[%s339 + $0x68] sm:$0xff]
      %v436 = vld [vmem:[%s339 + $0x70] sm:$0xff]
      %v437 = vld [vmem:[%s339 + $0x78] sm:$0xff]
      %v438 = vld [vmem:[%s339 + $0x80] sm:$0xff]
      %v439 = vld [vmem:[%s339 + $0x88] sm:$0xff]
      %v440 = vld [vmem:[%s339 + $0x90] sm:$0xff]
      %v441 = vld [vmem:[%s339 + $0x98] sm:$0xff]
      %v442 = vld [vmem:[%s339 + $0xa0] sm:$0xff]
      %v443 = vld [vmem:[%s339 + $0xa8] sm:$0xff]
      %v444 = vld [vmem:[%s339 + $0xb0] sm:$0xff]
      %v445 = vld [vmem:[%s339 + $0xb8] sm:$0xff]
      %v446 = vld [vmem:[%s339 + $0xc0] sm:$0xff]
      %v447 = vld [vmem:[%s339 + $0xc8] sm:$0xff]
      %v448 = vld [vmem:[%s339 + $0xd0] sm:$0xff]
      %v449 = vld [vmem:[%s339 + $0xd8] sm:$0xff]
      %v450 = vld [vmem:[%s339 + $0xe0] sm:$0xff]
      %v451 = vld [vmem:[%s339 + $0xe8] sm:$0xff]
      %v452 = vld [vmem:[%s339 + $0xf0] sm:$0xff]
      %v453 = vld [vmem:[%s339 + $0xf8] sm:$0xff]
      %v454 = vld [vmem:[%s3] sm:$0x3]
      %v455 = vld [vmem:[%s5] sm:$0x1]
      %v457 = vlaneseq
      %v458 = vshrl.u32 %v457, 7
      %v459 = vsub.s32 0, %v458
      %v460 = vrot.slane %v455, %v459
      %v494 = vunpack.c.l.b16 %v354
      %v495 = vunpack.c.l.b16 %v355
      %v496 = vunpack.c.l.b16 %v356
      %v497 = vunpack.c.l.b16 %v357
      %v498 = vunpack.c.l.b16 %v358
      %v499 = vunpack.c.l.b16 %v359
      %v500 = vunpack.c.l.b16 %v360
      %v501 = vunpack.c.l.b16 %v361
      %v502 = vunpack.c.l.b16 %v362
      %v503 = vunpack.c.l.b16 %v363
      %v504 = vunpack.c.l.b16 %v364
      %v505 = vunpack.c.l.b16 %v365
      %v506 = vunpack.c.l.b16 %v366
      %v507 = vunpack.c.l.b16 %v367
      %v508 = vunpack.c.l.b16 %v368
      %v509 = vunpack.c.l.b16 %v369
      %v510 = vunpack.c.l.b16 %v370
      %v511 = vunpack.c.l.b16 %v371
      %v512 = vunpack.c.l.b16 %v372
      %v513 = vunpack.c.l.b16 %v373
      %v514 = vunpack.c.l.b16 %v374
      %v515 = vunpack.c.l.b16 %v375
      %v516 = vunpack.c.l.b16 %v376
      %v517 = vunpack.c.l.b16 %v377
      %v518 = vunpack.c.l.b16 %v378
      %v519 = vunpack.c.l.b16 %v379
      %v520 = vunpack.c.l.b16 %v380
      %v521 = vunpack.c.l.b16 %v381
      %v522 = vunpack.c.l.b16 %v382
      %v523 = vunpack.c.l.b16 %v383
      %v524 = vunpack.c.l.b16 %v384
      %v525 = vunpack.c.l.b16 %v385
      %v526 = vpack.c.b16 %v495, %v494
      %v527 = vpack.c.b16 %v497, %v496
      %v528 = vpack.c.b16 %v499, %v498
      %v529 = vpack.c.b16 %v501, %v500
      %v530 = vpack.c.b16 %v503, %v502
      %v531 = vpack.c.b16 %v505, %v504
      %v532 = vpack.c.b16 %v507, %v506
      %v533 = vpack.c.b16 %v509, %v508
      %v534 = vpack.c.b16 %v511, %v510
      %v535 = vpack.c.b16 %v513, %v512
      %v536 = vpack.c.b16 %v515, %v514
      %v537 = vpack.c.b16 %v517, %v516
      %v538 = vpack.c.b16 %v519, %v518
      %v539 = vpack.c.b16 %v521, %v520
      %v540 = vpack.c.b16 %v523, %v522
      %v541 = vpack.c.b16 %v525, %v524
      %vm542 = vcmask 31744
      %v544 = vsel %vm542, %v526, 0
      %v547 = vsel %vm542, %v527, 0
      %v550 = vsel %vm542, %v528, 0
      %v553 = vsel %vm542, %v529, 0
      %v556 = vsel %vm542, %v530, 0
      %v559 = vsel %vm542, %v531, 0
      %v562 = vsel %vm542, %v532, 0
      %v565 = vsel %vm542, %v533, 0
      %v568 = vsel %vm542, %v534, 0
      %v571 = vsel %vm542, %v535, 0
      %v574 = vsel %vm542, %v536, 0
      %v577 = vsel %vm542, %v537, 0
      %v580 = vsel %vm542, %v538, 0
      %v583 = vsel %vm542, %v539, 0
      %v586 = vsel %vm542, %v540, 0
      %v589 = vsel %vm542, %v541, 0
      %vm591 = vcmask 1041408
      %v593 = vsel %vm591, %v454, 0
      %595 = vmatprep.subr.bf16.mxu0 0
      %596 = vmatpush1.bf16.msra.mxu0 0
      %597 = vmatprep.subr.bf16.mxu0 0
      %598 = vmatpush1.bf16.msra.mxu0 0
      %599 = vmatprep.subr.bf16.mxu0 0
      %600 = vmatpush1.bf16.msra.mxu0 0
      %601 = vmatprep.subr.bf16.mxu0 0
      %602 = vmatpush1.bf16.msra.mxu0 0
      %603 = vmatprep.subr.bf16.mxu0 0
      %604 = vmatpush1.bf16.msra.mxu0 0
      %605 = vmatprep.subr.bf16.mxu0 0
      %606 = vmatpush1.bf16.msra.mxu0 0
      %607 = vmatprep.subr.bf16.mxu0 0
      %608 = vmatpush1.bf16.msra.mxu0 0
      %609 = vmatprep.subr.bf16.mxu0 0
      %610 = vmatpush1.bf16.msra.mxu0 %v593
      %611 = vmatprep.subr.bf16.mxu0 0
      %612 = vmatpush2.bf16.msra.mxu0 0
      %613 = vmatprep.subr.bf16.mxu0 0
      %614 = vmatpush2.bf16.msra.mxu0 0
      %615 = vmatprep.subr.bf16.mxu0 0
      %616 = vmatpush2.bf16.msra.mxu0 0
      %617 = vmatprep.subr.bf16.mxu0 0
      %618 = vmatpush2.bf16.msra.mxu0 0
      %619 = vmatprep.subr.bf16.mxu0 0
      %620 = vmatpush2.bf16.msra.mxu0 0
      %621 = vmatprep.subr.bf16.mxu0 0
      %622 = vmatpush2.bf16.msra.mxu0 0
      %623 = vmatprep.subr.bf16.mxu0 0
      %624 = vmatpush2.bf16.msra.mxu0 0
      %625 = vmatprep.subr.bf16.mxu0 0
      %626 = vmatpush2.bf16.msra.mxu0 0
      %627 = vmatprep.mubr.bf16.mxu0 0
      %628 = vmatmul.mubr.bf16.gmra.mxu0 %v544
      %v629 = vpop.f32.mrf.mxu0
      %v630 = vadd.f32 %v460, %v629
      %v631 = vpop.f32.mrf.mxu0
      %v632 = vpop.f32.mrf.mxu0
      %v633 = vadd.f32 %v460, %v632
      %v634 = vpop.f32.mrf.mxu0
      %635 = vmatprep.mubr.bf16.mxu0 0
      %636 = vmatmul.mubr.bf16.gmra.mxu0 %v547
      %v637 = vpop.f32.mrf.mxu0
      %v638 = vadd.f32 %v460, %v637
      %v639 = vpop.f32.mrf.mxu0
      %v640 = vpop.f32.mrf.mxu0
      %v641 = vadd.f32 %v460, %v640
      %v642 = vpop.f32.mrf.mxu0
      %643 = vmatprep.mubr.bf16.mxu0 0
      %644 = vmatmul.mubr.bf16.gmra.mxu0 %v550
      %v645 = vpop.f32.mrf.mxu0
      %v646 = vadd.f32 %v460, %v645
      %v647 = vpop.f32.mrf.mxu0
      %v648 = vpop.f32.mrf.mxu0
      %v649 = vadd.f32 %v460, %v648
      %v650 = vpop.f32.mrf.mxu0
      %651 = vmatprep.mubr.bf16.mxu0 0
      %652 = vmatmul.mubr.bf16.gmra.mxu0 %v553
      %v653 = vpop.f32.mrf.mxu0
      %v654 = vadd.f32 %v460, %v653
      %v655 = vpop.f32.mrf.mxu0
      %v656 = vpop.f32.mrf.mxu0
      %v657 = vadd.f32 %v460, %v656
      %v658 = vpop.f32.mrf.mxu0
      %659 = vmatprep.mubr.bf16.mxu0 0
      %660 = vmatmul.mubr.bf16.gmra.mxu0 %v556
      %v661 = vpop.f32.mrf.mxu0
      %v662 = vadd.f32 %v460, %v661
      %v663 = vpop.f32.mrf.mxu0
      %v664 = vpop.f32.mrf.mxu0
      %v665 = vadd.f32 %v460, %v664
      %v666 = vpop.f32.mrf.mxu0
      %667 = vmatprep.mubr.bf16.mxu0 0
      %668 = vmatmul.mubr.bf16.gmra.mxu0 %v559
      %v669 = vpop.f32.mrf.mxu0
      %v670 = vadd.f32 %v460, %v669
      %v671 = vpop.f32.mrf.mxu0
      %v672 = vpop.f32.mrf.mxu0
      %v673 = vadd.f32 %v460, %v672
      %v674 = vpop.f32.mrf.mxu0
      %675 = vmatprep.mubr.bf16.mxu0 0
      %676 = vmatmul.mubr.bf16.gmra.mxu0 %v562
      %v677 = vpop.f32.mrf.mxu0
      %v678 = vadd.f32 %v460, %v677
      %v679 = vpop.f32.mrf.mxu0
      %v680 = vpop.f32.mrf.mxu0
      %v681 = vadd.f32 %v460, %v680
      %v682 = vpop.f32.mrf.mxu0
      %683 = vmatprep.mubr.bf16.mxu0 0
      %684 = vmatmul.mubr.bf16.gmra.mxu0 %v565
      %v685 = vpop.f32.mrf.mxu0
      %v686 = vadd.f32 %v460, %v685
      %v687 = vpop.f32.mrf.mxu0
      %v688 = vpop.f32.mrf.mxu0
      %v689 = vadd.f32 %v460, %v688
      %v690 = vpop.f32.mrf.mxu0
      %691 = vmatprep.mubr.bf16.mxu0 0
      %692 = vmatmul.mubr.bf16.gmra.mxu0 %v568
      %v693 = vpop.f32.mrf.mxu0
      %v694 = vadd.f32 %v460, %v693
      %v695 = vpop.f32.mrf.mxu0
      %v696 = vpop.f32.mrf.mxu0
      %v697 = vadd.f32 %v460, %v696
      %v698 = vpop.f32.mrf.mxu0
      %699 = vmatprep.mubr.bf16.mxu0 0
      %700 = vmatmul.mubr.bf16.gmra.mxu0 %v571
      %v701 = vpop.f32.mrf.mxu0
      %v702 = vadd.f32 %v460, %v701
      %v703 = vpop.f32.mrf.mxu0
      %v704 = vpop.f32.mrf.mxu0
      %v705 = vadd.f32 %v460, %v704
      %v706 = vpop.f32.mrf.mxu0
      %707 = vmatprep.mubr.bf16.mxu0 0
      %708 = vmatmul.mubr.bf16.gmra.mxu0 %v574
      %v709 = vpop.f32.mrf.mxu0
      %v710 = vadd.f32 %v460, %v709
      %v711 = vpop.f32.mrf.mxu0
      %v712 = vpop.f32.mrf.mxu0
      %v713 = vadd.f32 %v460, %v712
      %v714 = vpop.f32.mrf.mxu0
      %715 = vmatprep.mubr.bf16.mxu0 0
      %716 = vmatmul.mubr.bf16.gmra.mxu0 %v577
      %v717 = vpop.f32.mrf.mxu0
      %v718 = vadd.f32 %v460, %v717
      %v719 = vpop.f32.mrf.mxu0
      %v720 = vpop.f32.mrf.mxu0
      %v721 = vadd.f32 %v460, %v720
      %v722 = vpop.f32.mrf.mxu0
      %723 = vmatprep.mubr.bf16.mxu0 0
      %724 = vmatmul.mubr.bf16.gmra.mxu0 %v580
      %v725 = vpop.f32.mrf.mxu0
      %v726 = vadd.f32 %v460, %v725
      %v727 = vpop.f32.mrf.mxu0
      %v728 = vpop.f32.mrf.mxu0
      %v729 = vadd.f32 %v460, %v728
      %v730 = vpop.f32.mrf.mxu0
      %731 = vmatprep.mubr.bf16.mxu0 0
      %732 = vmatmul.mubr.bf16.gmra.mxu0 %v583
      %v733 = vpop.f32.mrf.mxu0
      %v734 = vadd.f32 %v460, %v733
      %v735 = vpop.f32.mrf.mxu0
      %v736 = vpop.f32.mrf.mxu0
      %v737 = vadd.f32 %v460, %v736
      %v738 = vpop.f32.mrf.mxu0
      %739 = vmatprep.mubr.bf16.mxu0 0
      %740 = vmatmul.mubr.bf16.gmra.mxu0 %v586
      %v741 = vpop.f32.mrf.mxu0
      %v742 = vadd.f32 %v460, %v741
      %v743 = vpop.f32.mrf.mxu0
      %v744 = vpop.f32.mrf.mxu0
      %v745 = vadd.f32 %v460, %v744
      %v746 = vpop.f32.mrf.mxu0
      %747 = vmatprep.mubr.bf16.mxu0 0
      %748 = vmatmul.mubr.bf16.gmra.mxu0 %v589
      %v749 = vpop.f32.mrf.mxu0
      %v750 = vadd.f32 %v460, %v749
      %v751 = vpop.f32.mrf.mxu0
      %v752 = vpop.f32.mrf.mxu0
      %v753 = vadd.f32 %v460, %v752
      %v754 = vpop.f32.mrf.mxu0
      %755 = vdwg.mxu0
      %v756 = vpack.c.bf16 %v423, %v422
      %v757 = vpack.c.bf16 %v425, %v424
      %v758 = vpack.c.bf16 %v427, %v426
      %v759 = vpack.c.bf16 %v429, %v428
      %v760 = vpack.c.bf16 %v431, %v430
      %v761 = vpack.c.bf16 %v433, %v432
      %v762 = vpack.c.bf16 %v435, %v434
      %v763 = vpack.c.bf16 %v437, %v436
      %v764 = vpack.c.bf16 %v439, %v438
      %v765 = vpack.c.bf16 %v441, %v440
      %v766 = vpack.c.bf16 %v443, %v442
      %v767 = vpack.c.bf16 %v445, %v444
      %v768 = vpack.c.bf16 %v447, %v446
      %v769 = vpack.c.bf16 %v449, %v448
      %v770 = vpack.c.bf16 %v451, %v450
      %v771 = vpack.c.bf16 %v453, %v452
      %v776 = vunpack.c.l.b16 %v386
      %v777 = vunpack.c.l.b16 %v387
      %v778 = vunpack.c.l.b16 %v388
      %v779 = vunpack.c.l.b16 %v389
      %v780 = vpack.c.b16 %v777, %v776
      %v781 = vpack.c.b16 %v779, %v778
      %vm784 = vcmask 261120
      %v786 = vsel %vm784, %v756, 0
      %v789 = vsel %vm784, %v757, 0
      %v792 = vsel %vm784, %v758, 0
      %v795 = vsel %vm784, %v759, 0
      %v798 = vsel %vm784, %v760, 0
      %v801 = vsel %vm784, %v761, 0
      %v804 = vsel %vm784, %v762, 0
      %v807 = vsel %vm784, %v763, 0
      %v810 = vsel %vm784, %v764, 0
      %v813 = vsel %vm784, %v765, 0
      %v816 = vsel %vm784, %v766, 0
      %v819 = vsel %vm784, %v767, 0
      %v822 = vsel %vm784, %v768, 0
      %v825 = vsel %vm784, %v769, 0
      %v828 = vsel %vm784, %v770, 0
      %v831 = vsel %vm784, %v771, 0
      %833 = vmatprep.subr.bf16.mxu0 0
      %834 = vmatpush1.bf16.msra.mxu0 0
      %835 = vmatprep.subr.bf16.mxu0 0
      %836 = vmatpush1.bf16.msra.mxu0 0
      %837 = vmatprep.subr.bf16.mxu0 0
      %838 = vmatpush1.bf16.msra.mxu0 0
      %839 = vmatprep.subr.bf16.mxu0 0
      %840 = vmatpush1.bf16.msra.mxu0 0
      %841 = vmatprep.subr.bf16.mxu0 0
      %842 = vmatpush1.bf16.msra.mxu0 0
      %843 = vmatprep.subr.bf16.mxu0 0
      %844 = vmatpush1.bf16.msra.mxu0 0
      %845 = vmatprep.subr.bf16.mxu0 0
      %846 = vmatpush1.bf16.msra.mxu0 %v781
      %847 = vmatprep.subr.bf16.mxu0 0
      %848 = vmatpush1.bf16.msra.mxu0 %v780
      %849 = vmatprep.subr.bf16.mxu0 0
      %850 = vmatpush2.bf16.msra.mxu0 0
      %851 = vmatprep.subr.bf16.mxu0 0
      %852 = vmatpush2.bf16.msra.mxu0 0
      %853 = vmatprep.subr.bf16.mxu0 0
      %854 = vmatpush2.bf16.msra.mxu0 0
      %855 = vmatprep.subr.bf16.mxu0 0
      %856 = vmatpush2.bf16.msra.mxu0 0
      %857 = vmatprep.subr.bf16.mxu0 0
      %858 = vmatpush2.bf16.msra.mxu0 0
      %859 = vmatprep.subr.bf16.mxu0 0
      %860 = vmatpush2.bf16.msra.mxu0 0
      %861 = vmatprep.subr.bf16.mxu0 0
      %862 = vmatpush2.bf16.msra.mxu0 0
      %863 = vmatprep.subr.bf16.mxu0 0
      %864 = vmatpush2.bf16.msra.mxu0 0
      %865 = vmatprep.mubr.bf16.mxu0 0
      %866 = vmatmul.mubr.bf16.gmra.mxu0 %v786
      %v867 = vpop.f32.mrf.mxu0
      %v868 = vadd.f32 0.0, %v867
      %v869 = vpop.f32.mrf.mxu0
      %v870 = vpop.f32.mrf.mxu0
      %v871 = vadd.f32 0.0, %v870
      %v872 = vpop.f32.mrf.mxu0
      %873 = vmatprep.mubr.bf16.mxu0 0
      %874 = vmatmul.mubr.bf16.gmra.mxu0 %v789
      %v875 = vpop.f32.mrf.mxu0
      %v876 = vadd.f32 0.0, %v875
      %v877 = vpop.f32.mrf.mxu0
      %v878 = vpop.f32.mrf.mxu0
      %v879 = vadd.f32 0.0, %v878
      %v880 = vpop.f32.mrf.mxu0
      %881 = vmatprep.mubr.bf16.mxu0 0
      %882 = vmatmul.mubr.bf16.gmra.mxu0 %v792
      %v883 = vpop.f32.mrf.mxu0
      %v884 = vadd.f32 0.0, %v883
      %v885 = vpop.f32.mrf.mxu0
      %v886 = vpop.f32.mrf.mxu0
      %v887 = vadd.f32 0.0, %v886
      %v888 = vpop.f32.mrf.mxu0
      %889 = vmatprep.mubr.bf16.mxu0 0
      %890 = vmatmul.mubr.bf16.gmra.mxu0 %v795
      %v891 = vpop.f32.mrf.mxu0
      %v892 = vadd.f32 0.0, %v891
      %v893 = vpop.f32.mrf.mxu0
      %v894 = vpop.f32.mrf.mxu0
      %v895 = vadd.f32 0.0, %v894
      %v896 = vpop.f32.mrf.mxu0
      %897 = vmatprep.mubr.bf16.mxu0 0
      %898 = vmatmul.mubr.bf16.gmra.mxu0 %v798
      %v899 = vpop.f32.mrf.mxu0
      %v900 = vadd.f32 0.0, %v899
      %v901 = vpop.f32.mrf.mxu0
      %v902 = vpop.f32.mrf.mxu0
      %v903 = vadd.f32 0.0, %v902
      %v904 = vpop.f32.mrf.mxu0
      %905 = vmatprep.mubr.bf16.mxu0 0
      %906 = vmatmul.mubr.bf16.gmra.mxu0 %v801
      %v907 = vpop.f32.mrf.mxu0
      %v908 = vadd.f32 0.0, %v907
      %v909 = vpop.f32.mrf.mxu0
      %v910 = vpop.f32.mrf.mxu0
      %v911 = vadd.f32 0.0, %v910
      %v912 = vpop.f32.mrf.mxu0
      %913 = vmatprep.mubr.bf16.mxu0 0
      %914 = vmatmul.mubr.bf16.gmra.mxu0 %v804
      %v915 = vpop.f32.mrf.mxu0
      %v916 = vadd.f32 0.0, %v915
      %v917 = vpop.f32.mrf.mxu0
      %v918 = vpop.f32.mrf.mxu0
      %v919 = vadd.f32 0.0, %v918
      %v920 = vpop.f32.mrf.mxu0
      %921 = vmatprep.mubr.bf16.mxu0 0
      %922 = vmatmul.mubr.bf16.gmra.mxu0 %v807
      %v923 = vpop.f32.mrf.mxu0
      %v924 = vadd.f32 0.0, %v923
      %v925 = vpop.f32.mrf.mxu0
      %v926 = vpop.f32.mrf.mxu0
      %v927 = vadd.f32 0.0, %v926
      %v928 = vpop.f32.mrf.mxu0
      %929 = vmatprep.mubr.bf16.mxu0 0
      %930 = vmatmul.mubr.bf16.gmra.mxu0 %v810
      %v931 = vpop.f32.mrf.mxu0
      %v932 = vadd.f32 0.0, %v931
      %v933 = vpop.f32.mrf.mxu0
      %v934 = vpop.f32.mrf.mxu0
      %v935 = vadd.f32 0.0, %v934
      %v936 = vpop.f32.mrf.mxu0
      %937 = vmatprep.mubr.bf16.mxu0 0
      %938 = vmatmul.mubr.bf16.gmra.mxu0 %v813
      %v939 = vpop.f32.mrf.mxu0
      %v940 = vadd.f32 0.0, %v939
      %v941 = vpop.f32.mrf.mxu0
      %v942 = vpop.f32.mrf.mxu0
      %v943 = vadd.f32 0.0, %v942
      %v944 = vpop.f32.mrf.mxu0
      %945 = vmatprep.mubr.bf16.mxu0 0
      %946 = vmatmul.mubr.bf16.gmra.mxu0 %v816
      %v947 = vpop.f32.mrf.mxu0
      %v948 = vadd.f32 0.0, %v947
      %v949 = vpop.f32.mrf.mxu0
      %v950 = vpop.f32.mrf.mxu0
      %v951 = vadd.f32 0.0, %v950
      %v952 = vpop.f32.mrf.mxu0
      %953 = vmatprep.mubr.bf16.mxu0 0
      %954 = vmatmul.mubr.bf16.gmra.mxu0 %v819
      %v955 = vpop.f32.mrf.mxu0
      %v956 = vadd.f32 0.0, %v955
      %v957 = vpop.f32.mrf.mxu0
      %v958 = vpop.f32.mrf.mxu0
      %v959 = vadd.f32 0.0, %v958
      %v960 = vpop.f32.mrf.mxu0
      %961 = vmatprep.mubr.bf16.mxu0 0
      %962 = vmatmul.mubr.bf16.gmra.mxu0 %v822
      %v963 = vpop.f32.mrf.mxu0
      %v964 = vadd.f32 0.0, %v963
      %v965 = vpop.f32.mrf.mxu0
      %v966 = vpop.f32.mrf.mxu0
      %v967 = vadd.f32 0.0, %v966
      %v968 = vpop.f32.mrf.mxu0
      %969 = vmatprep.mubr.bf16.mxu0 0
      %970 = vmatmul.mubr.bf16.gmra.mxu0 %v825
      %v971 = vpop.f32.mrf.mxu0
      %v972 = vadd.f32 0.0, %v971
      %v973 = vpop.f32.mrf.mxu0
      %v974 = vpop.f32.mrf.mxu0
      %v975 = vadd.f32 0.0, %v974
      %v976 = vpop.f32.mrf.mxu0
      %977 = vmatprep.mubr.bf16.mxu0 0
      %978 = vmatmul.mubr.bf16.gmra.mxu0 %v828
      %v979 = vpop.f32.mrf.mxu0
      %v980 = vadd.f32 0.0, %v979
      %v981 = vpop.f32.mrf.mxu0
      %v982 = vpop.f32.mrf.mxu0
      %v983 = vadd.f32 0.0, %v982
      %v984 = vpop.f32.mrf.mxu0
      %985 = vmatprep.mubr.bf16.mxu0 0
      %986 = vmatmul.mubr.bf16.gmra.mxu0 %v831
      %v987 = vpop.f32.mrf.mxu0
      %v988 = vadd.f32 0.0, %v987
      %v989 = vpop.f32.mrf.mxu0
      %v990 = vpop.f32.mrf.mxu0
      %v991 = vadd.f32 0.0, %v990
      %v992 = vpop.f32.mrf.mxu0
      %993 = vdwg.mxu0
      %v994 = vadd.f32 %v630, %v868
      %v995 = vadd.f32 %v633, %v871
      %v996 = vadd.f32 %v638, %v876
      %v997 = vadd.f32 %v641, %v879
      %v998 = vadd.f32 %v646, %v884
      %v999 = vadd.f32 %v649, %v887
      %v1000 = vadd.f32 %v654, %v892
      %v1001 = vadd.f32 %v657, %v895
      %v1002 = vadd.f32 %v662, %v900
      %v1003 = vadd.f32 %v665, %v903
      %v1004 = vadd.f32 %v670, %v908
      %v1005 = vadd.f32 %v673, %v911
      %v1006 = vadd.f32 %v678, %v916
      %v1007 = vadd.f32 %v681, %v919
      %v1008 = vadd.f32 %v686, %v924
      %v1009 = vadd.f32 %v689, %v927
      %v1010 = vadd.f32 %v694, %v932
      %v1011 = vadd.f32 %v697, %v935
      %v1012 = vadd.f32 %v702, %v940
      %v1013 = vadd.f32 %v705, %v943
      %v1014 = vadd.f32 %v710, %v948
      %v1015 = vadd.f32 %v713, %v951
      %v1016 = vadd.f32 %v718, %v956
      %v1017 = vadd.f32 %v721, %v959
      %v1018 = vadd.f32 %v726, %v964
      %v1019 = vadd.f32 %v729, %v967
      %v1020 = vadd.f32 %v734, %v972
      %v1021 = vadd.f32 %v737, %v975
      %v1022 = vadd.f32 %v742, %v980
      %v1023 = vadd.f32 %v745, %v983
      %v1024 = vadd.f32 %v750, %v988
      %v1025 = vadd.f32 %v753, %v991
      %v1026 = vxor.u32 %v994, 2147483648
      %v1027 = vxor.u32 %v995, 2147483648
      %v1028 = vxor.u32 %v996, 2147483648
      %v1029 = vxor.u32 %v997, 2147483648
      %v1030 = vxor.u32 %v998, 2147483648
      %v1031 = vxor.u32 %v999, 2147483648
      %v1032 = vxor.u32 %v1000, 2147483648
      %v1033 = vxor.u32 %v1001, 2147483648
      %v1034 = vxor.u32 %v1002, 2147483648
      %v1035 = vxor.u32 %v1003, 2147483648
      %v1036 = vxor.u32 %v1004, 2147483648
      %v1037 = vxor.u32 %v1005, 2147483648
      %v1038 = vxor.u32 %v1006, 2147483648
      %v1039 = vxor.u32 %v1007, 2147483648
      %v1040 = vxor.u32 %v1008, 2147483648
      %v1041 = vxor.u32 %v1009, 2147483648
      %v1042 = vxor.u32 %v1010, 2147483648
      %v1043 = vxor.u32 %v1011, 2147483648
      %v1044 = vxor.u32 %v1012, 2147483648
      %v1045 = vxor.u32 %v1013, 2147483648
      %v1046 = vxor.u32 %v1014, 2147483648
      %v1047 = vxor.u32 %v1015, 2147483648
      %v1048 = vxor.u32 %v1016, 2147483648
      %v1049 = vxor.u32 %v1017, 2147483648
      %v1050 = vxor.u32 %v1018, 2147483648
      %v1051 = vxor.u32 %v1019, 2147483648
      %v1052 = vxor.u32 %v1020, 2147483648
      %v1053 = vxor.u32 %v1021, 2147483648
      %v1054 = vxor.u32 %v1022, 2147483648
      %v1055 = vxor.u32 %v1023, 2147483648
      %v1056 = vxor.u32 %v1024, 2147483648
      %v1057 = vxor.u32 %v1025, 2147483648
      %v1058 = vmul.f32 %v1026, 1.442695
      %v1059 = vpow.pop %v1058
      %v1060 = vmul.f32 %v1027, 1.442695
      %v1061 = vpow.pop %v1060
      %v1062 = vmul.f32 %v1028, 1.442695
      %v1063 = vpow.pop %v1062
      %v1064 = vmul.f32 %v1029, 1.442695
      %v1065 = vpow.pop %v1064
      %v1066 = vmul.f32 %v1030, 1.442695
      %v1067 = vpow.pop %v1066
      %v1068 = vmul.f32 %v1031, 1.442695
      %v1069 = vpow.pop %v1068
      %v1070 = vmul.f32 %v1032, 1.442695
      %v1071 = vpow.pop %v1070
      %v1072 = vmul.f32 %v1033, 1.442695
      %v1073 = vpow.pop %v1072
      %v1074 = vmul.f32 %v1034, 1.442695
      %v1075 = vpow.pop %v1074
      %v1076 = vmul.f32 %v1035, 1.442695
      %v1077 = vpow.pop %v1076
      %v1078 = vmul.f32 %v1036, 1.442695
      %v1079 = vpow.pop %v1078
      %v1080 = vmul.f32 %v1037, 1.442695
      %v1081 = vpow.pop %v1080
      %v1082 = vmul.f32 %v1038, 1.442695
      %v1083 = vpow.pop %v1082
      %v1084 = vmul.f32 %v1039, 1.442695
      %v1085 = vpow.pop %v1084
      %v1086 = vmul.f32 %v1040, 1.442695
      %v1087 = vpow.pop %v1086
      %v1088 = vmul.f32 %v1041, 1.442695
      %v1089 = vpow.pop %v1088
      %v1090 = vmul.f32 %v1042, 1.442695
      %v1091 = vpow.pop %v1090
      %v1092 = vmul.f32 %v1043, 1.442695
      %v1093 = vpow.pop %v1092
      %v1094 = vmul.f32 %v1044, 1.442695
      %v1095 = vpow.pop %v1094
      %v1096 = vmul.f32 %v1045, 1.442695
      %v1097 = vpow.pop %v1096
      %v1098 = vmul.f32 %v1046, 1.442695
      %v1099 = vpow.pop %v1098
      %v1100 = vmul.f32 %v1047, 1.442695
      %v1101 = vpow.pop %v1100
      %v1102 = vmul.f32 %v1048, 1.442695
      %v1103 = vpow.pop %v1102
      %v1104 = vmul.f32 %v1049, 1.442695
      %v1105 = vpow.pop %v1104
      %v1106 = vmul.f32 %v1050, 1.442695
      %v1107 = vpow.pop %v1106
      %v1108 = vmul.f32 %v1051, 1.442695
      %v1109 = vpow.pop %v1108
      %v1110 = vmul.f32 %v1052, 1.442695
      %v1111 = vpow.pop %v1110
      %v1112 = vmul.f32 %v1053, 1.442695
      %v1113 = vpow.pop %v1112
      %v1114 = vmul.f32 %v1054, 1.442695
      %v1115 = vpow.pop %v1114
      %v1116 = vmul.f32 %v1055, 1.442695
      %v1117 = vpow.pop %v1116
      %v1118 = vmul.f32 %v1056, 1.442695
      %v1119 = vpow.pop %v1118
      %v1120 = vmul.f32 %v1057, 1.442695
      %v1121 = vpow.pop %v1120
      %v1122 = vadd.f32 %v1059, 1.0
      %v1123 = vadd.f32 %v1061, 1.0
      %v1124 = vadd.f32 %v1063, 1.0
      %v1125 = vadd.f32 %v1065, 1.0
      %v1126 = vadd.f32 %v1067, 1.0
      %v1127 = vadd.f32 %v1069, 1.0
      %v1128 = vadd.f32 %v1071, 1.0
      %v1129 = vadd.f32 %v1073, 1.0
      %v1130 = vadd.f32 %v1075, 1.0
      %v1131 = vadd.f32 %v1077, 1.0
      %v1132 = vadd.f32 %v1079, 1.0
      %v1133 = vadd.f32 %v1081, 1.0
      %v1134 = vadd.f32 %v1083, 1.0
      %v1135 = vadd.f32 %v1085, 1.0
      %v1136 = vadd.f32 %v1087, 1.0
      %v1137 = vadd.f32 %v1089, 1.0
      %v1138 = vadd.f32 %v1091, 1.0
      %v1139 = vadd.f32 %v1093, 1.0
      %v1140 = vadd.f32 %v1095, 1.0
      %v1141 = vadd.f32 %v1097, 1.0
      %v1142 = vadd.f32 %v1099, 1.0
      %v1143 = vadd.f32 %v1101, 1.0
      %v1144 = vadd.f32 %v1103, 1.0
      %v1145 = vadd.f32 %v1105, 1.0
      %v1146 = vadd.f32 %v1107, 1.0
      %v1147 = vadd.f32 %v1109, 1.0
      %v1148 = vadd.f32 %v1111, 1.0
      %v1149 = vadd.f32 %v1113, 1.0
      %v1150 = vadd.f32 %v1115, 1.0
      %v1151 = vadd.f32 %v1117, 1.0
      %v1152 = vadd.f32 %v1119, 1.0
      %v1153 = vadd.f32 %v1121, 1.0
      %v1154 = vrcp.pop %v1122
      %v1155 = vmul.f32 1.0, %v1154
      %v1156 = vrcp.pop %v1123
      %v1157 = vmul.f32 1.0, %v1156
      %v1158 = vrcp.pop %v1124
      %v1159 = vmul.f32 1.0, %v1158
      %v1160 = vrcp.pop %v1125
      %v1161 = vmul.f32 1.0, %v1160
      %v1162 = vrcp.pop %v1126
      %v1163 = vmul.f32 1.0, %v1162
      %v1164 = vrcp.pop %v1127
      %v1165 = vmul.f32 1.0, %v1164
      %v1166 = vrcp.pop %v1128
      %v1167 = vmul.f32 1.0, %v1166
      %v1168 = vrcp.pop %v1129
      %v1169 = vmul.f32 1.0, %v1168
      %v1170 = vrcp.pop %v1130
      %v1171 = vmul.f32 1.0, %v1170
      %v1172 = vrcp.pop %v1131
      %v1173 = vmul.f32 1.0, %v1172
      %v1174 = vrcp.pop %v1132
      %v1175 = vmul.f32 1.0, %v1174
      %v1176 = vrcp.pop %v1133
      %v1177 = vmul.f32 1.0, %v1176
      %v1178 = vrcp.pop %v1134
      %v1179 = vmul.f32 1.0, %v1178
      %v1180 = vrcp.pop %v1135
      %v1181 = vmul.f32 1.0, %v1180
      %v1182 = vrcp.pop %v1136
      %v1183 = vmul.f32 1.0, %v1182
      %v1184 = vrcp.pop %v1137
      %v1185 = vmul.f32 1.0, %v1184
      %v1186 = vrcp.pop %v1138
      %v1187 = vmul.f32 1.0, %v1186
      %v1188 = vrcp.pop %v1139
      %v1189 = vmul.f32 1.0, %v1188
      %v1190 = vrcp.pop %v1140
      %v1191 = vmul.f32 1.0, %v1190
      %v1192 = vrcp.pop %v1141
      %v1193 = vmul.f32 1.0, %v1192
      %v1194 = vrcp.pop %v1142
      %v1195 = vmul.f32 1.0, %v1194
      %v1196 = vrcp.pop %v1143
      %v1197 = vmul.f32 1.0, %v1196
      %v1198 = vrcp.pop %v1144
      %v1199 = vmul.f32 1.0, %v1198
      %v1200 = vrcp.pop %v1145
      %v1201 = vmul.f32 1.0, %v1200
      %v1202 = vrcp.pop %v1146
      %v1203 = vmul.f32 1.0, %v1202
      %v1204 = vrcp.pop %v1147
      %v1205 = vmul.f32 1.0, %v1204
      %v1206 = vrcp.pop %v1148
      %v1207 = vmul.f32 1.0, %v1206
      %v1208 = vrcp.pop %v1149
      %v1209 = vmul.f32 1.0, %v1208
      %v1210 = vrcp.pop %v1150
      %v1211 = vmul.f32 1.0, %v1210
      %v1212 = vrcp.pop %v1151
      %v1213 = vmul.f32 1.0, %v1212
      %v1214 = vrcp.pop %v1152
      %v1215 = vmul.f32 1.0, %v1214
      %v1216 = vrcp.pop %v1153
      %v1217 = vmul.f32 1.0, %v1216
      %v1218 = vmul.f32 %v1155, 2.0
      %v1219 = vmul.f32 %v1157, 2.0
      %v1220 = vmul.f32 %v1159, 2.0
      %v1221 = vmul.f32 %v1161, 2.0
      %v1222 = vmul.f32 %v1163, 2.0
      %v1223 = vmul.f32 %v1165, 2.0
      %v1224 = vmul.f32 %v1167, 2.0
      %v1225 = vmul.f32 %v1169, 2.0
      %v1226 = vmul.f32 %v1171, 2.0
      %v1227 = vmul.f32 %v1173, 2.0
      %v1228 = vmul.f32 %v1175, 2.0
      %v1229 = vmul.f32 %v1177, 2.0
      %v1230 = vmul.f32 %v1179, 2.0
      %v1231 = vmul.f32 %v1181, 2.0
      %v1232 = vmul.f32 %v1183, 2.0
      %v1233 = vmul.f32 %v1185, 2.0
      %v1234 = vmul.f32 %v1187, 2.0
      %v1235 = vmul.f32 %v1189, 2.0
      %v1236 = vmul.f32 %v1191, 2.0
      %v1237 = vmul.f32 %v1193, 2.0
      %v1238 = vmul.f32 %v1195, 2.0
      %v1239 = vmul.f32 %v1197, 2.0
      %v1240 = vmul.f32 %v1199, 2.0
      %v1241 = vmul.f32 %v1201, 2.0
      %v1242 = vmul.f32 %v1203, 2.0
      %v1243 = vmul.f32 %v1205, 2.0
      %v1244 = vmul.f32 %v1207, 2.0
      %v1245 = vmul.f32 %v1209, 2.0
      %v1246 = vmul.f32 %v1211, 2.0
      %v1247 = vmul.f32 %v1213, 2.0
      %v1248 = vmul.f32 %v1215, 2.0
      %v1249 = vmul.f32 %v1217, 2.0
      %v1250 = vsub.f32 %v1218, 1.0
      %v1251 = vsub.f32 %v1219, 1.0
      %v1252 = vsub.f32 %v1220, 1.0
      %v1253 = vsub.f32 %v1221, 1.0
      %v1254 = vsub.f32 %v1222, 1.0
      %v1255 = vsub.f32 %v1223, 1.0
      %v1256 = vsub.f32 %v1224, 1.0
      %v1257 = vsub.f32 %v1225, 1.0
      %v1258 = vsub.f32 %v1226, 1.0
      %v1259 = vsub.f32 %v1227, 1.0
      %v1260 = vsub.f32 %v1228, 1.0
      %v1261 = vsub.f32 %v1229, 1.0
      %v1262 = vsub.f32 %v1230, 1.0
      %v1263 = vsub.f32 %v1231, 1.0
      %v1264 = vsub.f32 %v1232, 1.0
      %v1265 = vsub.f32 %v1233, 1.0
      %v1266 = vsub.f32 %v1234, 1.0
      %v1267 = vsub.f32 %v1235, 1.0
      %v1268 = vsub.f32 %v1236, 1.0
      %v1269 = vsub.f32 %v1237, 1.0
      %v1270 = vsub.f32 %v1238, 1.0
      %v1271 = vsub.f32 %v1239, 1.0
      %v1272 = vsub.f32 %v1240, 1.0
      %v1273 = vsub.f32 %v1241, 1.0
      %v1274 = vsub.f32 %v1242, 1.0
      %v1275 = vsub.f32 %v1243, 1.0
      %v1276 = vsub.f32 %v1244, 1.0
      %v1277 = vsub.f32 %v1245, 1.0
      %v1278 = vsub.f32 %v1246, 1.0
      %v1279 = vsub.f32 %v1247, 1.0
      %v1280 = vsub.f32 %v1248, 1.0
      %v1281 = vsub.f32 %v1249, 1.0
      %1314 = vrot.lane.b32.xlu0 %v390, 32
      %v1315 = vpop.permute.xlu0 %1314
      %1316 = vrot.lane.b32.xlu0 %v391, 32
      %v1317 = vpop.permute.xlu0 %1316
      %1318 = vrot.lane.b32.xlu0 %v392, 32
      %v1319 = vpop.permute.xlu0 %1318
      %1320 = vrot.lane.b32.xlu0 %v393, 32
      %v1321 = vpop.permute.xlu0 %1320
      %1322 = vrot.lane.b32.xlu0 %v394, 32
      %v1323 = vpop.permute.xlu0 %1322
      %1324 = vrot.lane.b32.xlu0 %v395, 32
      %v1325 = vpop.permute.xlu0 %1324
      %1326 = vrot.lane.b32.xlu0 %v396, 32
      %v1327 = vpop.permute.xlu0 %1326
      %1328 = vrot.lane.b32.xlu0 %v397, 32
      %v1329 = vpop.permute.xlu0 %1328
      %1330 = vrot.lane.b32.xlu0 %v398, 32
      %v1331 = vpop.permute.xlu0 %1330
      %1332 = vrot.lane.b32.xlu0 %v399, 32
      %v1333 = vpop.permute.xlu0 %1332
      %1334 = vrot.lane.b32.xlu0 %v400, 32
      %v1335 = vpop.permute.xlu0 %1334
      %1336 = vrot.lane.b32.xlu0 %v401, 32
      %v1337 = vpop.permute.xlu0 %1336
      %1338 = vrot.lane.b32.xlu0 %v402, 32
      %v1339 = vpop.permute.xlu0 %1338
      %1340 = vrot.lane.b32.xlu0 %v403, 32
      %v1341 = vpop.permute.xlu0 %1340
      %1342 = vrot.lane.b32.xlu0 %v404, 32
      %v1343 = vpop.permute.xlu0 %1342
      %1344 = vrot.lane.b32.xlu0 %v405, 32
      %v1345 = vpop.permute.xlu0 %1344
      %1346 = vrot.lane.b32.xlu0 %v406, 32
      %v1347 = vpop.permute.xlu0 %1346
      %1348 = vrot.lane.b32.xlu0 %v407, 32
      %v1349 = vpop.permute.xlu0 %1348
      %1350 = vrot.lane.b32.xlu0 %v408, 32
      %v1351 = vpop.permute.xlu0 %1350
      %1352 = vrot.lane.b32.xlu0 %v409, 32
      %v1353 = vpop.permute.xlu0 %1352
      %1354 = vrot.lane.b32.xlu0 %v410, 32
      %v1355 = vpop.permute.xlu0 %1354
      %1356 = vrot.lane.b32.xlu0 %v411, 32
      %v1357 = vpop.permute.xlu0 %1356
      %1358 = vrot.lane.b32.xlu0 %v412, 32
      %v1359 = vpop.permute.xlu0 %1358
      %1360 = vrot.lane.b32.xlu0 %v413, 32
      %v1361 = vpop.permute.xlu0 %1360
      %1362 = vrot.lane.b32.xlu0 %v414, 32
      %v1363 = vpop.permute.xlu0 %1362
      %1364 = vrot.lane.b32.xlu0 %v415, 32
      %v1365 = vpop.permute.xlu0 %1364
      %1366 = vrot.lane.b32.xlu0 %v416, 32
      %v1367 = vpop.permute.xlu0 %1366
      %1368 = vrot.lane.b32.xlu0 %v417, 32
      %v1369 = vpop.permute.xlu0 %1368
      %1370 = vrot.lane.b32.xlu0 %v418, 32
      %v1371 = vpop.permute.xlu0 %1370
      %1372 = vrot.lane.b32.xlu0 %v419, 32
      %v1373 = vpop.permute.xlu0 %1372
      %1374 = vrot.lane.b32.xlu0 %v420, 32
      %v1375 = vpop.permute.xlu0 %1374
      %1376 = vrot.lane.b32.xlu0 %v421, 32
      %v1377 = vpop.permute.xlu0 %1376
      %v1410 = vmul.f32 %v1155, %v1315
      %v1411 = vmul.f32 %v1157, %v1317
      %v1412 = vmul.f32 %v1159, %v1319
      %v1413 = vmul.f32 %v1161, %v1321
      %v1414 = vmul.f32 %v1163, %v1323
      %v1415 = vmul.f32 %v1165, %v1325
      %v1416 = vmul.f32 %v1167, %v1327
      %v1417 = vmul.f32 %v1169, %v1329
      %v1418 = vmul.f32 %v1171, %v1331
      %v1419 = vmul.f32 %v1173, %v1333
      %v1420 = vmul.f32 %v1175, %v1335
      %v1421 = vmul.f32 %v1177, %v1337
      %v1422 = vmul.f32 %v1179, %v1339
      %v1423 = vmul.f32 %v1181, %v1341
      %v1424 = vmul.f32 %v1183, %v1343
      %v1425 = vmul.f32 %v1185, %v1345
      %v1426 = vmul.f32 %v1187, %v1347
      %v1427 = vmul.f32 %v1189, %v1349
      %v1428 = vmul.f32 %v1191, %v1351
      %v1429 = vmul.f32 %v1193, %v1353
      %v1430 = vmul.f32 %v1195, %v1355
      %v1431 = vmul.f32 %v1197, %v1357
      %v1432 = vmul.f32 %v1199, %v1359
      %v1433 = vmul.f32 %v1201, %v1361
      %v1434 = vmul.f32 %v1203, %v1363
      %v1435 = vmul.f32 %v1205, %v1365
      %v1436 = vmul.f32 %v1207, %v1367
      %v1437 = vmul.f32 %v1209, %v1369
      %v1438 = vmul.f32 %v1211, %v1371
      %v1439 = vmul.f32 %v1213, %v1373
      %v1440 = vmul.f32 %v1215, %v1375
      %v1441 = vmul.f32 %v1217, %v1377
      %1474 = vrot.lane.b32.xlu0 %v1250, 64
      %v1475 = vpop.permute.xlu0 %1474
      %1476 = vrot.lane.b32.xlu0 %v1251, 64
      %v1477 = vpop.permute.xlu0 %1476
      %1478 = vrot.lane.b32.xlu0 %v1252, 64
      %v1479 = vpop.permute.xlu0 %1478
      %1480 = vrot.lane.b32.xlu0 %v1253, 64
      %v1481 = vpop.permute.xlu0 %1480
      %1482 = vrot.lane.b32.xlu0 %v1254, 64
      %v1483 = vpop.permute.xlu0 %1482
      %1484 = vrot.lane.b32.xlu0 %v1255, 64
      %v1485 = vpop.permute.xlu0 %1484
      %1486 = vrot.lane.b32.xlu0 %v1256, 64
      %v1487 = vpop.permute.xlu0 %1486
      %1488 = vrot.lane.b32.xlu0 %v1257, 64
      %v1489 = vpop.permute.xlu0 %1488
      %1490 = vrot.lane.b32.xlu0 %v1258, 64
      %v1491 = vpop.permute.xlu0 %1490
      %1492 = vrot.lane.b32.xlu0 %v1259, 64
      %v1493 = vpop.permute.xlu0 %1492
      %1494 = vrot.lane.b32.xlu0 %v1260, 64
      %v1495 = vpop.permute.xlu0 %1494
      %1496 = vrot.lane.b32.xlu0 %v1261, 64
      %v1497 = vpop.permute.xlu0 %1496
      %1498 = vrot.lane.b32.xlu0 %v1262, 64
      %v1499 = vpop.permute.xlu0 %1498
      %1500 = vrot.lane.b32.xlu0 %v1263, 64
      %v1501 = vpop.permute.xlu0 %1500
      %1502 = vrot.lane.b32.xlu0 %v1264, 64
      %v1503 = vpop.permute.xlu0 %1502
      %1504 = vrot.lane.b32.xlu0 %v1265, 64
      %v1505 = vpop.permute.xlu0 %1504
      %1506 = vrot.lane.b32.xlu0 %v1266, 64
      %v1507 = vpop.permute.xlu0 %1506
      %1508 = vrot.lane.b32.xlu0 %v1267, 64
      %v1509 = vpop.permute.xlu0 %1508
      %1510 = vrot.lane.b32.xlu0 %v1268, 64
      %v1511 = vpop.permute.xlu0 %1510
      %1512 = vrot.lane.b32.xlu0 %v1269, 64
      %v1513 = vpop.permute.xlu0 %1512
      %1514 = vrot.lane.b32.xlu0 %v1270, 64
      %v1515 = vpop.permute.xlu0 %1514
      %1516 = vrot.lane.b32.xlu0 %v1271, 64
      %v1517 = vpop.permute.xlu0 %1516
      %1518 = vrot.lane.b32.xlu0 %v1272, 64
      %v1519 = vpop.permute.xlu0 %1518
      %1520 = vrot.lane.b32.xlu0 %v1273, 64
      %v1521 = vpop.permute.xlu0 %1520
      %1522 = vrot.lane.b32.xlu0 %v1274, 64
      %v1523 = vpop.permute.xlu0 %1522
      %1524 = vrot.lane.b32.xlu0 %v1275, 64
      %v1525 = vpop.permute.xlu0 %1524
      %1526 = vrot.lane.b32.xlu0 %v1276, 64
      %v1527 = vpop.permute.xlu0 %1526
      %1528 = vrot.lane.b32.xlu0 %v1277, 64
      %v1529 = vpop.permute.xlu0 %1528
      %1530 = vrot.lane.b32.xlu0 %v1278, 64
      %v1531 = vpop.permute.xlu0 %1530
      %1532 = vrot.lane.b32.xlu0 %v1279, 64
      %v1533 = vpop.permute.xlu0 %1532
      %1534 = vrot.lane.b32.xlu0 %v1280, 64
      %v1535 = vpop.permute.xlu0 %1534
      %1536 = vrot.lane.b32.xlu0 %v1281, 64
      %v1537 = vpop.permute.xlu0 %1536
      %v1570 = vmul.f32 %v1155, %v1475
      %v1571 = vmul.f32 %v1157, %v1477
      %v1572 = vmul.f32 %v1159, %v1479
      %v1573 = vmul.f32 %v1161, %v1481
      %v1574 = vmul.f32 %v1163, %v1483
      %v1575 = vmul.f32 %v1165, %v1485
      %v1576 = vmul.f32 %v1167, %v1487
      %v1577 = vmul.f32 %v1169, %v1489
      %v1578 = vmul.f32 %v1171, %v1491
      %v1579 = vmul.f32 %v1173, %v1493
      %v1580 = vmul.f32 %v1175, %v1495
      %v1581 = vmul.f32 %v1177, %v1497
      %v1582 = vmul.f32 %v1179, %v1499
      %v1583 = vmul.f32 %v1181, %v1501
      %v1584 = vmul.f32 %v1183, %v1503
      %v1585 = vmul.f32 %v1185, %v1505
      %v1586 = vmul.f32 %v1187, %v1507
      %v1587 = vmul.f32 %v1189, %v1509
      %v1588 = vmul.f32 %v1191, %v1511
      %v1589 = vmul.f32 %v1193, %v1513
      %v1590 = vmul.f32 %v1195, %v1515
      %v1591 = vmul.f32 %v1197, %v1517
      %v1592 = vmul.f32 %v1199, %v1519
      %v1593 = vmul.f32 %v1201, %v1521
      %v1594 = vmul.f32 %v1203, %v1523
      %v1595 = vmul.f32 %v1205, %v1525
      %v1596 = vmul.f32 %v1207, %v1527
      %v1597 = vmul.f32 %v1209, %v1529
      %v1598 = vmul.f32 %v1211, %v1531
      %v1599 = vmul.f32 %v1213, %v1533
      %v1600 = vmul.f32 %v1215, %v1535
      %v1601 = vmul.f32 %v1217, %v1537
      %1634 = vrot.lane.b32.xlu0 %v1570, 32
      %v1635 = vpop.permute.xlu0 %1634
      %1636 = vrot.lane.b32.xlu0 %v1571, 32
      %v1637 = vpop.permute.xlu0 %1636
      %1638 = vrot.lane.b32.xlu0 %v1572, 32
      %v1639 = vpop.permute.xlu0 %1638
      %1640 = vrot.lane.b32.xlu0 %v1573, 32
      %v1641 = vpop.permute.xlu0 %1640
      %1642 = vrot.lane.b32.xlu0 %v1574, 32
      %v1643 = vpop.permute.xlu0 %1642
      %1644 = vrot.lane.b32.xlu0 %v1575, 32
      %v1645 = vpop.permute.xlu0 %1644
      %1646 = vrot.lane.b32.xlu0 %v1576, 32
      %v1647 = vpop.permute.xlu0 %1646
      %1648 = vrot.lane.b32.xlu0 %v1577, 32
      %v1649 = vpop.permute.xlu0 %1648
      %1650 = vrot.lane.b32.xlu0 %v1578, 32
      %v1651 = vpop.permute.xlu0 %1650
      %1652 = vrot.lane.b32.xlu0 %v1579, 32
      %v1653 = vpop.permute.xlu0 %1652
      %1654 = vrot.lane.b32.xlu0 %v1580, 32
      %v1655 = vpop.permute.xlu0 %1654
      %1656 = vrot.lane.b32.xlu0 %v1581, 32
      %v1657 = vpop.permute.xlu0 %1656
      %1658 = vrot.lane.b32.xlu0 %v1582, 32
      %v1659 = vpop.permute.xlu0 %1658
      %1660 = vrot.lane.b32.xlu0 %v1583, 32
      %v1661 = vpop.permute.xlu0 %1660
      %1662 = vrot.lane.b32.xlu0 %v1584, 32
      %v1663 = vpop.permute.xlu0 %1662
      %1664 = vrot.lane.b32.xlu0 %v1585, 32
      %v1665 = vpop.permute.xlu0 %1664
      %1666 = vrot.lane.b32.xlu0 %v1586, 32
      %v1667 = vpop.permute.xlu0 %1666
      %1668 = vrot.lane.b32.xlu0 %v1587, 32
      %v1669 = vpop.permute.xlu0 %1668
      %1670 = vrot.lane.b32.xlu0 %v1588, 32
      %v1671 = vpop.permute.xlu0 %1670
      %1672 = vrot.lane.b32.xlu0 %v1589, 32
      %v1673 = vpop.permute.xlu0 %1672
      %1674 = vrot.lane.b32.xlu0 %v1590, 32
      %v1675 = vpop.permute.xlu0 %1674
      %1676 = vrot.lane.b32.xlu0 %v1591, 32
      %v1677 = vpop.permute.xlu0 %1676
      %1678 = vrot.lane.b32.xlu0 %v1592, 32
      %v1679 = vpop.permute.xlu0 %1678
      %1680 = vrot.lane.b32.xlu0 %v1593, 32
      %v1681 = vpop.permute.xlu0 %1680
      %1682 = vrot.lane.b32.xlu0 %v1594, 32
      %v1683 = vpop.permute.xlu0 %1682
      %1684 = vrot.lane.b32.xlu0 %v1595, 32
      %v1685 = vpop.permute.xlu0 %1684
      %1686 = vrot.lane.b32.xlu0 %v1596, 32
      %v1687 = vpop.permute.xlu0 %1686
      %1688 = vrot.lane.b32.xlu0 %v1597, 32
      %v1689 = vpop.permute.xlu0 %1688
      %1690 = vrot.lane.b32.xlu0 %v1598, 32
      %v1691 = vpop.permute.xlu0 %1690
      %1692 = vrot.lane.b32.xlu0 %v1599, 32
      %v1693 = vpop.permute.xlu0 %1692
      %1694 = vrot.lane.b32.xlu0 %v1600, 32
      %v1695 = vpop.permute.xlu0 %1694
      %1696 = vrot.lane.b32.xlu0 %v1601, 32
      %v1697 = vpop.permute.xlu0 %1696
      %v1730 = vadd.f32 %v1410, %v1635
      %v1731 = vadd.f32 %v1411, %v1637
      %v1732 = vadd.f32 %v1412, %v1639
      %v1733 = vadd.f32 %v1413, %v1641
      %v1734 = vadd.f32 %v1414, %v1643
      %v1735 = vadd.f32 %v1415, %v1645
      %v1736 = vadd.f32 %v1416, %v1647
      %v1737 = vadd.f32 %v1417, %v1649
      %v1738 = vadd.f32 %v1418, %v1651
      %v1739 = vadd.f32 %v1419, %v1653
      %v1740 = vadd.f32 %v1420, %v1655
      %v1741 = vadd.f32 %v1421, %v1657
      %v1742 = vadd.f32 %v1422, %v1659
      %v1743 = vadd.f32 %v1423, %v1661
      %v1744 = vadd.f32 %v1424, %v1663
      %v1745 = vadd.f32 %v1425, %v1665
      %v1746 = vadd.f32 %v1426, %v1667
      %v1747 = vadd.f32 %v1427, %v1669
      %v1748 = vadd.f32 %v1428, %v1671
      %v1749 = vadd.f32 %v1429, %v1673
      %v1750 = vadd.f32 %v1430, %v1675
      %v1751 = vadd.f32 %v1431, %v1677
      %v1752 = vadd.f32 %v1432, %v1679
      %v1753 = vadd.f32 %v1433, %v1681
      %v1754 = vadd.f32 %v1434, %v1683
      %v1755 = vadd.f32 %v1435, %v1685
      %v1756 = vadd.f32 %v1436, %v1687
      %v1757 = vadd.f32 %v1437, %v1689
      %v1758 = vadd.f32 %v1438, %v1691
      %v1759 = vadd.f32 %v1439, %v1693
      %v1760 = vadd.f32 %v1440, %v1695
      %v1761 = vadd.f32 %v1441, %v1697
      %v1762 = vtanh.pop %v1730
      %v1763 = vtanh.pop %v1731
      %v1764 = vtanh.pop %v1732
      %v1765 = vtanh.pop %v1733
      %v1766 = vtanh.pop %v1734
      %v1767 = vtanh.pop %v1735
      %v1768 = vtanh.pop %v1736
      %v1769 = vtanh.pop %v1737
      %v1770 = vtanh.pop %v1738
      %v1771 = vtanh.pop %v1739
      %v1772 = vtanh.pop %v1740
      %v1773 = vtanh.pop %v1741
      %v1774 = vtanh.pop %v1742
      %v1775 = vtanh.pop %v1743
      %v1776 = vtanh.pop %v1744
      %v1777 = vtanh.pop %v1745
      %v1778 = vtanh.pop %v1746
      %v1779 = vtanh.pop %v1747
      %v1780 = vtanh.pop %v1748
      %v1781 = vtanh.pop %v1749
      %v1782 = vtanh.pop %v1750
      %v1783 = vtanh.pop %v1751
      %v1784 = vtanh.pop %v1752
      %v1785 = vtanh.pop %v1753
      %v1786 = vtanh.pop %v1754
      %v1787 = vtanh.pop %v1755
      %v1788 = vtanh.pop %v1756
      %v1789 = vtanh.pop %v1757
      %v1790 = vtanh.pop %v1758
      %v1791 = vtanh.pop %v1759
      %v1792 = vtanh.pop %v1760
      %v1793 = vtanh.pop %v1761
      %1826 = vrot.lane.b32.xlu0 %v1762, 64
      %v1827 = vpop.permute.xlu0 %1826
      %1828 = vrot.lane.b32.xlu0 %v1763, 64
      %v1829 = vpop.permute.xlu0 %1828
      %1830 = vrot.lane.b32.xlu0 %v1764, 64
      %v1831 = vpop.permute.xlu0 %1830
      %1832 = vrot.lane.b32.xlu0 %v1765, 64
      %v1833 = vpop.permute.xlu0 %1832
      %1834 = vrot.lane.b32.xlu0 %v1766, 64
      %v1835 = vpop.permute.xlu0 %1834
      %1836 = vrot.lane.b32.xlu0 %v1767, 64
      %v1837 = vpop.permute.xlu0 %1836
      %1838 = vrot.lane.b32.xlu0 %v1768, 64
      %v1839 = vpop.permute.xlu0 %1838
      %1840 = vrot.lane.b32.xlu0 %v1769, 64
      %v1841 = vpop.permute.xlu0 %1840
      %1842 = vrot.lane.b32.xlu0 %v1770, 64
      %v1843 = vpop.permute.xlu0 %1842
      %1844 = vrot.lane.b32.xlu0 %v1771, 64
      %v1845 = vpop.permute.xlu0 %1844
      %1846 = vrot.lane.b32.xlu0 %v1772, 64
      %v1847 = vpop.permute.xlu0 %1846
      %1848 = vrot.lane.b32.xlu0 %v1773, 64
      %v1849 = vpop.permute.xlu0 %1848
      %1850 = vrot.lane.b32.xlu0 %v1774, 64
      %v1851 = vpop.permute.xlu0 %1850
      %1852 = vrot.lane.b32.xlu0 %v1775, 64
      %v1853 = vpop.permute.xlu0 %1852
      %1854 = vrot.lane.b32.xlu0 %v1776, 64
      %v1855 = vpop.permute.xlu0 %1854
      %1856 = vrot.lane.b32.xlu0 %v1777, 64
      %v1857 = vpop.permute.xlu0 %1856
      %1858 = vrot.lane.b32.xlu0 %v1778, 64
      %v1859 = vpop.permute.xlu0 %1858
      %1860 = vrot.lane.b32.xlu0 %v1779, 64
      %v1861 = vpop.permute.xlu0 %1860
      %1862 = vrot.lane.b32.xlu0 %v1780, 64
      %v1863 = vpop.permute.xlu0 %1862
      %1864 = vrot.lane.b32.xlu0 %v1781, 64
      %v1865 = vpop.permute.xlu0 %1864
      %1866 = vrot.lane.b32.xlu0 %v1782, 64
      %v1867 = vpop.permute.xlu0 %1866
      %1868 = vrot.lane.b32.xlu0 %v1783, 64
      %v1869 = vpop.permute.xlu0 %1868
      %1870 = vrot.lane.b32.xlu0 %v1784, 64
      %v1871 = vpop.permute.xlu0 %1870
      %1872 = vrot.lane.b32.xlu0 %v1785, 64
      %v1873 = vpop.permute.xlu0 %1872
      %1874 = vrot.lane.b32.xlu0 %v1786, 64
      %v1875 = vpop.permute.xlu0 %1874
      %1876 = vrot.lane.b32.xlu0 %v1787, 64
      %v1877 = vpop.permute.xlu0 %1876
      %1878 = vrot.lane.b32.xlu0 %v1788, 64
      %v1879 = vpop.permute.xlu0 %1878
      %1880 = vrot.lane.b32.xlu0 %v1789, 64
      %v1881 = vpop.permute.xlu0 %1880
      %1882 = vrot.lane.b32.xlu0 %v1790, 64
      %v1883 = vpop.permute.xlu0 %1882
      %1884 = vrot.lane.b32.xlu0 %v1791, 64
      %v1885 = vpop.permute.xlu0 %1884
      %1886 = vrot.lane.b32.xlu0 %v1792, 64
      %v1887 = vpop.permute.xlu0 %1886
      %1888 = vrot.lane.b32.xlu0 %v1793, 64
      %v1889 = vpop.permute.xlu0 %1888
      %v1922 = vmul.f32 %v1155, %v1827
      %v1923 = vmul.f32 %v1157, %v1829
      %v1924 = vmul.f32 %v1159, %v1831
      %v1925 = vmul.f32 %v1161, %v1833
      %v1926 = vmul.f32 %v1163, %v1835
      %v1927 = vmul.f32 %v1165, %v1837
      %v1928 = vmul.f32 %v1167, %v1839
      %v1929 = vmul.f32 %v1169, %v1841
      %v1930 = vmul.f32 %v1171, %v1843
      %v1931 = vmul.f32 %v1173, %v1845
      %v1932 = vmul.f32 %v1175, %v1847
      %v1933 = vmul.f32 %v1177, %v1849
      %v1934 = vmul.f32 %v1179, %v1851
      %v1935 = vmul.f32 %v1181, %v1853
      %v1936 = vmul.f32 %v1183, %v1855
      %v1937 = vmul.f32 %v1185, %v1857
      %v1938 = vmul.f32 %v1187, %v1859
      %v1939 = vmul.f32 %v1189, %v1861
      %v1940 = vmul.f32 %v1191, %v1863
      %v1941 = vmul.f32 %v1193, %v1865
      %v1942 = vmul.f32 %v1195, %v1867
      %v1943 = vmul.f32 %v1197, %v1869
      %v1944 = vmul.f32 %v1199, %v1871
      %v1945 = vmul.f32 %v1201, %v1873
      %v1946 = vmul.f32 %v1203, %v1875
      %v1947 = vmul.f32 %v1205, %v1877
      %v1948 = vmul.f32 %v1207, %v1879
      %v1949 = vmul.f32 %v1209, %v1881
      %v1950 = vmul.f32 %v1211, %v1883
      %v1951 = vmul.f32 %v1213, %v1885
      %v1952 = vmul.f32 %v1215, %v1887
      %v1953 = vmul.f32 %v1217, %v1889
      %v1954 = vmul.f32 %v1922, 0.01
      %v1955 = vmul.f32 %v1923, 0.01
      %v1956 = vmul.f32 %v1924, 0.01
      %v1957 = vmul.f32 %v1925, 0.01
      %v1958 = vmul.f32 %v1926, 0.01
      %v1959 = vmul.f32 %v1927, 0.01
      %v1960 = vmul.f32 %v1928, 0.01
      %v1961 = vmul.f32 %v1929, 0.01
      %v1962 = vmul.f32 %v1930, 0.01
      %v1963 = vmul.f32 %v1931, 0.01
      %v1964 = vmul.f32 %v1932, 0.01
      %v1965 = vmul.f32 %v1933, 0.01
      %v1966 = vmul.f32 %v1934, 0.01
      %v1967 = vmul.f32 %v1935, 0.01
      %v1968 = vmul.f32 %v1936, 0.01
      %v1969 = vmul.f32 %v1937, 0.01
      %v1970 = vmul.f32 %v1938, 0.01
      %v1971 = vmul.f32 %v1939, 0.01
      %v1972 = vmul.f32 %v1940, 0.01
      %v1973 = vmul.f32 %v1941, 0.01
      %v1974 = vmul.f32 %v1942, 0.01
      %v1975 = vmul.f32 %v1943, 0.01
      %v1976 = vmul.f32 %v1944, 0.01
      %v1977 = vmul.f32 %v1945, 0.01
      %v1978 = vmul.f32 %v1946, 0.01
      %v1979 = vmul.f32 %v1947, 0.01
      %v1980 = vmul.f32 %v1948, 0.01
      %v1981 = vmul.f32 %v1949, 0.01
      %v1982 = vmul.f32 %v1950, 0.01
      %v1983 = vmul.f32 %v1951, 0.01
      %v1984 = vmul.f32 %v1952, 0.01
      %v1985 = vmul.f32 %v1953, 0.01
      %v1986 = vmax.f32 %v1922, %v1954
      %v1987 = vmax.f32 %v1923, %v1955
      %v1988 = vmax.f32 %v1924, %v1956
      %v1989 = vmax.f32 %v1925, %v1957
      %v1990 = vmax.f32 %v1926, %v1958
      %v1991 = vmax.f32 %v1927, %v1959
      %v1992 = vmax.f32 %v1928, %v1960
      %v1993 = vmax.f32 %v1929, %v1961
      %v1994 = vmax.f32 %v1930, %v1962
      %v1995 = vmax.f32 %v1931, %v1963
      %v1996 = vmax.f32 %v1932, %v1964
      %v1997 = vmax.f32 %v1933, %v1965
      %v1998 = vmax.f32 %v1934, %v1966
      %v1999 = vmax.f32 %v1935, %v1967
      %v2000 = vmax.f32 %v1936, %v1968
      %v2001 = vmax.f32 %v1937, %v1969
      %v2002 = vmax.f32 %v1938, %v1970
      %v2003 = vmax.f32 %v1939, %v1971
      %v2004 = vmax.f32 %v1940, %v1972
      %v2005 = vmax.f32 %v1941, %v1973
      %v2006 = vmax.f32 %v1942, %v1974
      %v2007 = vmax.f32 %v1943, %v1975
      %v2008 = vmax.f32 %v1944, %v1976
      %v2009 = vmax.f32 %v1945, %v1977
      %v2010 = vmax.f32 %v1946, %v1978
      %v2011 = vmax.f32 %v1947, %v1979
      %v2012 = vmax.f32 %v1948, %v1980
      %v2013 = vmax.f32 %v1949, %v1981
      %v2014 = vmax.f32 %v1950, %v1982
      %v2015 = vmax.f32 %v1951, %v1983
      %v2016 = vmax.f32 %v1952, %v1984
      %v2017 = vmax.f32 %v1953, %v1985
      %v2018 = vpack.c.bf16 %v1987, %v1986
      %v2019 = vpack.c.bf16 %v1989, %v1988
      %v2020 = vpack.c.bf16 %v1991, %v1990
      %v2021 = vpack.c.bf16 %v1993, %v1992
      %v2022 = vpack.c.bf16 %v1995, %v1994
      %v2023 = vpack.c.bf16 %v1997, %v1996
      %v2024 = vpack.c.bf16 %v1999, %v1998
      %v2025 = vpack.c.bf16 %v2001, %v2000
      %v2026 = vpack.c.bf16 %v2003, %v2002
      %v2027 = vpack.c.bf16 %v2005, %v2004
      %v2028 = vpack.c.bf16 %v2007, %v2006
      %v2029 = vpack.c.bf16 %v2009, %v2008
      %v2030 = vpack.c.bf16 %v2011, %v2010
      %v2031 = vpack.c.bf16 %v2013, %v2012
      %v2032 = vpack.c.bf16 %v2015, %v2014
      %v2033 = vpack.c.bf16 %v2017, %v2016
      %v2050 = vunpack.c.l.b16 %v2018
      %v2051 = vunpack.c.h.b16 %v2018
      %v2052 = vunpack.c.l.b16 %v2019
      %v2053 = vunpack.c.h.b16 %v2019
      %v2054 = vunpack.c.l.b16 %v2020
      %v2055 = vunpack.c.h.b16 %v2020
      %v2056 = vunpack.c.l.b16 %v2021
      %v2057 = vunpack.c.h.b16 %v2021
      %v2058 = vunpack.c.l.b16 %v2022
      %v2059 = vunpack.c.h.b16 %v2022
      %v2060 = vunpack.c.l.b16 %v2023
      %v2061 = vunpack.c.h.b16 %v2023
      %v2062 = vunpack.c.l.b16 %v2024
      %v2063 = vunpack.c.h.b16 %v2024
      %v2064 = vunpack.c.l.b16 %v2025
      %v2065 = vunpack.c.h.b16 %v2025
      %v2066 = vunpack.c.l.b16 %v2026
      %v2067 = vunpack.c.h.b16 %v2026
      %v2068 = vunpack.c.l.b16 %v2027
      %v2069 = vunpack.c.h.b16 %v2027
      %v2070 = vunpack.c.l.b16 %v2028
      %v2071 = vunpack.c.h.b16 %v2028
      %v2072 = vunpack.c.l.b16 %v2029
      %v2073 = vunpack.c.h.b16 %v2029
      %v2074 = vunpack.c.l.b16 %v2030
      %v2075 = vunpack.c.h.b16 %v2030
      %v2076 = vunpack.c.l.b16 %v2031
      %v2077 = vunpack.c.h.b16 %v2031
      %v2078 = vunpack.c.l.b16 %v2032
      %v2079 = vunpack.c.h.b16 %v2032
      %v2080 = vunpack.c.l.b16 %v2033
      %v2081 = vunpack.c.h.b16 %v2033
      %v2082 = vpack.c.b16 %v2050, %v2050
      %v2083 = vpack.c.b16 %v2051, %v2051
      %v2084 = vpack.c.b16 %v2052, %v2052
      %v2085 = vpack.c.b16 %v2053, %v2053
      %v2086 = vpack.c.b16 %v2054, %v2054
      %v2087 = vpack.c.b16 %v2055, %v2055
      %v2088 = vpack.c.b16 %v2056, %v2056
      %v2089 = vpack.c.b16 %v2057, %v2057
      %v2090 = vpack.c.b16 %v2058, %v2058
      %v2091 = vpack.c.b16 %v2059, %v2059
      %v2092 = vpack.c.b16 %v2060, %v2060
      %v2093 = vpack.c.b16 %v2061, %v2061
      %v2094 = vpack.c.b16 %v2062, %v2062
      %v2095 = vpack.c.b16 %v2063, %v2063
      %v2096 = vpack.c.b16 %v2064, %v2064
      %v2097 = vpack.c.b16 %v2065, %v2065
      %v2098 = vpack.c.b16 %v2066, %v2066
      %v2099 = vpack.c.b16 %v2067, %v2067
      %v2100 = vpack.c.b16 %v2068, %v2068
      %v2101 = vpack.c.b16 %v2069, %v2069
      %v2102 = vpack.c.b16 %v2070, %v2070
      %v2103 = vpack.c.b16 %v2071, %v2071
      %v2104 = vpack.c.b16 %v2072, %v2072
      %v2105 = vpack.c.b16 %v2073, %v2073
      %v2106 = vpack.c.b16 %v2074, %v2074
      %v2107 = vpack.c.b16 %v2075, %v2075
      %v2108 = vpack.c.b16 %v2076, %v2076
      %v2109 = vpack.c.b16 %v2077, %v2077
      %v2110 = vpack.c.b16 %v2078, %v2078
      %v2111 = vpack.c.b16 %v2079, %v2079
      %v2112 = vpack.c.b16 %v2080, %v2080
      %v2113 = vpack.c.b16 %v2081, %v2081
      %2114 = vrot.lane.b32.xlu0 %v2082, 32
      %v2115 = vpop.permute.xlu0 %2114
      %2116 = vrot.lane.b32.xlu0 %v2083, 32
      %v2117 = vpop.permute.xlu0 %2116
      %2118 = vrot.lane.b32.xlu0 %v2084, 32
      %v2119 = vpop.permute.xlu0 %2118
      %2120 = vrot.lane.b32.xlu0 %v2085, 32
      %v2121 = vpop.permute.xlu0 %2120
      %2122 = vrot.lane.b32.xlu0 %v2086, 32
      %v2123 = vpop.permute.xlu0 %2122
      %2124 = vrot.lane.b32.xlu0 %v2087, 32
      %v2125 = vpop.permute.xlu0 %2124
      %2126 = vrot.lane.b32.xlu0 %v2088, 32
      %v2127 = vpop.permute.xlu0 %2126
      %2128 = vrot.lane.b32.xlu0 %v2089, 32
      %v2129 = vpop.permute.xlu0 %2128
      %2130 = vrot.lane.b32.xlu0 %v2090, 32
      %v2131 = vpop.permute.xlu0 %2130
      %2132 = vrot.lane.b32.xlu0 %v2091, 32
      %v2133 = vpop.permute.xlu0 %2132
      %2134 = vrot.lane.b32.xlu0 %v2092, 32
      %v2135 = vpop.permute.xlu0 %2134
      %2136 = vrot.lane.b32.xlu0 %v2093, 32
      %v2137 = vpop.permute.xlu0 %2136
      %2138 = vrot.lane.b32.xlu0 %v2094, 32
      %v2139 = vpop.permute.xlu0 %2138
      %2140 = vrot.lane.b32.xlu0 %v2095, 32
      %v2141 = vpop.permute.xlu0 %2140
      %2142 = vrot.lane.b32.xlu0 %v2096, 32
      %v2143 = vpop.permute.xlu0 %2142
      %2144 = vrot.lane.b32.xlu0 %v2097, 32
      %v2145 = vpop.permute.xlu0 %2144
      %2146 = vrot.lane.b32.xlu0 %v2098, 32
      %v2147 = vpop.permute.xlu0 %2146
      %2148 = vrot.lane.b32.xlu0 %v2099, 32
      %v2149 = vpop.permute.xlu0 %2148
      %2150 = vrot.lane.b32.xlu0 %v2100, 32
      %v2151 = vpop.permute.xlu0 %2150
      %2152 = vrot.lane.b32.xlu0 %v2101, 32
      %v2153 = vpop.permute.xlu0 %2152
      %2154 = vrot.lane.b32.xlu0 %v2102, 32
      %v2155 = vpop.permute.xlu0 %2154
      %2156 = vrot.lane.b32.xlu0 %v2103, 32
      %v2157 = vpop.permute.xlu0 %2156
      %2158 = vrot.lane.b32.xlu0 %v2104, 32
      %v2159 = vpop.permute.xlu0 %2158
      %2160 = vrot.lane.b32.xlu0 %v2105, 32
      %v2161 = vpop.permute.xlu0 %2160
      %2162 = vrot.lane.b32.xlu0 %v2106, 32
      %v2163 = vpop.permute.xlu0 %2162
      %2164 = vrot.lane.b32.xlu0 %v2107, 32
      %v2165 = vpop.permute.xlu0 %2164
      %2166 = vrot.lane.b32.xlu0 %v2108, 32
      %v2167 = vpop.permute.xlu0 %2166
      %2168 = vrot.lane.b32.xlu0 %v2109, 32
      %v2169 = vpop.permute.xlu0 %2168
      %2170 = vrot.lane.b32.xlu0 %v2110, 32
      %v2171 = vpop.permute.xlu0 %2170
      %2172 = vrot.lane.b32.xlu0 %v2111, 32
      %v2173 = vpop.permute.xlu0 %2172
      %2174 = vrot.lane.b32.xlu0 %v2112, 32
      %v2175 = vpop.permute.xlu0 %2174
      %2176 = vrot.lane.b32.xlu0 %v2113, 32
      %v2177 = vpop.permute.xlu0 %2176
      %vm2210 = vcmask 257024
      %2211 = vst.msk [vmem:[#allocation2] sm:$0xf] %vm2210, %v2115
      %2212 = vst.msk [vmem:[#allocation2 + $0x4] sm:$0xf] %vm2210, %v2117
      %2213 = vst.msk [vmem:[#allocation2 + $0x8] sm:$0xf] %vm2210, %v2119
      %2214 = vst.msk [vmem:[#allocation2 + $0xc] sm:$0xf] %vm2210, %v2121
      %2215 = vst.msk [vmem:[#allocation2 + $0x10] sm:$0xf] %vm2210, %v2123
      %2216 = vst.msk [vmem:[#allocation2 + $0x14] sm:$0xf] %vm2210, %v2125
      %2217 = vst.msk [vmem:[#allocation2 + $0x18] sm:$0xf] %vm2210, %v2127
      %2218 = vst.msk [vmem:[#allocation2 + $0x1c] sm:$0xf] %vm2210, %v2129
      %2219 = vst.msk [vmem:[#allocation2 + $0x20] sm:$0xf] %vm2210, %v2131
      %2220 = vst.msk [vmem:[#allocation2 + $0x24] sm:$0xf] %vm2210, %v2133
      %2221 = vst.msk [vmem:[#allocation2 + $0x28] sm:$0xf] %vm2210, %v2135
      %2222 = vst.msk [vmem:[#allocation2 + $0x2c] sm:$0xf] %vm2210, %v2137
      %2223 = vst.msk [vmem:[#allocation2 + $0x30] sm:$0xf] %vm2210, %v2139
      %2224 = vst.msk [vmem:[#allocation2 + $0x34] sm:$0xf] %vm2210, %v2141
      %2225 = vst.msk [vmem:[#allocation2 + $0x38] sm:$0xf] %vm2210, %v2143
      %2226 = vst.msk [vmem:[#allocation2 + $0x3c] sm:$0xf] %vm2210, %v2145
      %2227 = vst.msk [vmem:[#allocation2 + $0x40] sm:$0xf] %vm2210, %v2147
      %2228 = vst.msk [vmem:[#allocation2 + $0x44] sm:$0xf] %vm2210, %v2149
      %2229 = vst.msk [vmem:[#allocation2 + $0x48] sm:$0xf] %vm2210, %v2151
      %2230 = vst.msk [vmem:[#allocation2 + $0x4c] sm:$0xf] %vm2210, %v2153
      %2231 = vst.msk [vmem:[#allocation2 + $0x50] sm:$0xf] %vm2210, %v2155
      %2232 = vst.msk [vmem:[#allocation2 + $0x54] sm:$0xf] %vm2210, %v2157
      %2233 = vst.msk [vmem:[#allocation2 + $0x58] sm:$0xf] %vm2210, %v2159
      %2234 = vst.msk [vmem:[#allocation2 + $0x5c] sm:$0xf] %vm2210, %v2161
      %2235 = vst.msk [vmem:[#allocation2 + $0x60] sm:$0xf] %vm2210, %v2163
      %2236 = vst.msk [vmem:[#allocation2 + $0x64] sm:$0xf] %vm2210, %v2165
      %2237 = vst.msk [vmem:[#allocation2 + $0x68] sm:$0xf] %vm2210, %v2167
      %2238 = vst.msk [vmem:[#allocation2 + $0x6c] sm:$0xf] %vm2210, %v2169
      %2239 = vst.msk [vmem:[#allocation2 + $0x70] sm:$0xf] %vm2210, %v2171
      %2240 = vst.msk [vmem:[#allocation2 + $0x74] sm:$0xf] %vm2210, %v2173
      %2241 = vst.msk [vmem:[#allocation2 + $0x78] sm:$0xf] %vm2210, %v2175
      %2242 = vst.msk [vmem:[#allocation2 + $0x7c] sm:$0xf] %vm2210, %v2177
      %v2243 = vpack.c.bf16 %v1923, %v1922
      %v2244 = vpack.c.bf16 %v1925, %v1924
      %v2245 = vpack.c.bf16 %v1927, %v1926
      %v2246 = vpack.c.bf16 %v1929, %v1928
      %v2247 = vpack.c.bf16 %v1931, %v1930
      %v2248 = vpack.c.bf16 %v1933, %v1932
      %v2249 = vpack.c.bf16 %v1935, %v1934
      %v2250 = vpack.c.bf16 %v1937, %v1936
      %v2251 = vpack.c.bf16 %v1939, %v1938
      %v2252 = vpack.c.bf16 %v1941, %v1940
      %v2253 = vpack.c.bf16 %v1943, %v1942
      %v2254 = vpack.c.bf16 %v1945, %v1944
      %v2255 = vpack.c.bf16 %v1947, %v1946
      %v2256 = vpack.c.bf16 %v1949, %v1948
      %v2257 = vpack.c.bf16 %v1951, %v1950
      %v2258 = vpack.c.bf16 %v1953, %v1952
      %2275 = vrot.lane.b32.xlu0 %v2243, 32
      %v2276 = vpop.permute.xlu0 %2275
      %2277 = vrot.lane.b32.xlu0 %v2244, 32
      %v2278 = vpop.permute.xlu0 %2277
      %2279 = vrot.lane.b32.xlu0 %v2245, 32
      %v2280 = vpop.permute.xlu0 %2279
      %2281 = vrot.lane.b32.xlu0 %v2246, 32
      %v2282 = vpop.permute.xlu0 %2281
      %2283 = vrot.lane.b32.xlu0 %v2247, 32
      %v2284 = vpop.permute.xlu0 %2283
      %2285 = vrot.lane.b32.xlu0 %v2248, 32
      %v2286 = vpop.permute.xlu0 %2285
      %2287 = vrot.lane.b32.xlu0 %v2249, 32
      %v2288 = vpop.permute.xlu0 %2287
      %2289 = vrot.lane.b32.xlu0 %v2250, 32
      %v2290 = vpop.permute.xlu0 %2289
      %2291 = vrot.lane.b32.xlu0 %v2251, 32
      %v2292 = vpop.permute.xlu0 %2291
      %2293 = vrot.lane.b32.xlu0 %v2252, 32
      %v2294 = vpop.permute.xlu0 %2293
      %2295 = vrot.lane.b32.xlu0 %v2253, 32
      %v2296 = vpop.permute.xlu0 %2295
      %2297 = vrot.lane.b32.xlu0 %v2254, 32
      %v2298 = vpop.permute.xlu0 %2297
      %2299 = vrot.lane.b32.xlu0 %v2255, 32
      %v2300 = vpop.permute.xlu0 %2299
      %2301 = vrot.lane.b32.xlu0 %v2256, 32
      %v2302 = vpop.permute.xlu0 %2301
      %2303 = vrot.lane.b32.xlu0 %v2257, 32
      %v2304 = vpop.permute.xlu0 %2303
      %2305 = vrot.lane.b32.xlu0 %v2258, 32
      %v2306 = vpop.permute.xlu0 %2305
      %v2308 = vsel %vm784, %v2276, 0
      %v2311 = vsel %vm784, %v2278, 0
      %v2314 = vsel %vm784, %v2280, 0
      %v2317 = vsel %vm784, %v2282, 0
      %v2320 = vsel %vm784, %v2284, 0
      %v2323 = vsel %vm784, %v2286, 0
      %v2326 = vsel %vm784, %v2288, 0
      %v2329 = vsel %vm784, %v2290, 0
      %v2332 = vsel %vm784, %v2292, 0
      %v2335 = vsel %vm784, %v2294, 0
      %v2338 = vsel %vm784, %v2296, 0
      %v2341 = vsel %vm784, %v2298, 0
      %v2344 = vsel %vm784, %v2300, 0
      %v2347 = vsel %vm784, %v2302, 0
      %v2350 = vsel %vm784, %v2304, 0
      %v2353 = vsel %vm784, %v2306, 0
      %2355 = vmatprep.subr.bf16.mxu0 0
      %2356 = vmatpush1.bf16.msra.mxu0 0
      %2357 = vmatprep.subr.bf16.mxu0 0
      %2358 = vmatpush1.bf16.msra.mxu0 0
      %2359 = vmatprep.subr.bf16.mxu0 0
      %2360 = vmatpush1.bf16.msra.mxu0 0
      %2361 = vmatprep.subr.bf16.mxu0 0
      %2362 = vmatpush1.bf16.msra.mxu0 0
      %2363 = vmatprep.subr.bf16.mxu0 0
      %2364 = vmatpush1.bf16.msra.mxu0 0
      %2365 = vmatprep.subr.bf16.mxu0 0
      %2366 = vmatpush1.bf16.msra.mxu0 0
      %2367 = vmatprep.subr.bf16.mxu0 0
      %2368 = vmatpush1.bf16.msra.mxu0 %v781
      %2369 = vmatprep.subr.bf16.mxu0 0
      %2370 = vmatpush1.bf16.msra.mxu0 %v780
      %2371 = vmatprep.subr.bf16.mxu0 0
      %2372 = vmatpush2.bf16.msra.mxu0 0
      %2373 = vmatprep.subr.bf16.mxu0 0
      %2374 = vmatpush2.bf16.msra.mxu0 0
      %2375 = vmatprep.subr.bf16.mxu0 0
      %2376 = vmatpush2.bf16.msra.mxu0 0
      %2377 = vmatprep.subr.bf16.mxu0 0
      %2378 = vmatpush2.bf16.msra.mxu0 0
      %2379 = vmatprep.subr.bf16.mxu0 0
      %2380 = vmatpush2.bf16.msra.mxu0 0
      %2381 = vmatprep.subr.bf16.mxu0 0
      %2382 = vmatpush2.bf16.msra.mxu0 0
      %2383 = vmatprep.subr.bf16.mxu0 0
      %2384 = vmatpush2.bf16.msra.mxu0 0
      %2385 = vmatprep.subr.bf16.mxu0 0
      %2386 = vmatpush2.bf16.msra.mxu0 0
      %2387 = vmatprep.mubr.bf16.mxu0 0
      %2388 = vmatmul.mubr.bf16.gmra.mxu0 %v2308
      %v2389 = vpop.f32.mrf.mxu0
      %v2390 = vadd.f32 0.0, %v2389
      %v2391 = vpop.f32.mrf.mxu0
      %v2392 = vpop.f32.mrf.mxu0
      %v2393 = vadd.f32 0.0, %v2392
      %v2394 = vpop.f32.mrf.mxu0
      %2395 = vmatprep.mubr.bf16.mxu0 0
      %2396 = vmatmul.mubr.bf16.gmra.mxu0 %v2311
      %v2397 = vpop.f32.mrf.mxu0
      %v2398 = vadd.f32 0.0, %v2397
      %v2399 = vpop.f32.mrf.mxu0
      %v2400 = vpop.f32.mrf.mxu0
      %v2401 = vadd.f32 0.0, %v2400
      %v2402 = vpop.f32.mrf.mxu0
      %2403 = vmatprep.mubr.bf16.mxu0 0
      %2404 = vmatmul.mubr.bf16.gmra.mxu0 %v2314
      %v2405 = vpop.f32.mrf.mxu0
      %v2406 = vadd.f32 0.0, %v2405
      %v2407 = vpop.f32.mrf.mxu0
      %v2408 = vpop.f32.mrf.mxu0
      %v2409 = vadd.f32 0.0, %v2408
      %v2410 = vpop.f32.mrf.mxu0
      %2411 = vmatprep.mubr.bf16.mxu0 0
      %2412 = vmatmul.mubr.bf16.gmra.mxu0 %v2317
      %v2413 = vpop.f32.mrf.mxu0
      %v2414 = vadd.f32 0.0, %v2413
      %v2415 = vpop.f32.mrf.mxu0
      %v2416 = vpop.f32.mrf.mxu0
      %v2417 = vadd.f32 0.0, %v2416
      %v2418 = vpop.f32.mrf.mxu0
      %2419 = vmatprep.mubr.bf16.mxu0 0
      %2420 = vmatmul.mubr.bf16.gmra.mxu0 %v2320
      %v2421 = vpop.f32.mrf.mxu0
      %v2422 = vadd.f32 0.0, %v2421
      %v2423 = vpop.f32.mrf.mxu0
      %v2424 = vpop.f32.mrf.mxu0
      %v2425 = vadd.f32 0.0, %v2424
      %v2426 = vpop.f32.mrf.mxu0
      %2427 = vmatprep.mubr.bf16.mxu0 0
      %2428 = vmatmul.mubr.bf16.gmra.mxu0 %v2323
      %v2429 = vpop.f32.mrf.mxu0
      %v2430 = vadd.f32 0.0, %v2429
      %v2431 = vpop.f32.mrf.mxu0
      %v2432 = vpop.f32.mrf.mxu0
      %v2433 = vadd.f32 0.0, %v2432
      %v2434 = vpop.f32.mrf.mxu0
      %2435 = vmatprep.mubr.bf16.mxu0 0
      %2436 = vmatmul.mubr.bf16.gmra.mxu0 %v2326
      %v2437 = vpop.f32.mrf.mxu0
      %v2438 = vadd.f32 0.0, %v2437
      %v2439 = vpop.f32.mrf.mxu0
      %v2440 = vpop.f32.mrf.mxu0
      %v2441 = vadd.f32 0.0, %v2440
      %v2442 = vpop.f32.mrf.mxu0
      %2443 = vmatprep.mubr.bf16.mxu0 0
      %2444 = vmatmul.mubr.bf16.gmra.mxu0 %v2329
      %v2445 = vpop.f32.mrf.mxu0
      %v2446 = vadd.f32 0.0, %v2445
      %v2447 = vpop.f32.mrf.mxu0
      %v2448 = vpop.f32.mrf.mxu0
      %v2449 = vadd.f32 0.0, %v2448
      %v2450 = vpop.f32.mrf.mxu0
      %2451 = vmatprep.mubr.bf16.mxu0 0
      %2452 = vmatmul.mubr.bf16.gmra.mxu0 %v2332
      %v2453 = vpop.f32.mrf.mxu0
      %v2454 = vadd.f32 0.0, %v2453
      %v2455 = vpop.f32.mrf.mxu0
      %v2456 = vpop.f32.mrf.mxu0
      %v2457 = vadd.f32 0.0, %v2456
      %v2458 = vpop.f32.mrf.mxu0
      %2459 = vmatprep.mubr.bf16.mxu0 0
      %2460 = vmatmul.mubr.bf16.gmra.mxu0 %v2335
      %v2461 = vpop.f32.mrf.mxu0
      %v2462 = vadd.f32 0.0, %v2461
      %v2463 = vpop.f32.mrf.mxu0
      %v2464 = vpop.f32.mrf.mxu0
      %v2465 = vadd.f32 0.0, %v2464
      %v2466 = vpop.f32.mrf.mxu0
      %2467 = vmatprep.mubr.bf16.mxu0 0
      %2468 = vmatmul.mubr.bf16.gmra.mxu0 %v2338
      %v2469 = vpop.f32.mrf.mxu0
      %v2470 = vadd.f32 0.0, %v2469
      %v2471 = vpop.f32.mrf.mxu0
      %v2472 = vpop.f32.mrf.mxu0
      %v2473 = vadd.f32 0.0, %v2472
      %v2474 = vpop.f32.mrf.mxu0
      %2475 = vmatprep.mubr.bf16.mxu0 0
      %2476 = vmatmul.mubr.bf16.gmra.mxu0 %v2341
      %v2477 = vpop.f32.mrf.mxu0
      %v2478 = vadd.f32 0.0, %v2477
      %v2479 = vpop.f32.mrf.mxu0
      %v2480 = vpop.f32.mrf.mxu0
      %v2481 = vadd.f32 0.0, %v2480
      %v2482 = vpop.f32.mrf.mxu0
      %2483 = vmatprep.mubr.bf16.mxu0 0
      %2484 = vmatmul.mubr.bf16.gmra.mxu0 %v2344
      %v2485 = vpop.f32.mrf.mxu0
      %v2486 = vadd.f32 0.0, %v2485
      %v2487 = vpop.f32.mrf.mxu0
      %v2488 = vpop.f32.mrf.mxu0
      %v2489 = vadd.f32 0.0, %v2488
      %v2490 = vpop.f32.mrf.mxu0
      %2491 = vmatprep.mubr.bf16.mxu0 0
      %2492 = vmatmul.mubr.bf16.gmra.mxu0 %v2347
      %v2493 = vpop.f32.mrf.mxu0
      %v2494 = vadd.f32 0.0, %v2493
      %v2495 = vpop.f32.mrf.mxu0
      %v2496 = vpop.f32.mrf.mxu0
      %v2497 = vadd.f32 0.0, %v2496
      %v2498 = vpop.f32.mrf.mxu0
      %2499 = vmatprep.mubr.bf16.mxu0 0
      %2500 = vmatmul.mubr.bf16.gmra.mxu0 %v2350
      %v2501 = vpop.f32.mrf.mxu0
      %v2502 = vadd.f32 0.0, %v2501
      %v2503 = vpop.f32.mrf.mxu0
      %v2504 = vpop.f32.mrf.mxu0
      %v2505 = vadd.f32 0.0, %v2504
      %v2506 = vpop.f32.mrf.mxu0
      %2507 = vmatprep.mubr.bf16.mxu0 0
      %2508 = vmatmul.mubr.bf16.gmra.mxu0 %v2353
      %v2509 = vpop.f32.mrf.mxu0
      %v2510 = vadd.f32 0.0, %v2509
      %v2511 = vpop.f32.mrf.mxu0
      %v2512 = vpop.f32.mrf.mxu0
      %v2513 = vadd.f32 0.0, %v2512
      %v2514 = vpop.f32.mrf.mxu0
      %2515 = vdwg.mxu0
      %v2516 = vadd.f32 %v630, %v2390
      %v2517 = vadd.f32 %v633, %v2393
      %v2518 = vadd.f32 %v638, %v2398
      %v2519 = vadd.f32 %v641, %v2401
      %v2520 = vadd.f32 %v646, %v2406
      %v2521 = vadd.f32 %v649, %v2409
      %v2522 = vadd.f32 %v654, %v2414
      %v2523 = vadd.f32 %v657, %v2417
      %v2524 = vadd.f32 %v662, %v2422
      %v2525 = vadd.f32 %v665, %v2425
      %v2526 = vadd.f32 %v670, %v2430
      %v2527 = vadd.f32 %v673, %v2433
      %v2528 = vadd.f32 %v678, %v2438
      %v2529 = vadd.f32 %v681, %v2441
      %v2530 = vadd.f32 %v686, %v2446
      %v2531 = vadd.f32 %v689, %v2449
      %v2532 = vadd.f32 %v694, %v2454
      %v2533 = vadd.f32 %v697, %v2457
      %v2534 = vadd.f32 %v702, %v2462
      %v2535 = vadd.f32 %v705, %v2465
      %v2536 = vadd.f32 %v710, %v2470
      %v2537 = vadd.f32 %v713, %v2473
      %v2538 = vadd.f32 %v718, %v2478
      %v2539 = vadd.f32 %v721, %v2481
      %v2540 = vadd.f32 %v726, %v2486
      %v2541 = vadd.f32 %v729, %v2489
      %v2542 = vadd.f32 %v734, %v2494
      %v2543 = vadd.f32 %v737, %v2497
      %v2544 = vadd.f32 %v742, %v2502
      %v2545 = vadd.f32 %v745, %v2505
      %v2546 = vadd.f32 %v750, %v2510
      %v2547 = vadd.f32 %v753, %v2513
      %v2548 = vxor.u32 %v2516, 2147483648
      %v2549 = vxor.u32 %v2517, 2147483648
      %v2550 = vxor.u32 %v2518, 2147483648
      %v2551 = vxor.u32 %v2519, 2147483648
      %v2552 = vxor.u32 %v2520, 2147483648
      %v2553 = vxor.u32 %v2521, 2147483648
      %v2554 = vxor.u32 %v2522, 2147483648
      %v2555 = vxor.u32 %v2523, 2147483648
      %v2556 = vxor.u32 %v2524, 2147483648
      %v2557 = vxor.u32 %v2525, 2147483648
      %v2558 = vxor.u32 %v2526, 2147483648
      %v2559 = vxor.u32 %v2527, 2147483648
      %v2560 = vxor.u32 %v2528, 2147483648
      %v2561 = vxor.u32 %v2529, 2147483648
      %v2562 = vxor.u32 %v2530, 2147483648
      %v2563 = vxor.u32 %v2531, 2147483648
      %v2564 = vxor.u32 %v2532, 2147483648
      %v2565 = vxor.u32 %v2533, 2147483648
      %v2566 = vxor.u32 %v2534, 2147483648
      %v2567 = vxor.u32 %v2535, 2147483648
      %v2568 = vxor.u32 %v2536, 2147483648
      %v2569 = vxor.u32 %v2537, 2147483648
      %v2570 = vxor.u32 %v2538, 2147483648
      %v2571 = vxor.u32 %v2539, 2147483648
      %v2572 = vxor.u32 %v2540, 2147483648
      %v2573 = vxor.u32 %v2541, 2147483648
      %v2574 = vxor.u32 %v2542, 2147483648
      %v2575 = vxor.u32 %v2543, 2147483648
      %v2576 = vxor.u32 %v2544, 2147483648
      %v2577 = vxor.u32 %v2545, 2147483648
      %v2578 = vxor.u32 %v2546, 2147483648
      %v2579 = vxor.u32 %v2547, 2147483648
      %v2580 = vmul.f32 %v2548, 1.442695
      %v2581 = vpow.pop %v2580
      %v2582 = vmul.f32 %v2549, 1.442695
      %v2583 = vpow.pop %v2582
      %v2584 = vmul.f32 %v2550, 1.442695
      %v2585 = vpow.pop %v2584
      %v2586 = vmul.f32 %v2551, 1.442695
      %v2587 = vpow.pop %v2586
      %v2588 = vmul.f32 %v2552, 1.442695
      %v2589 = vpow.pop %v2588
      %v2590 = vmul.f32 %v2553, 1.442695
      %v2591 = vpow.pop %v2590
      %v2592 = vmul.f32 %v2554, 1.442695
      %v2593 = vpow.pop %v2592
      %v2594 = vmul.f32 %v2555, 1.442695
      %v2595 = vpow.pop %v2594
      %v2596 = vmul.f32 %v2556, 1.442695
      %v2597 = vpow.pop %v2596
      %v2598 = vmul.f32 %v2557, 1.442695
      %v2599 = vpow.pop %v2598
      %v2600 = vmul.f32 %v2558, 1.442695
      %v2601 = vpow.pop %v2600
      %v2602 = vmul.f32 %v2559, 1.442695
      %v2603 = vpow.pop %v2602
      %v2604 = vmul.f32 %v2560, 1.442695
      %v2605 = vpow.pop %v2604
      %v2606 = vmul.f32 %v2561, 1.442695
      %v2607 = vpow.pop %v2606
      %v2608 = vmul.f32 %v2562, 1.442695
      %v2609 = vpow.pop %v2608
      %v2610 = vmul.f32 %v2563, 1.442695
      %v2611 = vpow.pop %v2610
      %v2612 = vmul.f32 %v2564, 1.442695
      %v2613 = vpow.pop %v2612
      %v2614 = vmul.f32 %v2565, 1.442695
      %v2615 = vpow.pop %v2614
      %v2616 = vmul.f32 %v2566, 1.442695
      %v2617 = vpow.pop %v2616
      %v2618 = vmul.f32 %v2567, 1.442695
      %v2619 = vpow.pop %v2618
      %v2620 = vmul.f32 %v2568, 1.442695
      %v2621 = vpow.pop %v2620
      %v2622 = vmul.f32 %v2569, 1.442695
      %v2623 = vpow.pop %v2622
      %v2624 = vmul.f32 %v2570, 1.442695
      %v2625 = vpow.pop %v2624
      %v2626 = vmul.f32 %v2571, 1.442695
      %v2627 = vpow.pop %v2626
      %v2628 = vmul.f32 %v2572, 1.442695
      %v2629 = vpow.pop %v2628
      %v2630 = vmul.f32 %v2573, 1.442695
      %v2631 = vpow.pop %v2630
      %v2632 = vmul.f32 %v2574, 1.442695
      %v2633 = vpow.pop %v2632
      %v2634 = vmul.f32 %v2575, 1.442695
      %v2635 = vpow.pop %v2634
      %v2636 = vmul.f32 %v2576, 1.442695
      %v2637 = vpow.pop %v2636
      %v2638 = vmul.f32 %v2577, 1.442695
      %v2639 = vpow.pop %v2638
      %v2640 = vmul.f32 %v2578, 1.442695
      %v2641 = vpow.pop %v2640
      %v2642 = vmul.f32 %v2579, 1.442695
      %v2643 = vpow.pop %v2642
      %v2644 = vadd.f32 %v2581, 1.0
      %v2645 = vadd.f32 %v2583, 1.0
      %v2646 = vadd.f32 %v2585, 1.0
      %v2647 = vadd.f32 %v2587, 1.0
      %v2648 = vadd.f32 %v2589, 1.0
      %v2649 = vadd.f32 %v2591, 1.0
      %v2650 = vadd.f32 %v2593, 1.0
      %v2651 = vadd.f32 %v2595, 1.0
      %v2652 = vadd.f32 %v2597, 1.0
      %v2653 = vadd.f32 %v2599, 1.0
      %v2654 = vadd.f32 %v2601, 1.0
      %v2655 = vadd.f32 %v2603, 1.0
      %v2656 = vadd.f32 %v2605, 1.0
      %v2657 = vadd.f32 %v2607, 1.0
      %v2658 = vadd.f32 %v2609, 1.0
      %v2659 = vadd.f32 %v2611, 1.0
      %v2660 = vadd.f32 %v2613, 1.0
      %v2661 = vadd.f32 %v2615, 1.0
      %v2662 = vadd.f32 %v2617, 1.0
      %v2663 = vadd.f32 %v2619, 1.0
      %v2664 = vadd.f32 %v2621, 1.0
      %v2665 = vadd.f32 %v2623, 1.0
      %v2666 = vadd.f32 %v2625, 1.0
      %v2667 = vadd.f32 %v2627, 1.0
      %v2668 = vadd.f32 %v2629, 1.0
      %v2669 = vadd.f32 %v2631, 1.0
      %v2670 = vadd.f32 %v2633, 1.0
      %v2671 = vadd.f32 %v2635, 1.0
      %v2672 = vadd.f32 %v2637, 1.0
      %v2673 = vadd.f32 %v2639, 1.0
      %v2674 = vadd.f32 %v2641, 1.0
      %v2675 = vadd.f32 %v2643, 1.0
      %v2676 = vrcp.pop %v2644
      %v2677 = vmul.f32 1.0, %v2676
      %v2678 = vrcp.pop %v2645
      %v2679 = vmul.f32 1.0, %v2678
      %v2680 = vrcp.pop %v2646
      %v2681 = vmul.f32 1.0, %v2680
      %v2682 = vrcp.pop %v2647
      %v2683 = vmul.f32 1.0, %v2682
      %v2684 = vrcp.pop %v2648
      %v2685 = vmul.f32 1.0, %v2684
      %v2686 = vrcp.pop %v2649
      %v2687 = vmul.f32 1.0, %v2686
      %v2688 = vrcp.pop %v2650
      %v2689 = vmul.f32 1.0, %v2688
      %v2690 = vrcp.pop %v2651
      %v2691 = vmul.f32 1.0, %v2690
      %v2692 = vrcp.pop %v2652
      %v2693 = vmul.f32 1.0, %v2692
      %v2694 = vrcp.pop %v2653
      %v2695 = vmul.f32 1.0, %v2694
      %v2696 = vrcp.pop %v2654
      %v2697 = vmul.f32 1.0, %v2696
      %v2698 = vrcp.pop %v2655
      %v2699 = vmul.f32 1.0, %v2698
      %v2700 = vrcp.pop %v2656
      %v2701 = vmul.f32 1.0, %v2700
      %v2702 = vrcp.pop %v2657
      %v2703 = vmul.f32 1.0, %v2702
      %v2704 = vrcp.pop %v2658
      %v2705 = vmul.f32 1.0, %v2704
      %v2706 = vrcp.pop %v2659
      %v2707 = vmul.f32 1.0, %v2706
      %v2708 = vrcp.pop %v2660
      %v2709 = vmul.f32 1.0, %v2708
      %v2710 = vrcp.pop %v2661
      %v2711 = vmul.f32 1.0, %v2710
      %v2712 = vrcp.pop %v2662
      %v2713 = vmul.f32 1.0, %v2712
      %v2714 = vrcp.pop %v2663
      %v2715 = vmul.f32 1.0, %v2714
      %v2716 = vrcp.pop %v2664
      %v2717 = vmul.f32 1.0, %v2716
      %v2718 = vrcp.pop %v2665
      %v2719 = vmul.f32 1.0, %v2718
      %v2720 = vrcp.pop %v2666
      %v2721 = vmul.f32 1.0, %v2720
      %v2722 = vrcp.pop %v2667
      %v2723 = vmul.f32 1.0, %v2722
      %v2724 = vrcp.pop %v2668
      %v2725 = vmul.f32 1.0, %v2724
      %v2726 = vrcp.pop %v2669
      %v2727 = vmul.f32 1.0, %v2726
      %v2728 = vrcp.pop %v2670
      %v2729 = vmul.f32 1.0, %v2728
      %v2730 = vrcp.pop %v2671
      %v2731 = vmul.f32 1.0, %v2730
      %v2732 = vrcp.pop %v2672
      %v2733 = vmul.f32 1.0, %v2732
      %v2734 = vrcp.pop %v2673
      %v2735 = vmul.f32 1.0, %v2734
      %v2736 = vrcp.pop %v2674
      %v2737 = vmul.f32 1.0, %v2736
      %v2738 = vrcp.pop %v2675
      %v2739 = vmul.f32 1.0, %v2738
      %v2740 = vmul.f32 %v2677, 2.0
      %v2741 = vmul.f32 %v2679, 2.0
      %v2742 = vmul.f32 %v2681, 2.0
      %v2743 = vmul.f32 %v2683, 2.0
      %v2744 = vmul.f32 %v2685, 2.0
      %v2745 = vmul.f32 %v2687, 2.0
      %v2746 = vmul.f32 %v2689, 2.0
      %v2747 = vmul.f32 %v2691, 2.0
      %v2748 = vmul.f32 %v2693, 2.0
      %v2749 = vmul.f32 %v2695, 2.0
      %v2750 = vmul.f32 %v2697, 2.0
      %v2751 = vmul.f32 %v2699, 2.0
      %v2752 = vmul.f32 %v2701, 2.0
      %v2753 = vmul.f32 %v2703, 2.0
      %v2754 = vmul.f32 %v2705, 2.0
      %v2755 = vmul.f32 %v2707, 2.0
      %v2756 = vmul.f32 %v2709, 2.0
      %v2757 = vmul.f32 %v2711, 2.0
      %v2758 = vmul.f32 %v2713, 2.0
      %v2759 = vmul.f32 %v2715, 2.0
      %v2760 = vmul.f32 %v2717, 2.0
      %v2761 = vmul.f32 %v2719, 2.0
      %v2762 = vmul.f32 %v2721, 2.0
      %v2763 = vmul.f32 %v2723, 2.0
      %v2764 = vmul.f32 %v2725, 2.0
      %v2765 = vmul.f32 %v2727, 2.0
      %v2766 = vmul.f32 %v2729, 2.0
      %v2767 = vmul.f32 %v2731, 2.0
      %v2768 = vmul.f32 %v2733, 2.0
      %v2769 = vmul.f32 %v2735, 2.0
      %v2770 = vmul.f32 %v2737, 2.0
      %v2771 = vmul.f32 %v2739, 2.0
      %v2772 = vsub.f32 %v2740, 1.0
      %v2773 = vsub.f32 %v2741, 1.0
      %v2774 = vsub.f32 %v2742, 1.0
      %v2775 = vsub.f32 %v2743, 1.0
      %v2776 = vsub.f32 %v2744, 1.0
      %v2777 = vsub.f32 %v2745, 1.0
      %v2778 = vsub.f32 %v2746, 1.0
      %v2779 = vsub.f32 %v2747, 1.0
      %v2780 = vsub.f32 %v2748, 1.0
      %v2781 = vsub.f32 %v2749, 1.0
      %v2782 = vsub.f32 %v2750, 1.0
      %v2783 = vsub.f32 %v2751, 1.0
      %v2784 = vsub.f32 %v2752, 1.0
      %v2785 = vsub.f32 %v2753, 1.0
      %v2786 = vsub.f32 %v2754, 1.0
      %v2787 = vsub.f32 %v2755, 1.0
      %v2788 = vsub.f32 %v2756, 1.0
      %v2789 = vsub.f32 %v2757, 1.0
      %v2790 = vsub.f32 %v2758, 1.0
      %v2791 = vsub.f32 %v2759, 1.0
      %v2792 = vsub.f32 %v2760, 1.0
      %v2793 = vsub.f32 %v2761, 1.0
      %v2794 = vsub.f32 %v2762, 1.0
      %v2795 = vsub.f32 %v2763, 1.0
      %v2796 = vsub.f32 %v2764, 1.0
      %v2797 = vsub.f32 %v2765, 1.0
      %v2798 = vsub.f32 %v2766, 1.0
      %v2799 = vsub.f32 %v2767, 1.0
      %v2800 = vsub.f32 %v2768, 1.0
      %v2801 = vsub.f32 %v2769, 1.0
      %v2802 = vsub.f32 %v2770, 1.0
      %v2803 = vsub.f32 %v2771, 1.0
      %v2804 = vmul.f32 %v2677, %v1730
      %v2805 = vmul.f32 %v2679, %v1731
      %v2806 = vmul.f32 %v2681, %v1732
      %v2807 = vmul.f32 %v2683, %v1733
      %v2808 = vmul.f32 %v2685, %v1734
      %v2809 = vmul.f32 %v2687, %v1735
      %v2810 = vmul.f32 %v2689, %v1736
      %v2811 = vmul.f32 %v2691, %v1737
      %v2812 = vmul.f32 %v2693, %v1738
      %v2813 = vmul.f32 %v2695, %v1739
      %v2814 = vmul.f32 %v2697, %v1740
      %v2815 = vmul.f32 %v2699, %v1741
      %v2816 = vmul.f32 %v2701, %v1742
      %v2817 = vmul.f32 %v2703, %v1743
      %v2818 = vmul.f32 %v2705, %v1744
      %v2819 = vmul.f32 %v2707, %v1745
      %v2820 = vmul.f32 %v2709, %v1746
      %v2821 = vmul.f32 %v2711, %v1747
      %v2822 = vmul.f32 %v2713, %v1748
      %v2823 = vmul.f32 %v2715, %v1749
      %v2824 = vmul.f32 %v2717, %v1750
      %v2825 = vmul.f32 %v2719, %v1751
      %v2826 = vmul.f32 %v2721, %v1752
      %v2827 = vmul.f32 %v2723, %v1753
      %v2828 = vmul.f32 %v2725, %v1754
      %v2829 = vmul.f32 %v2727, %v1755
      %v2830 = vmul.f32 %v2729, %v1756
      %v2831 = vmul.f32 %v2731, %v1757
      %v2832 = vmul.f32 %v2733, %v1758
      %v2833 = vmul.f32 %v2735, %v1759
      %v2834 = vmul.f32 %v2737, %v1760
      %v2835 = vmul.f32 %v2739, %v1761
      %2868 = vrot.lane.b32.xlu0 %v2772, 64
      %v2869 = vpop.permute.xlu0 %2868
      %2870 = vrot.lane.b32.xlu0 %v2773, 64
      %v2871 = vpop.permute.xlu0 %2870
      %2872 = vrot.lane.b32.xlu0 %v2774, 64
      %v2873 = vpop.permute.xlu0 %2872
      %2874 = vrot.lane.b32.xlu0 %v2775, 64
      %v2875 = vpop.permute.xlu0 %2874
      %2876 = vrot.lane.b32.xlu0 %v2776, 64
      %v2877 = vpop.permute.xlu0 %2876
      %2878 = vrot.lane.b32.xlu0 %v2777, 64
      %v2879 = vpop.permute.xlu0 %2878
      %2880 = vrot.lane.b32.xlu0 %v2778, 64
      %v2881 = vpop.permute.xlu0 %2880
      %2882 = vrot.lane.b32.xlu0 %v2779, 64
      %v2883 = vpop.permute.xlu0 %2882
      %2884 = vrot.lane.b32.xlu0 %v2780, 64
      %v2885 = vpop.permute.xlu0 %2884
      %2886 = vrot.lane.b32.xlu0 %v2781, 64
      %v2887 = vpop.permute.xlu0 %2886
      %2888 = vrot.lane.b32.xlu0 %v2782, 64
      %v2889 = vpop.permute.xlu0 %2888
      %2890 = vrot.lane.b32.xlu0 %v2783, 64
      %v2891 = vpop.permute.xlu0 %2890
      %2892 = vrot.lane.b32.xlu0 %v2784, 64
      %v2893 = vpop.permute.xlu0 %2892
      %2894 = vrot.lane.b32.xlu0 %v2785, 64
      %v2895 = vpop.permute.xlu0 %2894
      %2896 = vrot.lane.b32.xlu0 %v2786, 64
      %v2897 = vpop.permute.xlu0 %2896
      %2898 = vrot.lane.b32.xlu0 %v2787, 64
      %v2899 = vpop.permute.xlu0 %2898
      %2900 = vrot.lane.b32.xlu0 %v2788, 64
      %v2901 = vpop.permute.xlu0 %2900
      %2902 = vrot.lane.b32.xlu0 %v2789, 64
      %v2903 = vpop.permute.xlu0 %2902
      %2904 = vrot.lane.b32.xlu0 %v2790, 64
      %v2905 = vpop.permute.xlu0 %2904
      %2906 = vrot.lane.b32.xlu0 %v2791, 64
      %v2907 = vpop.permute.xlu0 %2906
      %2908 = vrot.lane.b32.xlu0 %v2792, 64
      %v2909 = vpop.permute.xlu0 %2908
      %2910 = vrot.lane.b32.xlu0 %v2793, 64
      %v2911 = vpop.permute.xlu0 %2910
      %2912 = vrot.lane.b32.xlu0 %v2794, 64
      %v2913 = vpop.permute.xlu0 %2912
      %2914 = vrot.lane.b32.xlu0 %v2795, 64
      %v2915 = vpop.permute.xlu0 %2914
      %2916 = vrot.lane.b32.xlu0 %v2796, 64
      %v2917 = vpop.permute.xlu0 %2916
      %2918 = vrot.lane.b32.xlu0 %v2797, 64
      %v2919 = vpop.permute.xlu0 %2918
      %2920 = vrot.lane.b32.xlu0 %v2798, 64
      %v2921 = vpop.permute.xlu0 %2920
      %2922 = vrot.lane.b32.xlu0 %v2799, 64
      %v2923 = vpop.permute.xlu0 %2922
      %2924 = vrot.lane.b32.xlu0 %v2800, 64
      %v2925 = vpop.permute.xlu0 %2924
      %2926 = vrot.lane.b32.xlu0 %v2801, 64
      %v2927 = vpop.permute.xlu0 %2926
      %2928 = vrot.lane.b32.xlu0 %v2802, 64
      %v2929 = vpop.permute.xlu0 %2928
      %2930 = vrot.lane.b32.xlu0 %v2803, 64
      %v2931 = vpop.permute.xlu0 %2930
      %v2964 = vmul.f32 %v2677, %v2869
      %v2965 = vmul.f32 %v2679, %v2871
      %v2966 = vmul.f32 %v2681, %v2873
      %v2967 = vmul.f32 %v2683, %v2875
      %v2968 = vmul.f32 %v2685, %v2877
      %v2969 = vmul.f32 %v2687, %v2879
      %v2970 = vmul.f32 %v2689, %v2881
      %v2971 = vmul.f32 %v2691, %v2883
      %v2972 = vmul.f32 %v2693, %v2885
      %v2973 = vmul.f32 %v2695, %v2887
      %v2974 = vmul.f32 %v2697, %v2889
      %v2975 = vmul.f32 %v2699, %v2891
      %v2976 = vmul.f32 %v2701, %v2893
      %v2977 = vmul.f32 %v2703, %v2895
      %v2978 = vmul.f32 %v2705, %v2897
      %v2979 = vmul.f32 %v2707, %v2899
      %v2980 = vmul.f32 %v2709, %v2901
      %v2981 = vmul.f32 %v2711, %v2903
      %v2982 = vmul.f32 %v2713, %v2905
      %v2983 = vmul.f32 %v2715, %v2907
      %v2984 = vmul.f32 %v2717, %v2909
      %v2985 = vmul.f32 %v2719, %v2911
      %v2986 = vmul.f32 %v2721, %v2913
      %v2987 = vmul.f32 %v2723, %v2915
      %v2988 = vmul.f32 %v2725, %v2917
      %v2989 = vmul.f32 %v2727, %v2919
      %v2990 = vmul.f32 %v2729, %v2921
      %v2991 = vmul.f32 %v2731, %v2923
      %v2992 = vmul.f32 %v2733, %v2925
      %v2993 = vmul.f32 %v2735, %v2927
      %v2994 = vmul.f32 %v2737, %v2929
      %v2995 = vmul.f32 %v2739, %v2931
      %3028 = vrot.lane.b32.xlu0 %v2964, 32
      %v3029 = vpop.permute.xlu0 %3028
      %3030 = vrot.lane.b32.xlu0 %v2965, 32
      %v3031 = vpop.permute.xlu0 %3030
      %3032 = vrot.lane.b32.xlu0 %v2966, 32
      %v3033 = vpop.permute.xlu0 %3032
      %3034 = vrot.lane.b32.xlu0 %v2967, 32
      %v3035 = vpop.permute.xlu0 %3034
      %3036 = vrot.lane.b32.xlu0 %v2968, 32
      %v3037 = vpop.permute.xlu0 %3036
      %3038 = vrot.lane.b32.xlu0 %v2969, 32
      %v3039 = vpop.permute.xlu0 %3038
      %3040 = vrot.lane.b32.xlu0 %v2970, 32
      %v3041 = vpop.permute.xlu0 %3040
      %3042 = vrot.lane.b32.xlu0 %v2971, 32
      %v3043 = vpop.permute.xlu0 %3042
      %3044 = vrot.lane.b32.xlu0 %v2972, 32
      %v3045 = vpop.permute.xlu0 %3044
      %3046 = vrot.lane.b32.xlu0 %v2973, 32
      %v3047 = vpop.permute.xlu0 %3046
      %3048 = vrot.lane.b32.xlu0 %v2974, 32
      %v3049 = vpop.permute.xlu0 %3048
      %3050 = vrot.lane.b32.xlu0 %v2975, 32
      %v3051 = vpop.permute.xlu0 %3050
      %3052 = vrot.lane.b32.xlu0 %v2976, 32
      %v3053 = vpop.permute.xlu0 %3052
      %3054 = vrot.lane.b32.xlu0 %v2977, 32
      %v3055 = vpop.permute.xlu0 %3054
      %3056 = vrot.lane.b32.xlu0 %v2978, 32
      %v3057 = vpop.permute.xlu0 %3056
      %3058 = vrot.lane.b32.xlu0 %v2979, 32
      %v3059 = vpop.permute.xlu0 %3058
      %3060 = vrot.lane.b32.xlu0 %v2980, 32
      %v3061 = vpop.permute.xlu0 %3060
      %3062 = vrot.lane.b32.xlu0 %v2981, 32
      %v3063 = vpop.permute.xlu0 %3062
      %3064 = vrot.lane.b32.xlu0 %v2982, 32
      %v3065 = vpop.permute.xlu0 %3064
      %3066 = vrot.lane.b32.xlu0 %v2983, 32
      %v3067 = vpop.permute.xlu0 %3066
      %3068 = vrot.lane.b32.xlu0 %v2984, 32
      %v3069 = vpop.permute.xlu0 %3068
      %3070 = vrot.lane.b32.xlu0 %v2985, 32
      %v3071 = vpop.permute.xlu0 %3070
      %3072 = vrot.lane.b32.xlu0 %v2986, 32
      %v3073 = vpop.permute.xlu0 %3072
      %3074 = vrot.lane.b32.xlu0 %v2987, 32
      %v3075 = vpop.permute.xlu0 %3074
      %3076 = vrot.lane.b32.xlu0 %v2988, 32
      %v3077 = vpop.permute.xlu0 %3076
      %3078 = vrot.lane.b32.xlu0 %v2989, 32
      %v3079 = vpop.permute.xlu0 %3078
      %3080 = vrot.lane.b32.xlu0 %v2990, 32
      %v3081 = vpop.permute.xlu0 %3080
      %3082 = vrot.lane.b32.xlu0 %v2991, 32
      %v3083 = vpop.permute.xlu0 %3082
      %3084 = vrot.lane.b32.xlu0 %v2992, 32
      %v3085 = vpop.permute.xlu0 %3084
      %3086 = vrot.lane.b32.xlu0 %v2993, 32
      %v3087 = vpop.permute.xlu0 %3086
      %3088 = vrot.lane.b32.xlu0 %v2994, 32
      %v3089 = vpop.permute.xlu0 %3088
      %3090 = vrot.lane.b32.xlu0 %v2995, 32
      %v3091 = vpop.permute.xlu0 %3090
      %v3124 = vadd.f32 %v2804, %v3029
      %v3125 = vadd.f32 %v2805, %v3031
      %v3126 = vadd.f32 %v2806, %v3033
      %v3127 = vadd.f32 %v2807, %v3035
      %v3128 = vadd.f32 %v2808, %v3037
      %v3129 = vadd.f32 %v2809, %v3039
      %v3130 = vadd.f32 %v2810, %v3041
      %v3131 = vadd.f32 %v2811, %v3043
      %v3132 = vadd.f32 %v2812, %v3045
      %v3133 = vadd.f32 %v2813, %v3047
      %v3134 = vadd.f32 %v2814, %v3049
      %v3135 = vadd.f32 %v2815, %v3051
      %v3136 = vadd.f32 %v2816, %v3053
      %v3137 = vadd.f32 %v2817, %v3055
      %v3138 = vadd.f32 %v2818, %v3057
      %v3139 = vadd.f32 %v2819, %v3059
      %v3140 = vadd.f32 %v2820, %v3061
      %v3141 = vadd.f32 %v2821, %v3063
      %v3142 = vadd.f32 %v2822, %v3065
      %v3143 = vadd.f32 %v2823, %v3067
      %v3144 = vadd.f32 %v2824, %v3069
      %v3145 = vadd.f32 %v2825, %v3071
      %v3146 = vadd.f32 %v2826, %v3073
      %v3147 = vadd.f32 %v2827, %v3075
      %v3148 = vadd.f32 %v2828, %v3077
      %v3149 = vadd.f32 %v2829, %v3079
      %v3150 = vadd.f32 %v2830, %v3081
      %v3151 = vadd.f32 %v2831, %v3083
      %v3152 = vadd.f32 %v2832, %v3085
      %v3153 = vadd.f32 %v2833, %v3087
      %v3154 = vadd.f32 %v2834, %v3089
      %v3155 = vadd.f32 %v2835, %v3091
      %v3156 = vtanh.pop %v3124
      %v3157 = vtanh.pop %v3125
      %v3158 = vtanh.pop %v3126
      %v3159 = vtanh.pop %v3127
      %v3160 = vtanh.pop %v3128
      %v3161 = vtanh.pop %v3129
      %v3162 = vtanh.pop %v3130
      %v3163 = vtanh.pop %v3131
      %v3164 = vtanh.pop %v3132
      %v3165 = vtanh.pop %v3133
      %v3166 = vtanh.pop %v3134
      %v3167 = vtanh.pop %v3135
      %v3168 = vtanh.pop %v3136
      %v3169 = vtanh.pop %v3137
      %v3170 = vtanh.pop %v3138
      %v3171 = vtanh.pop %v3139
      %v3172 = vtanh.pop %v3140
      %v3173 = vtanh.pop %v3141
      %v3174 = vtanh.pop %v3142
      %v3175 = vtanh.pop %v3143
      %v3176 = vtanh.pop %v3144
      %v3177 = vtanh.pop %v3145
      %v3178 = vtanh.pop %v3146
      %v3179 = vtanh.pop %v3147
      %v3180 = vtanh.pop %v3148
      %v3181 = vtanh.pop %v3149
      %v3182 = vtanh.pop %v3150
      %v3183 = vtanh.pop %v3151
      %v3184 = vtanh.pop %v3152
      %v3185 = vtanh.pop %v3153
      %v3186 = vtanh.pop %v3154
      %v3187 = vtanh.pop %v3155
      %3220 = vrot.lane.b32.xlu0 %v3156, 64
      %v3221 = vpop.permute.xlu0 %3220
      %3222 = vrot.lane.b32.xlu0 %v3157, 64
      %v3223 = vpop.permute.xlu0 %3222
      %3224 = vrot.lane.b32.xlu0 %v3158, 64
      %v3225 = vpop.permute.xlu0 %3224
      %3226 = vrot.lane.b32.xlu0 %v3159, 64
      %v3227 = vpop.permute.xlu0 %3226
      %3228 = vrot.lane.b32.xlu0 %v3160, 64
      %v3229 = vpop.permute.xlu0 %3228
      %3230 = vrot.lane.b32.xlu0 %v3161, 64
      %v3231 = vpop.permute.xlu0 %3230
      %3232 = vrot.lane.b32.xlu0 %v3162, 64
      %v3233 = vpop.permute.xlu0 %3232
      %3234 = vrot.lane.b32.xlu0 %v3163, 64
      %v3235 = vpop.permute.xlu0 %3234
      %3236 = vrot.lane.b32.xlu0 %v3164, 64
      %v3237 = vpop.permute.xlu0 %3236
      %3238 = vrot.lane.b32.xlu0 %v3165, 64
      %v3239 = vpop.permute.xlu0 %3238
      %3240 = vrot.lane.b32.xlu0 %v3166, 64
      %v3241 = vpop.permute.xlu0 %3240
      %3242 = vrot.lane.b32.xlu0 %v3167, 64
      %v3243 = vpop.permute.xlu0 %3242
      %3244 = vrot.lane.b32.xlu0 %v3168, 64
      %v3245 = vpop.permute.xlu0 %3244
      %3246 = vrot.lane.b32.xlu0 %v3169, 64
      %v3247 = vpop.permute.xlu0 %3246
      %3248 = vrot.lane.b32.xlu0 %v3170, 64
      %v3249 = vpop.permute.xlu0 %3248
      %3250 = vrot.lane.b32.xlu0 %v3171, 64
      %v3251 = vpop.permute.xlu0 %3250
      %3252 = vrot.lane.b32.xlu0 %v3172, 64
      %v3253 = vpop.permute.xlu0 %3252
      %3254 = vrot.lane.b32.xlu0 %v3173, 64
      %v3255 = vpop.permute.xlu0 %3254
      %3256 = vrot.lane.b32.xlu0 %v3174, 64
      %v3257 = vpop.permute.xlu0 %3256
      %3258 = vrot.lane.b32.xlu0 %v3175, 64
      %v3259 = vpop.permute.xlu0 %3258
      %3260 = vrot.lane.b32.xlu0 %v3176, 64
      %v3261 = vpop.permute.xlu0 %3260
      %3262 = vrot.lane.b32.xlu0 %v3177, 64
      %v3263 = vpop.permute.xlu0 %3262
      %3264 = vrot.lane.b32.xlu0 %v3178, 64
      %v3265 = vpop.permute.xlu0 %3264
      %3266 = vrot.lane.b32.xlu0 %v3179, 64
      %v3267 = vpop.permute.xlu0 %3266
      %3268 = vrot.lane.b32.xlu0 %v3180, 64
      %v3269 = vpop.permute.xlu0 %3268
      %3270 = vrot.lane.b32.xlu0 %v3181, 64
      %v3271 = vpop.permute.xlu0 %3270
      %3272 = vrot.lane.b32.xlu0 %v3182, 64
      %v3273 = vpop.permute.xlu0 %3272
      %3274 = vrot.lane.b32.xlu0 %v3183, 64
      %v3275 = vpop.permute.xlu0 %3274
      %3276 = vrot.lane.b32.xlu0 %v3184, 64
      %v3277 = vpop.permute.xlu0 %3276
      %3278 = vrot.lane.b32.xlu0 %v3185, 64
      %v3279 = vpop.permute.xlu0 %3278
      %3280 = vrot.lane.b32.xlu0 %v3186, 64
      %v3281 = vpop.permute.xlu0 %3280
      %3282 = vrot.lane.b32.xlu0 %v3187, 64
      %v3283 = vpop.permute.xlu0 %3282
      %v3316 = vmul.f32 %v2677, %v3221
      %v3317 = vmul.f32 %v2679, %v3223
      %v3318 = vmul.f32 %v2681, %v3225
      %v3319 = vmul.f32 %v2683, %v3227
      %v3320 = vmul.f32 %v2685, %v3229
      %v3321 = vmul.f32 %v2687, %v3231
      %v3322 = vmul.f32 %v2689, %v3233
      %v3323 = vmul.f32 %v2691, %v3235
      %v3324 = vmul.f32 %v2693, %v3237
      %v3325 = vmul.f32 %v2695, %v3239
      %v3326 = vmul.f32 %v2697, %v3241
      %v3327 = vmul.f32 %v2699, %v3243
      %v3328 = vmul.f32 %v2701, %v3245
      %v3329 = vmul.f32 %v2703, %v3247
      %v3330 = vmul.f32 %v2705, %v3249
      %v3331 = vmul.f32 %v2707, %v3251
      %v3332 = vmul.f32 %v2709, %v3253
      %v3333 = vmul.f32 %v2711, %v3255
      %v3334 = vmul.f32 %v2713, %v3257
      %v3335 = vmul.f32 %v2715, %v3259
      %v3336 = vmul.f32 %v2717, %v3261
      %v3337 = vmul.f32 %v2719, %v3263
      %v3338 = vmul.f32 %v2721, %v3265
      %v3339 = vmul.f32 %v2723, %v3267
      %v3340 = vmul.f32 %v2725, %v3269
      %v3341 = vmul.f32 %v2727, %v3271
      %v3342 = vmul.f32 %v2729, %v3273
      %v3343 = vmul.f32 %v2731, %v3275
      %v3344 = vmul.f32 %v2733, %v3277
      %v3345 = vmul.f32 %v2735, %v3279
      %v3346 = vmul.f32 %v2737, %v3281
      %v3347 = vmul.f32 %v2739, %v3283
      %v3348 = vmul.f32 %v3316, 0.01
      %v3349 = vmul.f32 %v3317, 0.01
      %v3350 = vmul.f32 %v3318, 0.01
      %v3351 = vmul.f32 %v3319, 0.01
      %v3352 = vmul.f32 %v3320, 0.01
      %v3353 = vmul.f32 %v3321, 0.01
      %v3354 = vmul.f32 %v3322, 0.01
      %v3355 = vmul.f32 %v3323, 0.01
      %v3356 = vmul.f32 %v3324, 0.01
      %v3357 = vmul.f32 %v3325, 0.01
      %v3358 = vmul.f32 %v3326, 0.01
      %v3359 = vmul.f32 %v3327, 0.01
      %v3360 = vmul.f32 %v3328, 0.01
      %v3361 = vmul.f32 %v3329, 0.01
      %v3362 = vmul.f32 %v3330, 0.01
      %v3363 = vmul.f32 %v3331, 0.01
      %v3364 = vmul.f32 %v3332, 0.01
      %v3365 = vmul.f32 %v3333, 0.01
      %v3366 = vmul.f32 %v3334, 0.01
      %v3367 = vmul.f32 %v3335, 0.01
      %v3368 = vmul.f32 %v3336, 0.01
      %v3369 = vmul.f32 %v3337, 0.01
      %v3370 = vmul.f32 %v3338, 0.01
      %v3371 = vmul.f32 %v3339, 0.01
      %v3372 = vmul.f32 %v3340, 0.01
      %v3373 = vmul.f32 %v3341, 0.01
      %v3374 = vmul.f32 %v3342, 0.01
      %v3375 = vmul.f32 %v3343, 0.01
      %v3376 = vmul.f32 %v3344, 0.01
      %v3377 = vmul.f32 %v3345, 0.01
      %v3378 = vmul.f32 %v3346, 0.01
      %v3379 = vmul.f32 %v3347, 0.01
      %v3380 = vmax.f32 %v3316, %v3348
      %v3381 = vmax.f32 %v3317, %v3349
      %v3382 = vmax.f32 %v3318, %v3350
      %v3383 = vmax.f32 %v3319, %v3351
      %v3384 = vmax.f32 %v3320, %v3352
      %v3385 = vmax.f32 %v3321, %v3353
      %v3386 = vmax.f32 %v3322, %v3354
      %v3387 = vmax.f32 %v3323, %v3355
      %v3388 = vmax.f32 %v3324, %v3356
      %v3389 = vmax.f32 %v3325, %v3357
      %v3390 = vmax.f32 %v3326, %v3358
      %v3391 = vmax.f32 %v3327, %v3359
      %v3392 = vmax.f32 %v3328, %v3360
      %v3393 = vmax.f32 %v3329, %v3361
      %v3394 = vmax.f32 %v3330, %v3362
      %v3395 = vmax.f32 %v3331, %v3363
      %v3396 = vmax.f32 %v3332, %v3364
      %v3397 = vmax.f32 %v3333, %v3365
      %v3398 = vmax.f32 %v3334, %v3366
      %v3399 = vmax.f32 %v3335, %v3367
      %v3400 = vmax.f32 %v3336, %v3368
      %v3401 = vmax.f32 %v3337, %v3369
      %v3402 = vmax.f32 %v3338, %v3370
      %v3403 = vmax.f32 %v3339, %v3371
      %v3404 = vmax.f32 %v3340, %v3372
      %v3405 = vmax.f32 %v3341, %v3373
      %v3406 = vmax.f32 %v3342, %v3374
      %v3407 = vmax.f32 %v3343, %v3375
      %v3408 = vmax.f32 %v3344, %v3376
      %v3409 = vmax.f32 %v3345, %v3377
      %v3410 = vmax.f32 %v3346, %v3378
      %v3411 = vmax.f32 %v3347, %v3379
      %v3412 = vpack.c.bf16 %v3381, %v3380
      %v3413 = vpack.c.bf16 %v3383, %v3382
      %v3414 = vpack.c.bf16 %v3385, %v3384
      %v3415 = vpack.c.bf16 %v3387, %v3386
      %v3416 = vpack.c.bf16 %v3389, %v3388
      %v3417 = vpack.c.bf16 %v3391, %v3390
      %v3418 = vpack.c.bf16 %v3393, %v3392
      %v3419 = vpack.c.bf16 %v3395, %v3394
      %v3420 = vpack.c.bf16 %v3397, %v3396
      %v3421 = vpack.c.bf16 %v3399, %v3398
      %v3422 = vpack.c.bf16 %v3401, %v3400
      %v3423 = vpack.c.bf16 %v3403, %v3402
      %v3424 = vpack.c.bf16 %v3405, %v3404
      %v3425 = vpack.c.bf16 %v3407, %v3406
      %v3426 = vpack.c.bf16 %v3409, %v3408
      %v3427 = vpack.c.bf16 %v3411, %v3410
      %v3444 = vunpack.c.l.b16 %v3412
      %v3445 = vunpack.c.h.b16 %v3412
      %v3446 = vunpack.c.l.b16 %v3413
      %v3447 = vunpack.c.h.b16 %v3413
      %v3448 = vunpack.c.l.b16 %v3414
      %v3449 = vunpack.c.h.b16 %v3414
      %v3450 = vunpack.c.l.b16 %v3415
      %v3451 = vunpack.c.h.b16 %v3415
      %v3452 = vunpack.c.l.b16 %v3416
      %v3453 = vunpack.c.h.b16 %v3416
      %v3454 = vunpack.c.l.b16 %v3417
      %v3455 = vunpack.c.h.b16 %v3417
      %v3456 = vunpack.c.l.b16 %v3418
      %v3457 = vunpack.c.h.b16 %v3418
      %v3458 = vunpack.c.l.b16 %v3419
      %v3459 = vunpack.c.h.b16 %v3419
      %v3460 = vunpack.c.l.b16 %v3420
      %v3461 = vunpack.c.h.b16 %v3420
      %v3462 = vunpack.c.l.b16 %v3421
      %v3463 = vunpack.c.h.b16 %v3421
      %v3464 = vunpack.c.l.b16 %v3422
      %v3465 = vunpack.c.h.b16 %v3422
      %v3466 = vunpack.c.l.b16 %v3423
      %v3467 = vunpack.c.h.b16 %v3423
      %v3468 = vunpack.c.l.b16 %v3424
      %v3469 = vunpack.c.h.b16 %v3424
      %v3470 = vunpack.c.l.b16 %v3425
      %v3471 = vunpack.c.h.b16 %v3425
      %v3472 = vunpack.c.l.b16 %v3426
      %v3473 = vunpack.c.h.b16 %v3426
      %v3474 = vunpack.c.l.b16 %v3427
      %v3475 = vunpack.c.h.b16 %v3427
      %v3476 = vpack.c.b16 %v3444, %v3444
      %v3477 = vpack.c.b16 %v3445, %v3445
      %v3478 = vpack.c.b16 %v3446, %v3446
      %v3479 = vpack.c.b16 %v3447, %v3447
      %v3480 = vpack.c.b16 %v3448, %v3448
      %v3481 = vpack.c.b16 %v3449, %v3449
      %v3482 = vpack.c.b16 %v3450, %v3450
      %v3483 = vpack.c.b16 %v3451, %v3451
      %v3484 = vpack.c.b16 %v3452, %v3452
      %v3485 = vpack.c.b16 %v3453, %v3453
      %v3486 = vpack.c.b16 %v3454, %v3454
      %v3487 = vpack.c.b16 %v3455, %v3455
      %v3488 = vpack.c.b16 %v3456, %v3456
      %v3489 = vpack.c.b16 %v3457, %v3457
      %v3490 = vpack.c.b16 %v3458, %v3458
      %v3491 = vpack.c.b16 %v3459, %v3459
      %v3492 = vpack.c.b16 %v3460, %v3460
      %v3493 = vpack.c.b16 %v3461, %v3461
      %v3494 = vpack.c.b16 %v3462, %v3462
      %v3495 = vpack.c.b16 %v3463, %v3463
      %v3496 = vpack.c.b16 %v3464, %v3464
      %v3497 = vpack.c.b16 %v3465, %v3465
      %v3498 = vpack.c.b16 %v3466, %v3466
      %v3499 = vpack.c.b16 %v3467, %v3467
      %v3500 = vpack.c.b16 %v3468, %v3468
      %v3501 = vpack.c.b16 %v3469, %v3469
      %v3502 = vpack.c.b16 %v3470, %v3470
      %v3503 = vpack.c.b16 %v3471, %v3471
      %v3504 = vpack.c.b16 %v3472, %v3472
      %v3505 = vpack.c.b16 %v3473, %v3473
      %v3506 = vpack.c.b16 %v3474, %v3474
      %v3507 = vpack.c.b16 %v3475, %v3475
      %3508 = vrot.lane.b32.xlu0 %v3476, 64
      %v3509 = vpop.permute.xlu0 %3508
      %3510 = vrot.lane.b32.xlu0 %v3477, 64
      %v3511 = vpop.permute.xlu0 %3510
      %3512 = vrot.lane.b32.xlu0 %v3478, 64
      %v3513 = vpop.permute.xlu0 %3512
      %3514 = vrot.lane.b32.xlu0 %v3479, 64
      %v3515 = vpop.permute.xlu0 %3514
      %3516 = vrot.lane.b32.xlu0 %v3480, 64
      %v3517 = vpop.permute.xlu0 %3516
      %3518 = vrot.lane.b32.xlu0 %v3481, 64
      %v3519 = vpop.permute.xlu0 %3518
      %3520 = vrot.lane.b32.xlu0 %v3482, 64
      %v3521 = vpop.permute.xlu0 %3520
      %3522 = vrot.lane.b32.xlu0 %v3483, 64
      %v3523 = vpop.permute.xlu0 %3522
      %3524 = vrot.lane.b32.xlu0 %v3484, 64
      %v3525 = vpop.permute.xlu0 %3524
      %3526 = vrot.lane.b32.xlu0 %v3485, 64
      %v3527 = vpop.permute.xlu0 %3526
      %3528 = vrot.lane.b32.xlu0 %v3486, 64
      %v3529 = vpop.permute.xlu0 %3528
      %3530 = vrot.lane.b32.xlu0 %v3487, 64
      %v3531 = vpop.permute.xlu0 %3530
      %3532 = vrot.lane.b32.xlu0 %v3488, 64
      %v3533 = vpop.permute.xlu0 %3532
      %3534 = vrot.lane.b32.xlu0 %v3489, 64
      %v3535 = vpop.permute.xlu0 %3534
      %3536 = vrot.lane.b32.xlu0 %v3490, 64
      %v3537 = vpop.permute.xlu0 %3536
      %3538 = vrot.lane.b32.xlu0 %v3491, 64
      %v3539 = vpop.permute.xlu0 %3538
      %3540 = vrot.lane.b32.xlu0 %v3492, 64
      %v3541 = vpop.permute.xlu0 %3540
      %3542 = vrot.lane.b32.xlu0 %v3493, 64
      %v3543 = vpop.permute.xlu0 %3542
      %3544 = vrot.lane.b32.xlu0 %v3494, 64
      %v3545 = vpop.permute.xlu0 %3544
      %3546 = vrot.lane.b32.xlu0 %v3495, 64
      %v3547 = vpop.permute.xlu0 %3546
      %3548 = vrot.lane.b32.xlu0 %v3496, 64
      %v3549 = vpop.permute.xlu0 %3548
      %3550 = vrot.lane.b32.xlu0 %v3497, 64
      %v3551 = vpop.permute.xlu0 %3550
      %3552 = vrot.lane.b32.xlu0 %v3498, 64
      %v3553 = vpop.permute.xlu0 %3552
      %3554 = vrot.lane.b32.xlu0 %v3499, 64
      %v3555 = vpop.permute.xlu0 %3554
      %3556 = vrot.lane.b32.xlu0 %v3500, 64
      %v3557 = vpop.permute.xlu0 %3556
      %3558 = vrot.lane.b32.xlu0 %v3501, 64
      %v3559 = vpop.permute.xlu0 %3558
      %3560 = vrot.lane.b32.xlu0 %v3502, 64
      %v3561 = vpop.permute.xlu0 %3560
      %3562 = vrot.lane.b32.xlu0 %v3503, 64
      %v3563 = vpop.permute.xlu0 %3562
      %3564 = vrot.lane.b32.xlu0 %v3504, 64
      %v3565 = vpop.permute.xlu0 %3564
      %3566 = vrot.lane.b32.xlu0 %v3505, 64
      %v3567 = vpop.permute.xlu0 %3566
      %3568 = vrot.lane.b32.xlu0 %v3506, 64
      %v3569 = vpop.permute.xlu0 %3568
      %3570 = vrot.lane.b32.xlu0 %v3507, 64
      %v3571 = vpop.permute.xlu0 %3570
      %vm3604 = vcmask 519424
      %3605 = vst.msk [vmem:[#allocation2] sm:$0xf] %vm3604, %v3509
      %3606 = vst.msk [vmem:[#allocation2 + $0x4] sm:$0xf] %vm3604, %v3511
      %3607 = vst.msk [vmem:[#allocation2 + $0x8] sm:$0xf] %vm3604, %v3513
      %3608 = vst.msk [vmem:[#allocation2 + $0xc] sm:$0xf] %vm3604, %v3515
      %3609 = vst.msk [vmem:[#allocation2 + $0x10] sm:$0xf] %vm3604, %v3517
      %3610 = vst.msk [vmem:[#allocation2 + $0x14] sm:$0xf] %vm3604, %v3519
      %3611 = vst.msk [vmem:[#allocation2 + $0x18] sm:$0xf] %vm3604, %v3521
      %3612 = vst.msk [vmem:[#allocation2 + $0x1c] sm:$0xf] %vm3604, %v3523
      %3613 = vst.msk [vmem:[#allocation2 + $0x20] sm:$0xf] %vm3604, %v3525
      %3614 = vst.msk [vmem:[#allocation2 + $0x24] sm:$0xf] %vm3604, %v3527
      %3615 = vst.msk [vmem:[#allocation2 + $0x28] sm:$0xf] %vm3604, %v3529
      %3616 = vst.msk [vmem:[#allocation2 + $0x2c] sm:$0xf] %vm3604, %v3531
      %3617 = vst.msk [vmem:[#allocation2 + $0x30] sm:$0xf] %vm3604, %v3533
      %3618 = vst.msk [vmem:[#allocation2 + $0x34] sm:$0xf] %vm3604, %v3535
      %3619 = vst.msk [vmem:[#allocation2 + $0x38] sm:$0xf] %vm3604, %v3537
      %3620 = vst.msk [vmem:[#allocation2 + $0x3c] sm:$0xf] %vm3604, %v3539
      %3621 = vst.msk [vmem:[#allocation2 + $0x40] sm:$0xf] %vm3604, %v3541
      %3622 = vst.msk [vmem:[#allocation2 + $0x44] sm:$0xf] %vm3604, %v3543
      %3623 = vst.msk [vmem:[#allocation2 + $0x48] sm:$0xf] %vm3604, %v3545
      %3624 = vst.msk [vmem:[#allocation2 + $0x4c] sm:$0xf] %vm3604, %v3547
      %3625 = vst.msk [vmem:[#allocation2 + $0x50] sm:$0xf] %vm3604, %v3549
      %3626 = vst.msk [vmem:[#allocation2 + $0x54] sm:$0xf] %vm3604, %v3551
      %3627 = vst.msk [vmem:[#allocation2 + $0x58] sm:$0xf] %vm3604, %v3553
      %3628 = vst.msk [vmem:[#allocation2 + $0x5c] sm:$0xf] %vm3604, %v3555
      %3629 = vst.msk [vmem:[#allocation2 + $0x60] sm:$0xf] %vm3604, %v3557
      %3630 = vst.msk [vmem:[#allocation2 + $0x64] sm:$0xf] %vm3604, %v3559
      %3631 = vst.msk [vmem:[#allocation2 + $0x68] sm:$0xf] %vm3604, %v3561
      %3632 = vst.msk [vmem:[#allocation2 + $0x6c] sm:$0xf] %vm3604, %v3563
      %3633 = vst.msk [vmem:[#allocation2 + $0x70] sm:$0xf] %vm3604, %v3565
      %3634 = vst.msk [vmem:[#allocation2 + $0x74] sm:$0xf] %vm3604, %v3567
      %3635 = vst.msk [vmem:[#allocation2 + $0x78] sm:$0xf] %vm3604, %v3569
      %3636 = vst.msk [vmem:[#allocation2 + $0x7c] sm:$0xf] %vm3604, %v3571
      %v3637 = vpack.c.bf16 %v3317, %v3316
      %v3638 = vpack.c.bf16 %v3319, %v3318
      %v3639 = vpack.c.bf16 %v3321, %v3320
      %v3640 = vpack.c.bf16 %v3323, %v3322
      %v3641 = vpack.c.bf16 %v3325, %v3324
      %v3642 = vpack.c.bf16 %v3327, %v3326
      %v3643 = vpack.c.bf16 %v3329, %v3328
      %v3644 = vpack.c.bf16 %v3331, %v3330
      %v3645 = vpack.c.bf16 %v3333, %v3332
      %v3646 = vpack.c.bf16 %v3335, %v3334
      %v3647 = vpack.c.bf16 %v3337, %v3336
      %v3648 = vpack.c.bf16 %v3339, %v3338
      %v3649 = vpack.c.bf16 %v3341, %v3340
      %v3650 = vpack.c.bf16 %v3343, %v3342
      %v3651 = vpack.c.bf16 %v3345, %v3344
      %v3652 = vpack.c.bf16 %v3347, %v3346
      %3669 = vrot.lane.b32.xlu0 %v3637, 32
      %v3670 = vpop.permute.xlu0 %3669
      %3671 = vrot.lane.b32.xlu0 %v3638, 32
      %v3672 = vpop.permute.xlu0 %3671
      %3673 = vrot.lane.b32.xlu0 %v3639, 32
      %v3674 = vpop.permute.xlu0 %3673
      %3675 = vrot.lane.b32.xlu0 %v3640, 32
      %v3676 = vpop.permute.xlu0 %3675
      %3677 = vrot.lane.b32.xlu0 %v3641, 32
      %v3678 = vpop.permute.xlu0 %3677
      %3679 = vrot.lane.b32.xlu0 %v3642, 32
      %v3680 = vpop.permute.xlu0 %3679
      %3681 = vrot.lane.b32.xlu0 %v3643, 32
      %v3682 = vpop.permute.xlu0 %3681
      %3683 = vrot.lane.b32.xlu0 %v3644, 32
      %v3684 = vpop.permute.xlu0 %3683
      %3685 = vrot.lane.b32.xlu0 %v3645, 32
      %v3686 = vpop.permute.xlu0 %3685
      %3687 = vrot.lane.b32.xlu0 %v3646, 32
      %v3688 = vpop.permute.xlu0 %3687
      %3689 = vrot.lane.b32.xlu0 %v3647, 32
      %v3690 = vpop.permute.xlu0 %3689
      %3691 = vrot.lane.b32.xlu0 %v3648, 32
      %v3692 = vpop.permute.xlu0 %3691
      %3693 = vrot.lane.b32.xlu0 %v3649, 32
      %v3694 = vpop.permute.xlu0 %3693
      %3695 = vrot.lane.b32.xlu0 %v3650, 32
      %v3696 = vpop.permute.xlu0 %3695
      %3697 = vrot.lane.b32.xlu0 %v3651, 32
      %v3698 = vpop.permute.xlu0 %3697
      %3699 = vrot.lane.b32.xlu0 %v3652, 32
      %v3700 = vpop.permute.xlu0 %3699
      %v3702 = vsel %vm784, %v3670, 0
      %v3705 = vsel %vm784, %v3672, 0
      %v3708 = vsel %vm784, %v3674, 0
      %v3711 = vsel %vm784, %v3676, 0
      %v3714 = vsel %vm784, %v3678, 0
      %v3717 = vsel %vm784, %v3680, 0
      %v3720 = vsel %vm784, %v3682, 0
      %v3723 = vsel %vm784, %v3684, 0
      %v3726 = vsel %vm784, %v3686, 0
      %v3729 = vsel %vm784, %v3688, 0
      %v3732 = vsel %vm784, %v3690, 0
      %v3735 = vsel %vm784, %v3692, 0
      %v3738 = vsel %vm784, %v3694, 0
      %v3741 = vsel %vm784, %v3696, 0
      %v3744 = vsel %vm784, %v3698, 0
      %v3747 = vsel %vm784, %v3700, 0
      %3749 = vmatprep.subr.bf16.mxu0 0
      %3750 = vmatpush1.bf16.msra.mxu0 0
      %3751 = vmatprep.subr.bf16.mxu0 0
      %3752 = vmatpush1.bf16.msra.mxu0 0
      %3753 = vmatprep.subr.bf16.mxu0 0
      %3754 = vmatpush1.bf16.msra.mxu0 0
      %3755 = vmatprep.subr.bf16.mxu0 0
      %3756 = vmatpush1.bf16.msra.mxu0 0
      %3757 = vmatprep.subr.bf16.mxu0 0
      %3758 = vmatpush1.bf16.msra.mxu0 0
      %3759 = vmatprep.subr.bf16.mxu0 0
      %3760 = vmatpush1.bf16.msra.mxu0 0
      %3761 = vmatprep.subr.bf16.mxu0 0
      %3762 = vmatpush1.bf16.msra.mxu0 %v781
      %3763 = vmatprep.subr.bf16.mxu0 0
      %3764 = vmatpush1.bf16.msra.mxu0 %v780
      %3765 = vmatprep.subr.bf16.mxu0 0
      %3766 = vmatpush2.bf16.msra.mxu0 0
      %3767 = vmatprep.subr.bf16.mxu0 0
      %3768 = vmatpush2.bf16.msra.mxu0 0
      %3769 = vmatprep.subr.bf16.mxu0 0
      %3770 = vmatpush2.bf16.msra.mxu0 0
      %3771 = vmatprep.subr.bf16.mxu0 0
      %3772 = vmatpush2.bf16.msra.mxu0 0
      %3773 = vmatprep.subr.bf16.mxu0 0
      %3774 = vmatpush2.bf16.msra.mxu0 0
      %3775 = vmatprep.subr.bf16.mxu0 0
      %3776 = vmatpush2.bf16.msra.mxu0 0
      %3777 = vmatprep.subr.bf16.mxu0 0
      %3778 = vmatpush2.bf16.msra.mxu0 0
      %3779 = vmatprep.subr.bf16.mxu0 0
      %3780 = vmatpush2.bf16.msra.mxu0 0
      %3781 = vmatprep.mubr.bf16.mxu0 0
      %3782 = vmatmul.mubr.bf16.gmra.mxu0 %v3702
      %v3783 = vpop.f32.mrf.mxu0
      %v3784 = vadd.f32 0.0, %v3783
      %v3785 = vpop.f32.mrf.mxu0
      %v3786 = vpop.f32.mrf.mxu0
      %v3787 = vadd.f32 0.0, %v3786
      %v3788 = vpop.f32.mrf.mxu0
      %3789 = vmatprep.mubr.bf16.mxu0 0
      %3790 = vmatmul.mubr.bf16.gmra.mxu0 %v3705
      %v3791 = vpop.f32.mrf.mxu0
      %v3792 = vadd.f32 0.0, %v3791
      %v3793 = vpop.f32.mrf.mxu0
      %v3794 = vpop.f32.mrf.mxu0
      %v3795 = vadd.f32 0.0, %v3794
      %v3796 = vpop.f32.mrf.mxu0
      %3797 = vmatprep.mubr.bf16.mxu0 0
      %3798 = vmatmul.mubr.bf16.gmra.mxu0 %v3708
      %v3799 = vpop.f32.mrf.mxu0
      %v3800 = vadd.f32 0.0, %v3799
      %v3801 = vpop.f32.mrf.mxu0
      %v3802 = vpop.f32.mrf.mxu0
      %v3803 = vadd.f32 0.0, %v3802
      %v3804 = vpop.f32.mrf.mxu0
      %3805 = vmatprep.mubr.bf16.mxu0 0
      %3806 = vmatmul.mubr.bf16.gmra.mxu0 %v3711
      %v3807 = vpop.f32.mrf.mxu0
      %v3808 = vadd.f32 0.0, %v3807
      %v3809 = vpop.f32.mrf.mxu0
      %v3810 = vpop.f32.mrf.mxu0
      %v3811 = vadd.f32 0.0, %v3810
      %v3812 = vpop.f32.mrf.mxu0
      %3813 = vmatprep.mubr.bf16.mxu0 0
      %3814 = vmatmul.mubr.bf16.gmra.mxu0 %v3714
      %v3815 = vpop.f32.mrf.mxu0
      %v3816 = vadd.f32 0.0, %v3815
      %v3817 = vpop.f32.mrf.mxu0
      %v3818 = vpop.f32.mrf.mxu0
      %v3819 = vadd.f32 0.0, %v3818
      %v3820 = vpop.f32.mrf.mxu0
      %3821 = vmatprep.mubr.bf16.mxu0 0
      %3822 = vmatmul.mubr.bf16.gmra.mxu0 %v3717
      %v3823 = vpop.f32.mrf.mxu0
      %v3824 = vadd.f32 0.0, %v3823
      %v3825 = vpop.f32.mrf.mxu0
      %v3826 = vpop.f32.mrf.mxu0
      %v3827 = vadd.f32 0.0, %v3826
      %v3828 = vpop.f32.mrf.mxu0
      %3829 = vmatprep.mubr.bf16.mxu0 0
      %3830 = vmatmul.mubr.bf16.gmra.mxu0 %v3720
      %v3831 = vpop.f32.mrf.mxu0
      %v3832 = vadd.f32 0.0, %v3831
      %v3833 = vpop.f32.mrf.mxu0
      %v3834 = vpop.f32.mrf.mxu0
      %v3835 = vadd.f32 0.0, %v3834
      %v3836 = vpop.f32.mrf.mxu0
      %3837 = vmatprep.mubr.bf16.mxu0 0
      %3838 = vmatmul.mubr.bf16.gmra.mxu0 %v3723
      %v3839 = vpop.f32.mrf.mxu0
      %v3840 = vadd.f32 0.0, %v3839
      %v3841 = vpop.f32.mrf.mxu0
      %v3842 = vpop.f32.mrf.mxu0
      %v3843 = vadd.f32 0.0, %v3842
      %v3844 = vpop.f32.mrf.mxu0
      %3845 = vmatprep.mubr.bf16.mxu0 0
      %3846 = vmatmul.mubr.bf16.gmra.mxu0 %v3726
      %v3847 = vpop.f32.mrf.mxu0
      %v3848 = vadd.f32 0.0, %v3847
      %v3849 = vpop.f32.mrf.mxu0
      %v3850 = vpop.f32.mrf.mxu0
      %v3851 = vadd.f32 0.0, %v3850
      %v3852 = vpop.f32.mrf.mxu0
      %3853 = vmatprep.mubr.bf16.mxu0 0
      %3854 = vmatmul.mubr.bf16.gmra.mxu0 %v3729
      %v3855 = vpop.f32.mrf.mxu0
      %v3856 = vadd.f32 0.0, %v3855
      %v3857 = vpop.f32.mrf.mxu0
      %v3858 = vpop.f32.mrf.mxu0
      %v3859 = vadd.f32 0.0, %v3858
      %v3860 = vpop.f32.mrf.mxu0
      %3861 = vmatprep.mubr.bf16.mxu0 0
      %3862 = vmatmul.mubr.bf16.gmra.mxu0 %v3732
      %v3863 = vpop.f32.mrf.mxu0
      %v3864 = vadd.f32 0.0, %v3863
      %v3865 = vpop.f32.mrf.mxu0
      %v3866 = vpop.f32.mrf.mxu0
      %v3867 = vadd.f32 0.0, %v3866
      %v3868 = vpop.f32.mrf.mxu0
      %3869 = vmatprep.mubr.bf16.mxu0 0
      %3870 = vmatmul.mubr.bf16.gmra.mxu0 %v3735
      %v3871 = vpop.f32.mrf.mxu0
      %v3872 = vadd.f32 0.0, %v3871
      %v3873 = vpop.f32.mrf.mxu0
      %v3874 = vpop.f32.mrf.mxu0
      %v3875 = vadd.f32 0.0, %v3874
      %v3876 = vpop.f32.mrf.mxu0
      %3877 = vmatprep.mubr.bf16.mxu0 0
      %3878 = vmatmul.mubr.bf16.gmra.mxu0 %v3738
      %v3879 = vpop.f32.mrf.mxu0
      %v3880 = vadd.f32 0.0, %v3879
      %v3881 = vpop.f32.mrf.mxu0
      %v3882 = vpop.f32.mrf.mxu0
      %v3883 = vadd.f32 0.0, %v3882
      %v3884 = vpop.f32.mrf.mxu0
      %3885 = vmatprep.mubr.bf16.mxu0 0
      %3886 = vmatmul.mubr.bf16.gmra.mxu0 %v3741
      %v3887 = vpop.f32.mrf.mxu0
      %v3888 = vadd.f32 0.0, %v3887
      %v3889 = vpop.f32.mrf.mxu0
      %v3890 = vpop.f32.mrf.mxu0
      %v3891 = vadd.f32 0.0, %v3890
      %v3892 = vpop.f32.mrf.mxu0
      %3893 = vmatprep.mubr.bf16.mxu0 0
      %3894 = vmatmul.mubr.bf16.gmra.mxu0 %v3744
      %v3895 = vpop.f32.mrf.mxu0
      %v3896 = vadd.f32 0.0, %v3895
      %v3897 = vpop.f32.mrf.mxu0
      %v3898 = vpop.f32.mrf.mxu0
      %v3899 = vadd.f32 0.0, %v3898
      %v3900 = vpop.f32.mrf.mxu0
      %3901 = vmatprep.mubr.bf16.mxu0 0
      %3902 = vmatmul.mubr.bf16.gmra.mxu0 %v3747
      %v3903 = vpop.f32.mrf.mxu0
      %v3904 = vadd.f32 0.0, %v3903
      %v3905 = vpop.f32.mrf.mxu0
      %v3906 = vpop.f32.mrf.mxu0
      %v3907 = vadd.f32 0.0, %v3906
      %v3908 = vpop.f32.mrf.mxu0
      %3909 = vdwg.mxu0
      %v3910 = vadd.f32 %v630, %v3784
      %v3911 = vadd.f32 %v633, %v3787
      %v3912 = vadd.f32 %v638, %v3792
      %v3913 = vadd.f32 %v641, %v3795
      %v3914 = vadd.f32 %v646, %v3800
      %v3915 = vadd.f32 %v649, %v3803
      %v3916 = vadd.f32 %v654, %v3808
      %v3917 = vadd.f32 %v657, %v3811
      %v3918 = vadd.f32 %v662, %v3816
      %v3919 = vadd.f32 %v665, %v3819
      %v3920 = vadd.f32 %v670, %v3824
      %v3921 = vadd.f32 %v673, %v3827
      %v3922 = vadd.f32 %v678, %v3832
      %v3923 = vadd.f32 %v681, %v3835
      %v3924 = vadd.f32 %v686, %v3840
      %v3925 = vadd.f32 %v689, %v3843
      %v3926 = vadd.f32 %v694, %v3848
      %v3927 = vadd.f32 %v697, %v3851
      %v3928 = vadd.f32 %v702, %v3856
      %v3929 = vadd.f32 %v705, %v3859
      %v3930 = vadd.f32 %v710, %v3864
      %v3931 = vadd.f32 %v713, %v3867
      %v3932 = vadd.f32 %v718, %v3872
      %v3933 = vadd.f32 %v721, %v3875
      %v3934 = vadd.f32 %v726, %v3880
      %v3935 = vadd.f32 %v729, %v3883
      %v3936 = vadd.f32 %v734, %v3888
      %v3937 = vadd.f32 %v737, %v3891
      %v3938 = vadd.f32 %v742, %v3896
      %v3939 = vadd.f32 %v745, %v3899
      %v3940 = vadd.f32 %v750, %v3904
      %v3941 = vadd.f32 %v753, %v3907
      %v3942 = vxor.u32 %v3910, 2147483648
      %v3943 = vxor.u32 %v3911, 2147483648
      %v3944 = vxor.u32 %v3912, 2147483648
      %v3945 = vxor.u32 %v3913, 2147483648
      %v3946 = vxor.u32 %v3914, 2147483648
      %v3947 = vxor.u32 %v3915, 2147483648
      %v3948 = vxor.u32 %v3916, 2147483648
      %v3949 = vxor.u32 %v3917, 2147483648
      %v3950 = vxor.u32 %v3918, 2147483648
      %v3951 = vxor.u32 %v3919, 2147483648
      %v3952 = vxor.u32 %v3920, 2147483648
      %v3953 = vxor.u32 %v3921, 2147483648
      %v3954 = vxor.u32 %v3922, 2147483648
      %v3955 = vxor.u32 %v3923, 2147483648
      %v3956 = vxor.u32 %v3924, 2147483648
      %v3957 = vxor.u32 %v3925, 2147483648
      %v3958 = vxor.u32 %v3926, 2147483648
      %v3959 = vxor.u32 %v3927, 2147483648
      %v3960 = vxor.u32 %v3928, 2147483648
      %v3961 = vxor.u32 %v3929, 2147483648
      %v3962 = vxor.u32 %v3930, 2147483648
      %v3963 = vxor.u32 %v3931, 2147483648
      %v3964 = vxor.u32 %v3932, 2147483648
      %v3965 = vxor.u32 %v3933, 2147483648
      %v3966 = vxor.u32 %v3934, 2147483648
      %v3967 = vxor.u32 %v3935, 2147483648
      %v3968 = vxor.u32 %v3936, 2147483648
      %v3969 = vxor.u32 %v3937, 2147483648
      %v3970 = vxor.u32 %v3938, 2147483648
      %v3971 = vxor.u32 %v3939, 2147483648
      %v3972 = vxor.u32 %v3940, 2147483648
      %v3973 = vxor.u32 %v3941, 2147483648
      %v3974 = vmul.f32 %v3942, 1.442695
      %v3975 = vpow.pop %v3974
      %v3976 = vmul.f32 %v3943, 1.442695
      %v3977 = vpow.pop %v3976
      %v3978 = vmul.f32 %v3944, 1.442695
      %v3979 = vpow.pop %v3978
      %v3980 = vmul.f32 %v3945, 1.442695
      %v3981 = vpow.pop %v3980
      %v3982 = vmul.f32 %v3946, 1.442695
      %v3983 = vpow.pop %v3982
      %v3984 = vmul.f32 %v3947, 1.442695
      %v3985 = vpow.pop %v3984
      %v3986 = vmul.f32 %v3948, 1.442695
      %v3987 = vpow.pop %v3986
      %v3988 = vmul.f32 %v3949, 1.442695
      %v3989 = vpow.pop %v3988
      %v3990 = vmul.f32 %v3950, 1.442695
      %v3991 = vpow.pop %v3990
      %v3992 = vmul.f32 %v3951, 1.442695
      %v3993 = vpow.pop %v3992
      %v3994 = vmul.f32 %v3952, 1.442695
      %v3995 = vpow.pop %v3994
      %v3996 = vmul.f32 %v3953, 1.442695
      %v3997 = vpow.pop %v3996
      %v3998 = vmul.f32 %v3954, 1.442695
      %v3999 = vpow.pop %v3998
      %v4000 = vmul.f32 %v3955, 1.442695
      %v4001 = vpow.pop %v4000
      %v4002 = vmul.f32 %v3956, 1.442695
      %v4003 = vpow.pop %v4002
      %v4004 = vmul.f32 %v3957, 1.442695
      %v4005 = vpow.pop %v4004
      %v4006 = vmul.f32 %v3958, 1.442695
      %v4007 = vpow.pop %v4006
      %v4008 = vmul.f32 %v3959, 1.442695
      %v4009 = vpow.pop %v4008
      %v4010 = vmul.f32 %v3960, 1.442695
      %v4011 = vpow.pop %v4010
      %v4012 = vmul.f32 %v3961, 1.442695
      %v4013 = vpow.pop %v4012
      %v4014 = vmul.f32 %v3962, 1.442695
      %v4015 = vpow.pop %v4014
      %v4016 = vmul.f32 %v3963, 1.442695
      %v4017 = vpow.pop %v4016
      %v4018 = vmul.f32 %v3964, 1.442695
      %v4019 = vpow.pop %v4018
      %v4020 = vmul.f32 %v3965, 1.442695
      %v4021 = vpow.pop %v4020
      %v4022 = vmul.f32 %v3966, 1.442695
      %v4023 = vpow.pop %v4022
      %v4024 = vmul.f32 %v3967, 1.442695
      %v4025 = vpow.pop %v4024
      %v4026 = vmul.f32 %v3968, 1.442695
      %v4027 = vpow.pop %v4026
      %v4028 = vmul.f32 %v3969, 1.442695
      %v4029 = vpow.pop %v4028
      %v4030 = vmul.f32 %v3970, 1.442695
      %v4031 = vpow.pop %v4030
      %v4032 = vmul.f32 %v3971, 1.442695
      %v4033 = vpow.pop %v4032
      %v4034 = vmul.f32 %v3972, 1.442695
      %v4035 = vpow.pop %v4034
      %v4036 = vmul.f32 %v3973, 1.442695
      %v4037 = vpow.pop %v4036
      %v4038 = vadd.f32 %v3975, 1.0
      %v4039 = vadd.f32 %v3977, 1.0
      %v4040 = vadd.f32 %v3979, 1.0
      %v4041 = vadd.f32 %v3981, 1.0
      %v4042 = vadd.f32 %v3983, 1.0
      %v4043 = vadd.f32 %v3985, 1.0
      %v4044 = vadd.f32 %v3987, 1.0
      %v4045 = vadd.f32 %v3989, 1.0
      %v4046 = vadd.f32 %v3991, 1.0
      %v4047 = vadd.f32 %v3993, 1.0
      %v4048 = vadd.f32 %v3995, 1.0
      %v4049 = vadd.f32 %v3997, 1.0
      %v4050 = vadd.f32 %v3999, 1.0
      %v4051 = vadd.f32 %v4001, 1.0
      %v4052 = vadd.f32 %v4003, 1.0
      %v4053 = vadd.f32 %v4005, 1.0
      %v4054 = vadd.f32 %v4007, 1.0
      %v4055 = vadd.f32 %v4009, 1.0
      %v4056 = vadd.f32 %v4011, 1.0
      %v4057 = vadd.f32 %v4013, 1.0
      %v4058 = vadd.f32 %v4015, 1.0
      %v4059 = vadd.f32 %v4017, 1.0
      %v4060 = vadd.f32 %v4019, 1.0
      %v4061 = vadd.f32 %v4021, 1.0
      %v4062 = vadd.f32 %v4023, 1.0
      %v4063 = vadd.f32 %v4025, 1.0
      %v4064 = vadd.f32 %v4027, 1.0
      %v4065 = vadd.f32 %v4029, 1.0
      %v4066 = vadd.f32 %v4031, 1.0
      %v4067 = vadd.f32 %v4033, 1.0
      %v4068 = vadd.f32 %v4035, 1.0
      %v4069 = vadd.f32 %v4037, 1.0
      %v4070 = vrcp.pop %v4038
      %v4071 = vmul.f32 1.0, %v4070
      %v4072 = vrcp.pop %v4039
      %v4073 = vmul.f32 1.0, %v4072
      %v4074 = vrcp.pop %v4040
      %v4075 = vmul.f32 1.0, %v4074
      %v4076 = vrcp.pop %v4041
      %v4077 = vmul.f32 1.0, %v4076
      %v4078 = vrcp.pop %v4042
      %v4079 = vmul.f32 1.0, %v4078
      %v4080 = vrcp.pop %v4043
      %v4081 = vmul.f32 1.0, %v4080
      %v4082 = vrcp.pop %v4044
      %v4083 = vmul.f32 1.0, %v4082
      %v4084 = vrcp.pop %v4045
      %v4085 = vmul.f32 1.0, %v4084
      %v4086 = vrcp.pop %v4046
      %v4087 = vmul.f32 1.0, %v4086
      %v4088 = vrcp.pop %v4047
      %v4089 = vmul.f32 1.0, %v4088
      %v4090 = vrcp.pop %v4048
      %v4091 = vmul.f32 1.0, %v4090
      %v4092 = vrcp.pop %v4049
      %v4093 = vmul.f32 1.0, %v4092
      %v4094 = vrcp.pop %v4050
      %v4095 = vmul.f32 1.0, %v4094
      %v4096 = vrcp.pop %v4051
      %v4097 = vmul.f32 1.0, %v4096
      %v4098 = vrcp.pop %v4052
      %v4099 = vmul.f32 1.0, %v4098
      %v4100 = vrcp.pop %v4053
      %v4101 = vmul.f32 1.0, %v4100
      %v4102 = vrcp.pop %v4054
      %v4103 = vmul.f32 1.0, %v4102
      %v4104 = vrcp.pop %v4055
      %v4105 = vmul.f32 1.0, %v4104
      %v4106 = vrcp.pop %v4056
      %v4107 = vmul.f32 1.0, %v4106
      %v4108 = vrcp.pop %v4057
      %v4109 = vmul.f32 1.0, %v4108
      %v4110 = vrcp.pop %v4058
      %v4111 = vmul.f32 1.0, %v4110
      %v4112 = vrcp.pop %v4059
      %v4113 = vmul.f32 1.0, %v4112
      %v4114 = vrcp.pop %v4060
      %v4115 = vmul.f32 1.0, %v4114
      %v4116 = vrcp.pop %v4061
      %v4117 = vmul.f32 1.0, %v4116
      %v4118 = vrcp.pop %v4062
      %v4119 = vmul.f32 1.0, %v4118
      %v4120 = vrcp.pop %v4063
      %v4121 = vmul.f32 1.0, %v4120
      %v4122 = vrcp.pop %v4064
      %v4123 = vmul.f32 1.0, %v4122
      %v4124 = vrcp.pop %v4065
      %v4125 = vmul.f32 1.0, %v4124
      %v4126 = vrcp.pop %v4066
      %v4127 = vmul.f32 1.0, %v4126
      %v4128 = vrcp.pop %v4067
      %v4129 = vmul.f32 1.0, %v4128
      %v4130 = vrcp.pop %v4068
      %v4131 = vmul.f32 1.0, %v4130
      %v4132 = vrcp.pop %v4069
      %v4133 = vmul.f32 1.0, %v4132
      %v4134 = vmul.f32 %v4071, 2.0
      %v4135 = vmul.f32 %v4073, 2.0
      %v4136 = vmul.f32 %v4075, 2.0
      %v4137 = vmul.f32 %v4077, 2.0
      %v4138 = vmul.f32 %v4079, 2.0
      %v4139 = vmul.f32 %v4081, 2.0
      %v4140 = vmul.f32 %v4083, 2.0
      %v4141 = vmul.f32 %v4085, 2.0
      %v4142 = vmul.f32 %v4087, 2.0
      %v4143 = vmul.f32 %v4089, 2.0
      %v4144 = vmul.f32 %v4091, 2.0
      %v4145 = vmul.f32 %v4093, 2.0
      %v4146 = vmul.f32 %v4095, 2.0
      %v4147 = vmul.f32 %v4097, 2.0
      %v4148 = vmul.f32 %v4099, 2.0
      %v4149 = vmul.f32 %v4101, 2.0
      %v4150 = vmul.f32 %v4103, 2.0
      %v4151 = vmul.f32 %v4105, 2.0
      %v4152 = vmul.f32 %v4107, 2.0
      %v4153 = vmul.f32 %v4109, 2.0
      %v4154 = vmul.f32 %v4111, 2.0
      %v4155 = vmul.f32 %v4113, 2.0
      %v4156 = vmul.f32 %v4115, 2.0
      %v4157 = vmul.f32 %v4117, 2.0
      %v4158 = vmul.f32 %v4119, 2.0
      %v4159 = vmul.f32 %v4121, 2.0
      %v4160 = vmul.f32 %v4123, 2.0
      %v4161 = vmul.f32 %v4125, 2.0
      %v4162 = vmul.f32 %v4127, 2.0
      %v4163 = vmul.f32 %v4129, 2.0
      %v4164 = vmul.f32 %v4131, 2.0
      %v4165 = vmul.f32 %v4133, 2.0
      %v4166 = vsub.f32 %v4134, 1.0
      %v4167 = vsub.f32 %v4135, 1.0
      %v4168 = vsub.f32 %v4136, 1.0
      %v4169 = vsub.f32 %v4137, 1.0
      %v4170 = vsub.f32 %v4138, 1.0
      %v4171 = vsub.f32 %v4139, 1.0
      %v4172 = vsub.f32 %v4140, 1.0
      %v4173 = vsub.f32 %v4141, 1.0
      %v4174 = vsub.f32 %v4142, 1.0
      %v4175 = vsub.f32 %v4143, 1.0
      %v4176 = vsub.f32 %v4144, 1.0
      %v4177 = vsub.f32 %v4145, 1.0
      %v4178 = vsub.f32 %v4146, 1.0
      %v4179 = vsub.f32 %v4147, 1.0
      %v4180 = vsub.f32 %v4148, 1.0
      %v4181 = vsub.f32 %v4149, 1.0
      %v4182 = vsub.f32 %v4150, 1.0
      %v4183 = vsub.f32 %v4151, 1.0
      %v4184 = vsub.f32 %v4152, 1.0
      %v4185 = vsub.f32 %v4153, 1.0
      %v4186 = vsub.f32 %v4154, 1.0
      %v4187 = vsub.f32 %v4155, 1.0
      %v4188 = vsub.f32 %v4156, 1.0
      %v4189 = vsub.f32 %v4157, 1.0
      %v4190 = vsub.f32 %v4158, 1.0
      %v4191 = vsub.f32 %v4159, 1.0
      %v4192 = vsub.f32 %v4160, 1.0
      %v4193 = vsub.f32 %v4161, 1.0
      %v4194 = vsub.f32 %v4162, 1.0
      %v4195 = vsub.f32 %v4163, 1.0
      %v4196 = vsub.f32 %v4164, 1.0
      %v4197 = vsub.f32 %v4165, 1.0
      %v4198 = vmul.f32 %v4071, %v3124
      %v4199 = vmul.f32 %v4073, %v3125
      %v4200 = vmul.f32 %v4075, %v3126
      %v4201 = vmul.f32 %v4077, %v3127
      %v4202 = vmul.f32 %v4079, %v3128
      %v4203 = vmul.f32 %v4081, %v3129
      %v4204 = vmul.f32 %v4083, %v3130
      %v4205 = vmul.f32 %v4085, %v3131
      %v4206 = vmul.f32 %v4087, %v3132
      %v4207 = vmul.f32 %v4089, %v3133
      %v4208 = vmul.f32 %v4091, %v3134
      %v4209 = vmul.f32 %v4093, %v3135
      %v4210 = vmul.f32 %v4095, %v3136
      %v4211 = vmul.f32 %v4097, %v3137
      %v4212 = vmul.f32 %v4099, %v3138
      %v4213 = vmul.f32 %v4101, %v3139
      %v4214 = vmul.f32 %v4103, %v3140
      %v4215 = vmul.f32 %v4105, %v3141
      %v4216 = vmul.f32 %v4107, %v3142
      %v4217 = vmul.f32 %v4109, %v3143
      %v4218 = vmul.f32 %v4111, %v3144
      %v4219 = vmul.f32 %v4113, %v3145
      %v4220 = vmul.f32 %v4115, %v3146
      %v4221 = vmul.f32 %v4117, %v3147
      %v4222 = vmul.f32 %v4119, %v3148
      %v4223 = vmul.f32 %v4121, %v3149
      %v4224 = vmul.f32 %v4123, %v3150
      %v4225 = vmul.f32 %v4125, %v3151
      %v4226 = vmul.f32 %v4127, %v3152
      %v4227 = vmul.f32 %v4129, %v3153
      %v4228 = vmul.f32 %v4131, %v3154
      %v4229 = vmul.f32 %v4133, %v3155
      %4262 = vrot.lane.b32.xlu0 %v4166, 64
      %v4263 = vpop.permute.xlu0 %4262
      %4264 = vrot.lane.b32.xlu0 %v4167, 64
      %v4265 = vpop.permute.xlu0 %4264
      %4266 = vrot.lane.b32.xlu0 %v4168, 64
      %v4267 = vpop.permute.xlu0 %4266
      %4268 = vrot.lane.b32.xlu0 %v4169, 64
      %v4269 = vpop.permute.xlu0 %4268
      %4270 = vrot.lane.b32.xlu0 %v4170, 64
      %v4271 = vpop.permute.xlu0 %4270
      %4272 = vrot.lane.b32.xlu0 %v4171, 64
      %v4273 = vpop.permute.xlu0 %4272
      %4274 = vrot.lane.b32.xlu0 %v4172, 64
      %v4275 = vpop.permute.xlu0 %4274
      %4276 = vrot.lane.b32.xlu0 %v4173, 64
      %v4277 = vpop.permute.xlu0 %4276
      %4278 = vrot.lane.b32.xlu0 %v4174, 64
      %v4279 = vpop.permute.xlu0 %4278
      %4280 = vrot.lane.b32.xlu0 %v4175, 64
      %v4281 = vpop.permute.xlu0 %4280
      %4282 = vrot.lane.b32.xlu0 %v4176, 64
      %v4283 = vpop.permute.xlu0 %4282
      %4284 = vrot.lane.b32.xlu0 %v4177, 64
      %v4285 = vpop.permute.xlu0 %4284
      %4286 = vrot.lane.b32.xlu0 %v4178, 64
      %v4287 = vpop.permute.xlu0 %4286
      %4288 = vrot.lane.b32.xlu0 %v4179, 64
      %v4289 = vpop.permute.xlu0 %4288
      %4290 = vrot.lane.b32.xlu0 %v4180, 64
      %v4291 = vpop.permute.xlu0 %4290
      %4292 = vrot.lane.b32.xlu0 %v4181, 64
      %v4293 = vpop.permute.xlu0 %4292
      %4294 = vrot.lane.b32.xlu0 %v4182, 64
      %v4295 = vpop.permute.xlu0 %4294
      %4296 = vrot.lane.b32.xlu0 %v4183, 64
      %v4297 = vpop.permute.xlu0 %4296
      %4298 = vrot.lane.b32.xlu0 %v4184, 64
      %v4299 = vpop.permute.xlu0 %4298
      %4300 = vrot.lane.b32.xlu0 %v4185, 64
      %v4301 = vpop.permute.xlu0 %4300
      %4302 = vrot.lane.b32.xlu0 %v4186, 64
      %v4303 = vpop.permute.xlu0 %4302
      %4304 = vrot.lane.b32.xlu0 %v4187, 64
      %v4305 = vpop.permute.xlu0 %4304
      %4306 = vrot.lane.b32.xlu0 %v4188, 64
      %v4307 = vpop.permute.xlu0 %4306
      %4308 = vrot.lane.b32.xlu0 %v4189, 64
      %v4309 = vpop.permute.xlu0 %4308
      %4310 = vrot.lane.b32.xlu0 %v4190, 64
      %v4311 = vpop.permute.xlu0 %4310
      %4312 = vrot.lane.b32.xlu0 %v4191, 64
      %v4313 = vpop.permute.xlu0 %4312
      %4314 = vrot.lane.b32.xlu0 %v4192, 64
      %v4315 = vpop.permute.xlu0 %4314
      %4316 = vrot.lane.b32.xlu0 %v4193, 64
      %v4317 = vpop.permute.xlu0 %4316
      %4318 = vrot.lane.b32.xlu0 %v4194, 64
      %v4319 = vpop.permute.xlu0 %4318
      %4320 = vrot.lane.b32.xlu0 %v4195, 64
      %v4321 = vpop.permute.xlu0 %4320
      %4322 = vrot.lane.b32.xlu0 %v4196, 64
      %v4323 = vpop.permute.xlu0 %4322
      %4324 = vrot.lane.b32.xlu0 %v4197, 64
      %v4325 = vpop.permute.xlu0 %4324
      %v4358 = vmul.f32 %v4071, %v4263
      %v4359 = vmul.f32 %v4073, %v4265
      %v4360 = vmul.f32 %v4075, %v4267
      %v4361 = vmul.f32 %v4077, %v4269
      %v4362 = vmul.f32 %v4079, %v4271
      %v4363 = vmul.f32 %v4081, %v4273
      %v4364 = vmul.f32 %v4083, %v4275
      %v4365 = vmul.f32 %v4085, %v4277
      %v4366 = vmul.f32 %v4087, %v4279
      %v4367 = vmul.f32 %v4089, %v4281
      %v4368 = vmul.f32 %v4091, %v4283
      %v4369 = vmul.f32 %v4093, %v4285
      %v4370 = vmul.f32 %v4095, %v4287
      %v4371 = vmul.f32 %v4097, %v4289
      %v4372 = vmul.f32 %v4099, %v4291
      %v4373 = vmul.f32 %v4101, %v4293
      %v4374 = vmul.f32 %v4103, %v4295
      %v4375 = vmul.f32 %v4105, %v4297
      %v4376 = vmul.f32 %v4107, %v4299
      %v4377 = vmul.f32 %v4109, %v4301
      %v4378 = vmul.f32 %v4111, %v4303
      %v4379 = vmul.f32 %v4113, %v4305
      %v4380 = vmul.f32 %v4115, %v4307
      %v4381 = vmul.f32 %v4117, %v4309
      %v4382 = vmul.f32 %v4119, %v4311
      %v4383 = vmul.f32 %v4121, %v4313
      %v4384 = vmul.f32 %v4123, %v4315
      %v4385 = vmul.f32 %v4125, %v4317
      %v4386 = vmul.f32 %v4127, %v4319
      %v4387 = vmul.f32 %v4129, %v4321
      %v4388 = vmul.f32 %v4131, %v4323
      %v4389 = vmul.f32 %v4133, %v4325
      %4422 = vrot.lane.b32.xlu0 %v4358, 32
      %v4423 = vpop.permute.xlu0 %4422
      %4424 = vrot.lane.b32.xlu0 %v4359, 32
      %v4425 = vpop.permute.xlu0 %4424
      %4426 = vrot.lane.b32.xlu0 %v4360, 32
      %v4427 = vpop.permute.xlu0 %4426
      %4428 = vrot.lane.b32.xlu0 %v4361, 32
      %v4429 = vpop.permute.xlu0 %4428
      %4430 = vrot.lane.b32.xlu0 %v4362, 32
      %v4431 = vpop.permute.xlu0 %4430
      %4432 = vrot.lane.b32.xlu0 %v4363, 32
      %v4433 = vpop.permute.xlu0 %4432
      %4434 = vrot.lane.b32.xlu0 %v4364, 32
      %v4435 = vpop.permute.xlu0 %4434
      %4436 = vrot.lane.b32.xlu0 %v4365, 32
      %v4437 = vpop.permute.xlu0 %4436
      %4438 = vrot.lane.b32.xlu0 %v4366, 32
      %v4439 = vpop.permute.xlu0 %4438
      %4440 = vrot.lane.b32.xlu0 %v4367, 32
      %v4441 = vpop.permute.xlu0 %4440
      %4442 = vrot.lane.b32.xlu0 %v4368, 32
      %v4443 = vpop.permute.xlu0 %4442
      %4444 = vrot.lane.b32.xlu0 %v4369, 32
      %v4445 = vpop.permute.xlu0 %4444
      %4446 = vrot.lane.b32.xlu0 %v4370, 32
      %v4447 = vpop.permute.xlu0 %4446
      %4448 = vrot.lane.b32.xlu0 %v4371, 32
      %v4449 = vpop.permute.xlu0 %4448
      %4450 = vrot.lane.b32.xlu0 %v4372, 32
      %v4451 = vpop.permute.xlu0 %4450
      %4452 = vrot.lane.b32.xlu0 %v4373, 32
      %v4453 = vpop.permute.xlu0 %4452
      %4454 = vrot.lane.b32.xlu0 %v4374, 32
      %v4455 = vpop.permute.xlu0 %4454
      %4456 = vrot.lane.b32.xlu0 %v4375, 32
      %v4457 = vpop.permute.xlu0 %4456
      %4458 = vrot.lane.b32.xlu0 %v4376, 32
      %v4459 = vpop.permute.xlu0 %4458
      %4460 = vrot.lane.b32.xlu0 %v4377, 32
      %v4461 = vpop.permute.xlu0 %4460
      %4462 = vrot.lane.b32.xlu0 %v4378, 32
      %v4463 = vpop.permute.xlu0 %4462
      %4464 = vrot.lane.b32.xlu0 %v4379, 32
      %v4465 = vpop.permute.xlu0 %4464
      %4466 = vrot.lane.b32.xlu0 %v4380, 32
      %v4467 = vpop.permute.xlu0 %4466
      %4468 = vrot.lane.b32.xlu0 %v4381, 32
      %v4469 = vpop.permute.xlu0 %4468
      %4470 = vrot.lane.b32.xlu0 %v4382, 32
      %v4471 = vpop.permute.xlu0 %4470
      %4472 = vrot.lane.b32.xlu0 %v4383, 32
      %v4473 = vpop.permute.xlu0 %4472
      %4474 = vrot.lane.b32.xlu0 %v4384, 32
      %v4475 = vpop.permute.xlu0 %4474
      %4476 = vrot.lane.b32.xlu0 %v4385, 32
      %v4477 = vpop.permute.xlu0 %4476
      %4478 = vrot.lane.b32.xlu0 %v4386, 32
      %v4479 = vpop.permute.xlu0 %4478
      %4480 = vrot.lane.b32.xlu0 %v4387, 32
      %v4481 = vpop.permute.xlu0 %4480
      %4482 = vrot.lane.b32.xlu0 %v4388, 32
      %v4483 = vpop.permute.xlu0 %4482
      %4484 = vrot.lane.b32.xlu0 %v4389, 32
      %v4485 = vpop.permute.xlu0 %4484
      %v4518 = vadd.f32 %v4198, %v4423
      %v4519 = vadd.f32 %v4199, %v4425
      %v4520 = vadd.f32 %v4200, %v4427
      %v4521 = vadd.f32 %v4201, %v4429
      %v4522 = vadd.f32 %v4202, %v4431
      %v4523 = vadd.f32 %v4203, %v4433
      %v4524 = vadd.f32 %v4204, %v4435
      %v4525 = vadd.f32 %v4205, %v4437
      %v4526 = vadd.f32 %v4206, %v4439
      %v4527 = vadd.f32 %v4207, %v4441
      %v4528 = vadd.f32 %v4208, %v4443
      %v4529 = vadd.f32 %v4209, %v4445
      %v4530 = vadd.f32 %v4210, %v4447
      %v4531 = vadd.f32 %v4211, %v4449
      %v4532 = vadd.f32 %v4212, %v4451
      %v4533 = vadd.f32 %v4213, %v4453
      %v4534 = vadd.f32 %v4214, %v4455
      %v4535 = vadd.f32 %v4215, %v4457
      %v4536 = vadd.f32 %v4216, %v4459
      %v4537 = vadd.f32 %v4217, %v4461
      %v4538 = vadd.f32 %v4218, %v4463
      %v4539 = vadd.f32 %v4219, %v4465
      %v4540 = vadd.f32 %v4220, %v4467
      %v4541 = vadd.f32 %v4221, %v4469
      %v4542 = vadd.f32 %v4222, %v4471
      %v4543 = vadd.f32 %v4223, %v4473
      %v4544 = vadd.f32 %v4224, %v4475
      %v4545 = vadd.f32 %v4225, %v4477
      %v4546 = vadd.f32 %v4226, %v4479
      %v4547 = vadd.f32 %v4227, %v4481
      %v4548 = vadd.f32 %v4228, %v4483
      %v4549 = vadd.f32 %v4229, %v4485
      %v4550 = vtanh.pop %v4518
      %v4551 = vtanh.pop %v4519
      %v4552 = vtanh.pop %v4520
      %v4553 = vtanh.pop %v4521
      %v4554 = vtanh.pop %v4522
      %v4555 = vtanh.pop %v4523
      %v4556 = vtanh.pop %v4524
      %v4557 = vtanh.pop %v4525
      %v4558 = vtanh.pop %v4526
      %v4559 = vtanh.pop %v4527
      %v4560 = vtanh.pop %v4528
      %v4561 = vtanh.pop %v4529
      %v4562 = vtanh.pop %v4530
      %v4563 = vtanh.pop %v4531
      %v4564 = vtanh.pop %v4532
      %v4565 = vtanh.pop %v4533
      %v4566 = vtanh.pop %v4534
      %v4567 = vtanh.pop %v4535
      %v4568 = vtanh.pop %v4536
      %v4569 = vtanh.pop %v4537
      %v4570 = vtanh.pop %v4538
      %v4571 = vtanh.pop %v4539
      %v4572 = vtanh.pop %v4540
      %v4573 = vtanh.pop %v4541
      %v4574 = vtanh.pop %v4542
      %v4575 = vtanh.pop %v4543
      %v4576 = vtanh.pop %v4544
      %v4577 = vtanh.pop %v4545
      %v4578 = vtanh.pop %v4546
      %v4579 = vtanh.pop %v4547
      %v4580 = vtanh.pop %v4548
      %v4581 = vtanh.pop %v4549
      %4614 = vrot.lane.b32.xlu0 %v4550, 64
      %v4615 = vpop.permute.xlu0 %4614
      %4616 = vrot.lane.b32.xlu0 %v4551, 64
      %v4617 = vpop.permute.xlu0 %4616
      %4618 = vrot.lane.b32.xlu0 %v4552, 64
      %v4619 = vpop.permute.xlu0 %4618
      %4620 = vrot.lane.b32.xlu0 %v4553, 64
      %v4621 = vpop.permute.xlu0 %4620
      %4622 = vrot.lane.b32.xlu0 %v4554, 64
      %v4623 = vpop.permute.xlu0 %4622
      %4624 = vrot.lane.b32.xlu0 %v4555, 64
      %v4625 = vpop.permute.xlu0 %4624
      %4626 = vrot.lane.b32.xlu0 %v4556, 64
      %v4627 = vpop.permute.xlu0 %4626
      %4628 = vrot.lane.b32.xlu0 %v4557, 64
      %v4629 = vpop.permute.xlu0 %4628
      %4630 = vrot.lane.b32.xlu0 %v4558, 64
      %v4631 = vpop.permute.xlu0 %4630
      %4632 = vrot.lane.b32.xlu0 %v4559, 64
      %v4633 = vpop.permute.xlu0 %4632
      %4634 = vrot.lane.b32.xlu0 %v4560, 64
      %v4635 = vpop.permute.xlu0 %4634
      %4636 = vrot.lane.b32.xlu0 %v4561, 64
      %v4637 = vpop.permute.xlu0 %4636
      %4638 = vrot.lane.b32.xlu0 %v4562, 64
      %v4639 = vpop.permute.xlu0 %4638
      %4640 = vrot.lane.b32.xlu0 %v4563, 64
      %v4641 = vpop.permute.xlu0 %4640
      %4642 = vrot.lane.b32.xlu0 %v4564, 64
      %v4643 = vpop.permute.xlu0 %4642
      %4644 = vrot.lane.b32.xlu0 %v4565, 64
      %v4645 = vpop.permute.xlu0 %4644
      %4646 = vrot.lane.b32.xlu0 %v4566, 64
      %v4647 = vpop.permute.xlu0 %4646
      %4648 = vrot.lane.b32.xlu0 %v4567, 64
      %v4649 = vpop.permute.xlu0 %4648
      %4650 = vrot.lane.b32.xlu0 %v4568, 64
      %v4651 = vpop.permute.xlu0 %4650
      %4652 = vrot.lane.b32.xlu0 %v4569, 64
      %v4653 = vpop.permute.xlu0 %4652
      %4654 = vrot.lane.b32.xlu0 %v4570, 64
      %v4655 = vpop.permute.xlu0 %4654
      %4656 = vrot.lane.b32.xlu0 %v4571, 64
      %v4657 = vpop.permute.xlu0 %4656
      %4658 = vrot.lane.b32.xlu0 %v4572, 64
      %v4659 = vpop.permute.xlu0 %4658
      %4660 = vrot.lane.b32.xlu0 %v4573, 64
      %v4661 = vpop.permute.xlu0 %4660
      %4662 = vrot.lane.b32.xlu0 %v4574, 64
      %v4663 = vpop.permute.xlu0 %4662
      %4664 = vrot.lane.b32.xlu0 %v4575, 64
      %v4665 = vpop.permute.xlu0 %4664
      %4666 = vrot.lane.b32.xlu0 %v4576, 64
      %v4667 = vpop.permute.xlu0 %4666
      %4668 = vrot.lane.b32.xlu0 %v4577, 64
      %v4669 = vpop.permute.xlu0 %4668
      %4670 = vrot.lane.b32.xlu0 %v4578, 64
      %v4671 = vpop.permute.xlu0 %4670
      %4672 = vrot.lane.b32.xlu0 %v4579, 64
      %v4673 = vpop.permute.xlu0 %4672
      %4674 = vrot.lane.b32.xlu0 %v4580, 64
      %v4675 = vpop.permute.xlu0 %4674
      %4676 = vrot.lane.b32.xlu0 %v4581, 64
      %v4677 = vpop.permute.xlu0 %4676
      %v4710 = vmul.f32 %v4071, %v4615
      %v4711 = vmul.f32 %v4073, %v4617
      %v4712 = vmul.f32 %v4075, %v4619
      %v4713 = vmul.f32 %v4077, %v4621
      %v4714 = vmul.f32 %v4079, %v4623
      %v4715 = vmul.f32 %v4081, %v4625
      %v4716 = vmul.f32 %v4083, %v4627
      %v4717 = vmul.f32 %v4085, %v4629
      %v4718 = vmul.f32 %v4087, %v4631
      %v4719 = vmul.f32 %v4089, %v4633
      %v4720 = vmul.f32 %v4091, %v4635
      %v4721 = vmul.f32 %v4093, %v4637
      %v4722 = vmul.f32 %v4095, %v4639
      %v4723 = vmul.f32 %v4097, %v4641
      %v4724 = vmul.f32 %v4099, %v4643
      %v4725 = vmul.f32 %v4101, %v4645
      %v4726 = vmul.f32 %v4103, %v4647
      %v4727 = vmul.f32 %v4105, %v4649
      %v4728 = vmul.f32 %v4107, %v4651
      %v4729 = vmul.f32 %v4109, %v4653
      %v4730 = vmul.f32 %v4111, %v4655
      %v4731 = vmul.f32 %v4113, %v4657
      %v4732 = vmul.f32 %v4115, %v4659
      %v4733 = vmul.f32 %v4117, %v4661
      %v4734 = vmul.f32 %v4119, %v4663
      %v4735 = vmul.f32 %v4121, %v4665
      %v4736 = vmul.f32 %v4123, %v4667
      %v4737 = vmul.f32 %v4125, %v4669
      %v4738 = vmul.f32 %v4127, %v4671
      %v4739 = vmul.f32 %v4129, %v4673
      %v4740 = vmul.f32 %v4131, %v4675
      %v4741 = vmul.f32 %v4133, %v4677
      %v4742 = vmul.f32 %v4710, 0.01
      %v4743 = vmul.f32 %v4711, 0.01
      %v4744 = vmul.f32 %v4712, 0.01
      %v4745 = vmul.f32 %v4713, 0.01
      %v4746 = vmul.f32 %v4714, 0.01
      %v4747 = vmul.f32 %v4715, 0.01
      %v4748 = vmul.f32 %v4716, 0.01
      %v4749 = vmul.f32 %v4717, 0.01
      %v4750 = vmul.f32 %v4718, 0.01
      %v4751 = vmul.f32 %v4719, 0.01
      %v4752 = vmul.f32 %v4720, 0.01
      %v4753 = vmul.f32 %v4721, 0.01
      %v4754 = vmul.f32 %v4722, 0.01
      %v4755 = vmul.f32 %v4723, 0.01
      %v4756 = vmul.f32 %v4724, 0.01
      %v4757 = vmul.f32 %v4725, 0.01
      %v4758 = vmul.f32 %v4726, 0.01
      %v4759 = vmul.f32 %v4727, 0.01
      %v4760 = vmul.f32 %v4728, 0.01
      %v4761 = vmul.f32 %v4729, 0.01
      %v4762 = vmul.f32 %v4730, 0.01
      %v4763 = vmul.f32 %v4731, 0.01
      %v4764 = vmul.f32 %v4732, 0.01
      %v4765 = vmul.f32 %v4733, 0.01
      %v4766 = vmul.f32 %v4734, 0.01
      %v4767 = vmul.f32 %v4735, 0.01
      %v4768 = vmul.f32 %v4736, 0.01
      %v4769 = vmul.f32 %v4737, 0.01
      %v4770 = vmul.f32 %v4738, 0.01
      %v4771 = vmul.f32 %v4739, 0.01
      %v4772 = vmul.f32 %v4740, 0.01
      %v4773 = vmul.f32 %v4741, 0.01
      %v4774 = vmax.f32 %v4710, %v4742
      %v4775 = vmax.f32 %v4711, %v4743
      %v4776 = vmax.f32 %v4712, %v4744
      %v4777 = vmax.f32 %v4713, %v4745
      %v4778 = vmax.f32 %v4714, %v4746
      %v4779 = vmax.f32 %v4715, %v4747
      %v4780 = vmax.f32 %v4716, %v4748
      %v4781 = vmax.f32 %v4717, %v4749
      %v4782 = vmax.f32 %v4718, %v4750
      %v4783 = vmax.f32 %v4719, %v4751
      %v4784 = vmax.f32 %v4720, %v4752
      %v4785 = vmax.f32 %v4721, %v4753
      %v4786 = vmax.f32 %v4722, %v4754
      %v4787 = vmax.f32 %v4723, %v4755
      %v4788 = vmax.f32 %v4724, %v4756
      %v4789 = vmax.f32 %v4725, %v4757
      %v4790 = vmax.f32 %v4726, %v4758
      %v4791 = vmax.f32 %v4727, %v4759
      %v4792 = vmax.f32 %v4728, %v4760
      %v4793 = vmax.f32 %v4729, %v4761
      %v4794 = vmax.f32 %v4730, %v4762
      %v4795 = vmax.f32 %v4731, %v4763
      %v4796 = vmax.f32 %v4732, %v4764
      %v4797 = vmax.f32 %v4733, %v4765
      %v4798 = vmax.f32 %v4734, %v4766
      %v4799 = vmax.f32 %v4735, %v4767
      %v4800 = vmax.f32 %v4736, %v4768
      %v4801 = vmax.f32 %v4737, %v4769
      %v4802 = vmax.f32 %v4738, %v4770
      %v4803 = vmax.f32 %v4739, %v4771
      %v4804 = vmax.f32 %v4740, %v4772
      %v4805 = vmax.f32 %v4741, %v4773
      %v4806 = vpack.c.bf16 %v4775, %v4774
      %v4807 = vpack.c.bf16 %v4777, %v4776
      %v4808 = vpack.c.bf16 %v4779, %v4778
      %v4809 = vpack.c.bf16 %v4781, %v4780
      %v4810 = vpack.c.bf16 %v4783, %v4782
      %v4811 = vpack.c.bf16 %v4785, %v4784
      %v4812 = vpack.c.bf16 %v4787, %v4786
      %v4813 = vpack.c.bf16 %v4789, %v4788
      %v4814 = vpack.c.bf16 %v4791, %v4790
      %v4815 = vpack.c.bf16 %v4793, %v4792
      %v4816 = vpack.c.bf16 %v4795, %v4794
      %v4817 = vpack.c.bf16 %v4797, %v4796
      %v4818 = vpack.c.bf16 %v4799, %v4798
      %v4819 = vpack.c.bf16 %v4801, %v4800
      %v4820 = vpack.c.bf16 %v4803, %v4802
      %v4821 = vpack.c.bf16 %v4805, %v4804
      %v4838 = vunpack.c.l.b16 %v4806
      %v4839 = vunpack.c.h.b16 %v4806
      %v4840 = vunpack.c.l.b16 %v4807
      %v4841 = vunpack.c.h.b16 %v4807
      %v4842 = vunpack.c.l.b16 %v4808
      %v4843 = vunpack.c.h.b16 %v4808
      %v4844 = vunpack.c.l.b16 %v4809
      %v4845 = vunpack.c.h.b16 %v4809
      %v4846 = vunpack.c.l.b16 %v4810
      %v4847 = vunpack.c.h.b16 %v4810
      %v4848 = vunpack.c.l.b16 %v4811
      %v4849 = vunpack.c.h.b16 %v4811
      %v4850 = vunpack.c.l.b16 %v4812
      %v4851 = vunpack.c.h.b16 %v4812
      %v4852 = vunpack.c.l.b16 %v4813
      %v4853 = vunpack.c.h.b16 %v4813
      %v4854 = vunpack.c.l.b16 %v4814
      %v4855 = vunpack.c.h.b16 %v4814
      %v4856 = vunpack.c.l.b16 %v4815
      %v4857 = vunpack.c.h.b16 %v4815
      %v4858 = vunpack.c.l.b16 %v4816
      %v4859 = vunpack.c.h.b16 %v4816
      %v4860 = vunpack.c.l.b16 %v4817
      %v4861 = vunpack.c.h.b16 %v4817
      %v4862 = vunpack.c.l.b16 %v4818
      %v4863 = vunpack.c.h.b16 %v4818
      %v4864 = vunpack.c.l.b16 %v4819
      %v4865 = vunpack.c.h.b16 %v4819
      %v4866 = vunpack.c.l.b16 %v4820
      %v4867 = vunpack.c.h.b16 %v4820
      %v4868 = vunpack.c.l.b16 %v4821
      %v4869 = vunpack.c.h.b16 %v4821
      %v4870 = vpack.c.b16 %v4838, %v4838
      %v4871 = vpack.c.b16 %v4839, %v4839
      %v4872 = vpack.c.b16 %v4840, %v4840
      %v4873 = vpack.c.b16 %v4841, %v4841
      %v4874 = vpack.c.b16 %v4842, %v4842
      %v4875 = vpack.c.b16 %v4843, %v4843
      %v4876 = vpack.c.b16 %v4844, %v4844
      %v4877 = vpack.c.b16 %v4845, %v4845
      %v4878 = vpack.c.b16 %v4846, %v4846
      %v4879 = vpack.c.b16 %v4847, %v4847
      %v4880 = vpack.c.b16 %v4848, %v4848
      %v4881 = vpack.c.b16 %v4849, %v4849
      %v4882 = vpack.c.b16 %v4850, %v4850
      %v4883 = vpack.c.b16 %v4851, %v4851
      %v4884 = vpack.c.b16 %v4852, %v4852
      %v4885 = vpack.c.b16 %v4853, %v4853
      %v4886 = vpack.c.b16 %v4854, %v4854
      %v4887 = vpack.c.b16 %v4855, %v4855
      %v4888 = vpack.c.b16 %v4856, %v4856
      %v4889 = vpack.c.b16 %v4857, %v4857
      %v4890 = vpack.c.b16 %v4858, %v4858
      %v4891 = vpack.c.b16 %v4859, %v4859
      %v4892 = vpack.c.b16 %v4860, %v4860
      %v4893 = vpack.c.b16 %v4861, %v4861
      %v4894 = vpack.c.b16 %v4862, %v4862
      %v4895 = vpack.c.b16 %v4863, %v4863
      %v4896 = vpack.c.b16 %v4864, %v4864
      %v4897 = vpack.c.b16 %v4865, %v4865
      %v4898 = vpack.c.b16 %v4866, %v4866
      %v4899 = vpack.c.b16 %v4867, %v4867
      %v4900 = vpack.c.b16 %v4868, %v4868
      %v4901 = vpack.c.b16 %v4869, %v4869
      %4902 = vrot.lane.b32.xlu0 %v4870, 96
      %v4903 = vpop.permute.xlu0 %4902
      %4904 = vrot.lane.b32.xlu0 %v4871, 96
      %v4905 = vpop.permute.xlu0 %4904
      %4906 = vrot.lane.b32.xlu0 %v4872, 96
      %v4907 = vpop.permute.xlu0 %4906
      %4908 = vrot.lane.b32.xlu0 %v4873, 96
      %v4909 = vpop.permute.xlu0 %4908
      %4910 = vrot.lane.b32.xlu0 %v4874, 96
      %v4911 = vpop.permute.xlu0 %4910
      %4912 = vrot.lane.b32.xlu0 %v4875, 96
      %v4913 = vpop.permute.xlu0 %4912
      %4914 = vrot.lane.b32.xlu0 %v4876, 96
      %v4915 = vpop.permute.xlu0 %4914
      %4916 = vrot.lane.b32.xlu0 %v4877, 96
      %v4917 = vpop.permute.xlu0 %4916
      %4918 = vrot.lane.b32.xlu0 %v4878, 96
      %v4919 = vpop.permute.xlu0 %4918
      %4920 = vrot.lane.b32.xlu0 %v4879, 96
      %v4921 = vpop.permute.xlu0 %4920
      %4922 = vrot.lane.b32.xlu0 %v4880, 96
      %v4923 = vpop.permute.xlu0 %4922
      %4924 = vrot.lane.b32.xlu0 %v4881, 96
      %v4925 = vpop.permute.xlu0 %4924
      %4926 = vrot.lane.b32.xlu0 %v4882, 96
      %v4927 = vpop.permute.xlu0 %4926
      %4928 = vrot.lane.b32.xlu0 %v4883, 96
      %v4929 = vpop.permute.xlu0 %4928
      %4930 = vrot.lane.b32.xlu0 %v4884, 96
      %v4931 = vpop.permute.xlu0 %4930
      %4932 = vrot.lane.b32.xlu0 %v4885, 96
      %v4933 = vpop.permute.xlu0 %4932
      %4934 = vrot.lane.b32.xlu0 %v4886, 96
      %v4935 = vpop.permute.xlu0 %4934
      %4936 = vrot.lane.b32.xlu0 %v4887, 96
      %v4937 = vpop.permute.xlu0 %4936
      %4938 = vrot.lane.b32.xlu0 %v4888, 96
      %v4939 = vpop.permute.xlu0 %4938
      %4940 = vrot.lane.b32.xlu0 %v4889, 96
      %v4941 = vpop.permute.xlu0 %4940
      %4942 = vrot.lane.b32.xlu0 %v4890, 96
      %v4943 = vpop.permute.xlu0 %4942
      %4944 = vrot.lane.b32.xlu0 %v4891, 96
      %v4945 = vpop.permute.xlu0 %4944
      %4946 = vrot.lane.b32.xlu0 %v4892, 96
      %v4947 = vpop.permute.xlu0 %4946
      %4948 = vrot.lane.b32.xlu0 %v4893, 96
      %v4949 = vpop.permute.xlu0 %4948
      %4950 = vrot.lane.b32.xlu0 %v4894, 96
      %v4951 = vpop.permute.xlu0 %4950
      %4952 = vrot.lane.b32.xlu0 %v4895, 96
      %v4953 = vpop.permute.xlu0 %4952
      %4954 = vrot.lane.b32.xlu0 %v4896, 96
      %v4955 = vpop.permute.xlu0 %4954
      %4956 = vrot.lane.b32.xlu0 %v4897, 96
      %v4957 = vpop.permute.xlu0 %4956
      %4958 = vrot.lane.b32.xlu0 %v4898, 96
      %v4959 = vpop.permute.xlu0 %4958
      %4960 = vrot.lane.b32.xlu0 %v4899, 96
      %v4961 = vpop.permute.xlu0 %4960
      %4962 = vrot.lane.b32.xlu0 %v4900, 96
      %v4963 = vpop.permute.xlu0 %4962
      %4964 = vrot.lane.b32.xlu0 %v4901, 96
      %v4965 = vpop.permute.xlu0 %4964
      %vm4998 = vcmask 781824
      %4999 = vst.msk [vmem:[#allocation2] sm:$0xf] %vm4998, %v4903
      %5000 = vst.msk [vmem:[#allocation2 + $0x4] sm:$0xf] %vm4998, %v4905
      %5001 = vst.msk [vmem:[#allocation2 + $0x8] sm:$0xf] %vm4998, %v4907
      %5002 = vst.msk [vmem:[#allocation2 + $0xc] sm:$0xf] %vm4998, %v4909
      %5003 = vst.msk [vmem:[#allocation2 + $0x10] sm:$0xf] %vm4998, %v4911
      %5004 = vst.msk [vmem:[#allocation2 + $0x14] sm:$0xf] %vm4998, %v4913
      %5005 = vst.msk [vmem:[#allocation2 + $0x18] sm:$0xf] %vm4998, %v4915
      %5006 = vst.msk [vmem:[#allocation2 + $0x1c] sm:$0xf] %vm4998, %v4917
      %5007 = vst.msk [vmem:[#allocation2 + $0x20] sm:$0xf] %vm4998, %v4919
      %5008 = vst.msk [vmem:[#allocation2 + $0x24] sm:$0xf] %vm4998, %v4921
      %5009 = vst.msk [vmem:[#allocation2 + $0x28] sm:$0xf] %vm4998, %v4923
      %5010 = vst.msk [vmem:[#allocation2 + $0x2c] sm:$0xf] %vm4998, %v4925
      %5011 = vst.msk [vmem:[#allocation2 + $0x30] sm:$0xf] %vm4998, %v4927
      %5012 = vst.msk [vmem:[#allocation2 + $0x34] sm:$0xf] %vm4998, %v4929
      %5013 = vst.msk [vmem:[#allocation2 + $0x38] sm:$0xf] %vm4998, %v4931
      %5014 = vst.msk [vmem:[#allocation2 + $0x3c] sm:$0xf] %vm4998, %v4933
      %5015 = vst.msk [vmem:[#allocation2 + $0x40] sm:$0xf] %vm4998, %v4935
      %5016 = vst.msk [vmem:[#allocation2 + $0x44] sm:$0xf] %vm4998, %v4937
      %5017 = vst.msk [vmem:[#allocation2 + $0x48] sm:$0xf] %vm4998, %v4939
      %5018 = vst.msk [vmem:[#allocation2 + $0x4c] sm:$0xf] %vm4998, %v4941
      %5019 = vst.msk [vmem:[#allocation2 + $0x50] sm:$0xf] %vm4998, %v4943
      %5020 = vst.msk [vmem:[#allocation2 + $0x54] sm:$0xf] %vm4998, %v4945
      %5021 = vst.msk [vmem:[#allocation2 + $0x58] sm:$0xf] %vm4998, %v4947
      %5022 = vst.msk [vmem:[#allocation2 + $0x5c] sm:$0xf] %vm4998, %v4949
      %5023 = vst.msk [vmem:[#allocation2 + $0x60] sm:$0xf] %vm4998, %v4951
      %5024 = vst.msk [vmem:[#allocation2 + $0x64] sm:$0xf] %vm4998, %v4953
      %5025 = vst.msk [vmem:[#allocation2 + $0x68] sm:$0xf] %vm4998, %v4955
      %5026 = vst.msk [vmem:[#allocation2 + $0x6c] sm:$0xf] %vm4998, %v4957
      %5027 = vst.msk [vmem:[#allocation2 + $0x70] sm:$0xf] %vm4998, %v4959
      %5028 = vst.msk [vmem:[#allocation2 + $0x74] sm:$0xf] %vm4998, %v4961
      %5029 = vst.msk [vmem:[#allocation2 + $0x78] sm:$0xf] %vm4998, %v4963
      %5030 = vst.msk [vmem:[#allocation2 + $0x7c] sm:$0xf] %vm4998, %v4965
      %v5031 = vpack.c.bf16 %v4711, %v4710
      %v5032 = vpack.c.bf16 %v4713, %v4712
      %v5033 = vpack.c.bf16 %v4715, %v4714
      %v5034 = vpack.c.bf16 %v4717, %v4716
      %v5035 = vpack.c.bf16 %v4719, %v4718
      %v5036 = vpack.c.bf16 %v4721, %v4720
      %v5037 = vpack.c.bf16 %v4723, %v4722
      %v5038 = vpack.c.bf16 %v4725, %v4724
      %v5039 = vpack.c.bf16 %v4727, %v4726
      %v5040 = vpack.c.bf16 %v4729, %v4728
      %v5041 = vpack.c.bf16 %v4731, %v4730
      %v5042 = vpack.c.bf16 %v4733, %v4732
      %v5043 = vpack.c.bf16 %v4735, %v4734
      %v5044 = vpack.c.bf16 %v4737, %v4736
      %v5045 = vpack.c.bf16 %v4739, %v4738
      %v5046 = vpack.c.bf16 %v4741, %v4740
      %5063 = vrot.lane.b32.xlu0 %v5031, 32
      %v5064 = vpop.permute.xlu0 %5063
      %5065 = vrot.lane.b32.xlu0 %v5032, 32
      %v5066 = vpop.permute.xlu0 %5065
      %5067 = vrot.lane.b32.xlu0 %v5033, 32
      %v5068 = vpop.permute.xlu0 %5067
      %5069 = vrot.lane.b32.xlu0 %v5034, 32
      %v5070 = vpop.permute.xlu0 %5069
      %5071 = vrot.lane.b32.xlu0 %v5035, 32
      %v5072 = vpop.permute.xlu0 %5071
      %5073 = vrot.lane.b32.xlu0 %v5036, 32
      %v5074 = vpop.permute.xlu0 %5073
      %5075 = vrot.lane.b32.xlu0 %v5037, 32
      %v5076 = vpop.permute.xlu0 %5075
      %5077 = vrot.lane.b32.xlu0 %v5038, 32
      %v5078 = vpop.permute.xlu0 %5077
      %5079 = vrot.lane.b32.xlu0 %v5039, 32
      %v5080 = vpop.permute.xlu0 %5079
      %5081 = vrot.lane.b32.xlu0 %v5040, 32
      %v5082 = vpop.permute.xlu0 %5081
      %5083 = vrot.lane.b32.xlu0 %v5041, 32
      %v5084 = vpop.permute.xlu0 %5083
      %5085 = vrot.lane.b32.xlu0 %v5042, 32
      %v5086 = vpop.permute.xlu0 %5085
      %5087 = vrot.lane.b32.xlu0 %v5043, 32
      %v5088 = vpop.permute.xlu0 %5087
      %5089 = vrot.lane.b32.xlu0 %v5044, 32
      %v5090 = vpop.permute.xlu0 %5089
      %5091 = vrot.lane.b32.xlu0 %v5045, 32
      %v5092 = vpop.permute.xlu0 %5091
      %5093 = vrot.lane.b32.xlu0 %v5046, 32
      %v5094 = vpop.permute.xlu0 %5093
      %v5096 = vsel %vm784, %v5064, 0
      %v5099 = vsel %vm784, %v5066, 0
      %v5102 = vsel %vm784, %v5068, 0
      %v5105 = vsel %vm784, %v5070, 0
      %v5108 = vsel %vm784, %v5072, 0
      %v5111 = vsel %vm784, %v5074, 0
      %v5114 = vsel %vm784, %v5076, 0
      %v5117 = vsel %vm784, %v5078, 0
      %v5120 = vsel %vm784, %v5080, 0
      %v5123 = vsel %vm784, %v5082, 0
      %v5126 = vsel %vm784, %v5084, 0
      %v5129 = vsel %vm784, %v5086, 0
      %v5132 = vsel %vm784, %v5088, 0
      %v5135 = vsel %vm784, %v5090, 0
      %v5138 = vsel %vm784, %v5092, 0
      %v5141 = vsel %vm784, %v5094, 0
      %5143 = vmatprep.subr.bf16.mxu0 0
      %5144 = vmatpush1.bf16.msra.mxu0 0
      %5145 = vmatprep.subr.bf16.mxu0 0
      %5146 = vmatpush1.bf16.msra.mxu0 0
      %5147 = vmatprep.subr.bf16.mxu0 0
      %5148 = vmatpush1.bf16.msra.mxu0 0
      %5149 = vmatprep.subr.bf16.mxu0 0
      %5150 = vmatpush1.bf16.msra.mxu0 0
      %5151 = vmatprep.subr.bf16.mxu0 0
      %5152 = vmatpush1.bf16.msra.mxu0 0
      %5153 = vmatprep.subr.bf16.mxu0 0
      %5154 = vmatpush1.bf16.msra.mxu0 0
      %5155 = vmatprep.subr.bf16.mxu0 0
      %5156 = vmatpush1.bf16.msra.mxu0 %v781
      %5157 = vmatprep.subr.bf16.mxu0 0
      %5158 = vmatpush1.bf16.msra.mxu0 %v780
      %5159 = vmatprep.subr.bf16.mxu0 0
      %5160 = vmatpush2.bf16.msra.mxu0 0
      %5161 = vmatprep.subr.bf16.mxu0 0
      %5162 = vmatpush2.bf16.msra.mxu0 0
      %5163 = vmatprep.subr.bf16.mxu0 0
      %5164 = vmatpush2.bf16.msra.mxu0 0
      %5165 = vmatprep.subr.bf16.mxu0 0
      %5166 = vmatpush2.bf16.msra.mxu0 0
      %5167 = vmatprep.subr.bf16.mxu0 0
      %5168 = vmatpush2.bf16.msra.mxu0 0
      %5169 = vmatprep.subr.bf16.mxu0 0
      %5170 = vmatpush2.bf16.msra.mxu0 0
      %5171 = vmatprep.subr.bf16.mxu0 0
      %5172 = vmatpush2.bf16.msra.mxu0 0
      %5173 = vmatprep.subr.bf16.mxu0 0
      %5174 = vmatpush2.bf16.msra.mxu0 0
      %5175 = vmatprep.mubr.bf16.mxu0 0
      %5176 = vmatmul.mubr.bf16.gmra.mxu0 %v5096
      %v5177 = vpop.f32.mrf.mxu0
      %v5178 = vadd.f32 0.0, %v5177
      %v5179 = vpop.f32.mrf.mxu0
      %v5180 = vpop.f32.mrf.mxu0
      %v5181 = vadd.f32 0.0, %v5180
      %v5182 = vpop.f32.mrf.mxu0
      %5183 = vmatprep.mubr.bf16.mxu0 0
      %5184 = vmatmul.mubr.bf16.gmra.mxu0 %v5099
      %v5185 = vpop.f32.mrf.mxu0
      %v5186 = vadd.f32 0.0, %v5185
      %v5187 = vpop.f32.mrf.mxu0
      %v5188 = vpop.f32.mrf.mxu0
      %v5189 = vadd.f32 0.0, %v5188
      %v5190 = vpop.f32.mrf.mxu0
      %5191 = vmatprep.mubr.bf16.mxu0 0
      %5192 = vmatmul.mubr.bf16.gmra.mxu0 %v5102
      %v5193 = vpop.f32.mrf.mxu0
      %v5194 = vadd.f32 0.0, %v5193
      %v5195 = vpop.f32.mrf.mxu0
      %v5196 = vpop.f32.mrf.mxu0
      %v5197 = vadd.f32 0.0, %v5196
      %v5198 = vpop.f32.mrf.mxu0
      %5199 = vmatprep.mubr.bf16.mxu0 0
      %5200 = vmatmul.mubr.bf16.gmra.mxu0 %v5105
      %v5201 = vpop.f32.mrf.mxu0
      %v5202 = vadd.f32 0.0, %v5201
      %v5203 = vpop.f32.mrf.mxu0
      %v5204 = vpop.f32.mrf.mxu0
      %v5205 = vadd.f32 0.0, %v5204
      %v5206 = vpop.f32.mrf.mxu0
      %5207 = vmatprep.mubr.bf16.mxu0 0
      %5208 = vmatmul.mubr.bf16.gmra.mxu0 %v5108
      %v5209 = vpop.f32.mrf.mxu0
      %v5210 = vadd.f32 0.0, %v5209
      %v5211 = vpop.f32.mrf.mxu0
      %v5212 = vpop.f32.mrf.mxu0
      %v5213 = vadd.f32 0.0, %v5212
      %v5214 = vpop.f32.mrf.mxu0
      %5215 = vmatprep.mubr.bf16.mxu0 0
      %5216 = vmatmul.mubr.bf16.gmra.mxu0 %v5111
      %v5217 = vpop.f32.mrf.mxu0
      %v5218 = vadd.f32 0.0, %v5217
      %v5219 = vpop.f32.mrf.mxu0
      %v5220 = vpop.f32.mrf.mxu0
      %v5221 = vadd.f32 0.0, %v5220
      %v5222 = vpop.f32.mrf.mxu0
      %5223 = vmatprep.mubr.bf16.mxu0 0
      %5224 = vmatmul.mubr.bf16.gmra.mxu0 %v5114
      %v5225 = vpop.f32.mrf.mxu0
      %v5226 = vadd.f32 0.0, %v5225
      %v5227 = vpop.f32.mrf.mxu0
      %v5228 = vpop.f32.mrf.mxu0
      %v5229 = vadd.f32 0.0, %v5228
      %v5230 = vpop.f32.mrf.mxu0
      %5231 = vmatprep.mubr.bf16.mxu0 0
      %5232 = vmatmul.mubr.bf16.gmra.mxu0 %v5117
      %v5233 = vpop.f32.mrf.mxu0
      %v5234 = vadd.f32 0.0, %v5233
      %v5235 = vpop.f32.mrf.mxu0
      %v5236 = vpop.f32.mrf.mxu0
      %v5237 = vadd.f32 0.0, %v5236
      %v5238 = vpop.f32.mrf.mxu0
      %5239 = vmatprep.mubr.bf16.mxu0 0
      %5240 = vmatmul.mubr.bf16.gmra.mxu0 %v5120
      %v5241 = vpop.f32.mrf.mxu0
      %v5242 = vadd.f32 0.0, %v5241
      %v5243 = vpop.f32.mrf.mxu0
      %v5244 = vpop.f32.mrf.mxu0
      %v5245 = vadd.f32 0.0, %v5244
      %v5246 = vpop.f32.mrf.mxu0
      %5247 = vmatprep.mubr.bf16.mxu0 0
      %5248 = vmatmul.mubr.bf16.gmra.mxu0 %v5123
      %v5249 = vpop.f32.mrf.mxu0
      %v5250 = vadd.f32 0.0, %v5249
      %v5251 = vpop.f32.mrf.mxu0
      %v5252 = vpop.f32.mrf.mxu0
      %v5253 = vadd.f32 0.0, %v5252
      %v5254 = vpop.f32.mrf.mxu0
      %5255 = vmatprep.mubr.bf16.mxu0 0
      %5256 = vmatmul.mubr.bf16.gmra.mxu0 %v5126
      %v5257 = vpop.f32.mrf.mxu0
      %v5258 = vadd.f32 0.0, %v5257
      %v5259 = vpop.f32.mrf.mxu0
      %v5260 = vpop.f32.mrf.mxu0
      %v5261 = vadd.f32 0.0, %v5260
      %v5262 = vpop.f32.mrf.mxu0
      %5263 = vmatprep.mubr.bf16.mxu0 0
      %5264 = vmatmul.mubr.bf16.gmra.mxu0 %v5129
      %v5265 = vpop.f32.mrf.mxu0
      %v5266 = vadd.f32 0.0, %v5265
      %v5267 = vpop.f32.mrf.mxu0
      %v5268 = vpop.f32.mrf.mxu0
      %v5269 = vadd.f32 0.0, %v5268
      %v5270 = vpop.f32.mrf.mxu0
      %5271 = vmatprep.mubr.bf16.mxu0 0
      %5272 = vmatmul.mubr.bf16.gmra.mxu0 %v5132
      %v5273 = vpop.f32.mrf.mxu0
      %v5274 = vadd.f32 0.0, %v5273
      %v5275 = vpop.f32.mrf.mxu0
      %v5276 = vpop.f32.mrf.mxu0
      %v5277 = vadd.f32 0.0, %v5276
      %v5278 = vpop.f32.mrf.mxu0
      %5279 = vmatprep.mubr.bf16.mxu0 0
      %5280 = vmatmul.mubr.bf16.gmra.mxu0 %v5135
      %v5281 = vpop.f32.mrf.mxu0
      %v5282 = vadd.f32 0.0, %v5281
      %v5283 = vpop.f32.mrf.mxu0
      %v5284 = vpop.f32.mrf.mxu0
      %v5285 = vadd.f32 0.0, %v5284
      %v5286 = vpop.f32.mrf.mxu0
      %5287 = vmatprep.mubr.bf16.mxu0 0
      %5288 = vmatmul.mubr.bf16.gmra.mxu0 %v5138
      %v5289 = vpop.f32.mrf.mxu0
      %v5290 = vadd.f32 0.0, %v5289
      %v5291 = vpop.f32.mrf.mxu0
      %v5292 = vpop.f32.mrf.mxu0
      %v5293 = vadd.f32 0.0, %v5292
      %v5294 = vpop.f32.mrf.mxu0
      %5295 = vmatprep.mubr.bf16.mxu0 0
      %5296 = vmatmul.mubr.bf16.gmra.mxu0 %v5141
      %v5297 = vpop.f32.mrf.mxu0
      %v5298 = vadd.f32 0.0, %v5297
      %v5299 = vpop.f32.mrf.mxu0
      %v5300 = vpop.f32.mrf.mxu0
      %v5301 = vadd.f32 0.0, %v5300
      %v5302 = vpop.f32.mrf.mxu0
      %5303 = vdwg.mxu0
      %v5304 = vadd.f32 %v630, %v5178
      %v5305 = vadd.f32 %v633, %v5181
      %v5306 = vadd.f32 %v638, %v5186
      %v5307 = vadd.f32 %v641, %v5189
      %v5308 = vadd.f32 %v646, %v5194
      %v5309 = vadd.f32 %v649, %v5197
      %v5310 = vadd.f32 %v654, %v5202
      %v5311 = vadd.f32 %v657, %v5205
      %v5312 = vadd.f32 %v662, %v5210
      %v5313 = vadd.f32 %v665, %v5213
      %v5314 = vadd.f32 %v670, %v5218
      %v5315 = vadd.f32 %v673, %v5221
      %v5316 = vadd.f32 %v678, %v5226
      %v5317 = vadd.f32 %v681, %v5229
      %v5318 = vadd.f32 %v686, %v5234
      %v5319 = vadd.f32 %v689, %v5237
      %v5320 = vadd.f32 %v694, %v5242
      %v5321 = vadd.f32 %v697, %v5245
      %v5322 = vadd.f32 %v702, %v5250
      %v5323 = vadd.f32 %v705, %v5253
      %v5324 = vadd.f32 %v710, %v5258
      %v5325 = vadd.f32 %v713, %v5261
      %v5326 = vadd.f32 %v718, %v5266
      %v5327 = vadd.f32 %v721, %v5269
      %v5328 = vadd.f32 %v726, %v5274
      %v5329 = vadd.f32 %v729, %v5277
      %v5330 = vadd.f32 %v734, %v5282
      %v5331 = vadd.f32 %v737, %v5285
      %v5332 = vadd.f32 %v742, %v5290
      %v5333 = vadd.f32 %v745, %v5293
      %v5334 = vadd.f32 %v750, %v5298
      %v5335 = vadd.f32 %v753, %v5301
      %v5336 = vxor.u32 %v5304, 2147483648
      %v5337 = vxor.u32 %v5305, 2147483648
      %v5338 = vxor.u32 %v5306, 2147483648
      %v5339 = vxor.u32 %v5307, 2147483648
      %v5340 = vxor.u32 %v5308, 2147483648
      %v5341 = vxor.u32 %v5309, 2147483648
      %v5342 = vxor.u32 %v5310, 2147483648
      %v5343 = vxor.u32 %v5311, 2147483648
      %v5344 = vxor.u32 %v5312, 2147483648
      %v5345 = vxor.u32 %v5313, 2147483648
      %v5346 = vxor.u32 %v5314, 2147483648
      %v5347 = vxor.u32 %v5315, 2147483648
      %v5348 = vxor.u32 %v5316, 2147483648
      %v5349 = vxor.u32 %v5317, 2147483648
      %v5350 = vxor.u32 %v5318, 2147483648
      %v5351 = vxor.u32 %v5319, 2147483648
      %v5352 = vxor.u32 %v5320, 2147483648
      %v5353 = vxor.u32 %v5321, 2147483648
      %v5354 = vxor.u32 %v5322, 2147483648
      %v5355 = vxor.u32 %v5323, 2147483648
      %v5356 = vxor.u32 %v5324, 2147483648
      %v5357 = vxor.u32 %v5325, 2147483648
      %v5358 = vxor.u32 %v5326, 2147483648
      %v5359 = vxor.u32 %v5327, 2147483648
      %v5360 = vxor.u32 %v5328, 2147483648
      %v5361 = vxor.u32 %v5329, 2147483648
      %v5362 = vxor.u32 %v5330, 2147483648
      %v5363 = vxor.u32 %v5331, 2147483648
      %v5364 = vxor.u32 %v5332, 2147483648
      %v5365 = vxor.u32 %v5333, 2147483648
      %v5366 = vxor.u32 %v5334, 2147483648
      %v5367 = vxor.u32 %v5335, 2147483648
      %v5368 = vmul.f32 %v5336, 1.442695
      %v5369 = vpow.pop %v5368
      %v5370 = vmul.f32 %v5337, 1.442695
      %v5371 = vpow.pop %v5370
      %v5372 = vmul.f32 %v5338, 1.442695
      %v5373 = vpow.pop %v5372
      %v5374 = vmul.f32 %v5339, 1.442695
      %v5375 = vpow.pop %v5374
      %v5376 = vmul.f32 %v5340, 1.442695
      %v5377 = vpow.pop %v5376
      %v5378 = vmul.f32 %v5341, 1.442695
      %v5379 = vpow.pop %v5378
      %v5380 = vmul.f32 %v5342, 1.442695
      %v5381 = vpow.pop %v5380
      %v5382 = vmul.f32 %v5343, 1.442695
      %v5383 = vpow.pop %v5382
      %v5384 = vmul.f32 %v5344, 1.442695
      %v5385 = vpow.pop %v5384
      %v5386 = vmul.f32 %v5345, 1.442695
      %v5387 = vpow.pop %v5386
      %v5388 = vmul.f32 %v5346, 1.442695
      %v5389 = vpow.pop %v5388
      %v5390 = vmul.f32 %v5347, 1.442695
      %v5391 = vpow.pop %v5390
      %v5392 = vmul.f32 %v5348, 1.442695
      %v5393 = vpow.pop %v5392
      %v5394 = vmul.f32 %v5349, 1.442695
      %v5395 = vpow.pop %v5394
      %v5396 = vmul.f32 %v5350, 1.442695
      %v5397 = vpow.pop %v5396
      %v5398 = vmul.f32 %v5351, 1.442695
      %v5399 = vpow.pop %v5398
      %v5400 = vmul.f32 %v5352, 1.442695
      %v5401 = vpow.pop %v5400
      %v5402 = vmul.f32 %v5353, 1.442695
      %v5403 = vpow.pop %v5402
      %v5404 = vmul.f32 %v5354, 1.442695
      %v5405 = vpow.pop %v5404
      %v5406 = vmul.f32 %v5355, 1.442695
      %v5407 = vpow.pop %v5406
      %v5408 = vmul.f32 %v5356, 1.442695
      %v5409 = vpow.pop %v5408
      %v5410 = vmul.f32 %v5357, 1.442695
      %v5411 = vpow.pop %v5410
      %v5412 = vmul.f32 %v5358, 1.442695
      %v5413 = vpow.pop %v5412
      %v5414 = vmul.f32 %v5359, 1.442695
      %v5415 = vpow.pop %v5414
      %v5416 = vmul.f32 %v5360, 1.442695
      %v5417 = vpow.pop %v5416
      %v5418 = vmul.f32 %v5361, 1.442695
      %v5419 = vpow.pop %v5418
      %v5420 = vmul.f32 %v5362, 1.442695
      %v5421 = vpow.pop %v5420
      %v5422 = vmul.f32 %v5363, 1.442695
      %v5423 = vpow.pop %v5422
      %v5424 = vmul.f32 %v5364, 1.442695
      %v5425 = vpow.pop %v5424
      %v5426 = vmul.f32 %v5365, 1.442695
      %v5427 = vpow.pop %v5426
      %v5428 = vmul.f32 %v5366, 1.442695
      %v5429 = vpow.pop %v5428
      %v5430 = vmul.f32 %v5367, 1.442695
      %v5431 = vpow.pop %v5430
      %v5432 = vadd.f32 %v5369, 1.0
      %v5433 = vadd.f32 %v5371, 1.0
      %v5434 = vadd.f32 %v5373, 1.0
      %v5435 = vadd.f32 %v5375, 1.0
      %v5436 = vadd.f32 %v5377, 1.0
      %v5437 = vadd.f32 %v5379, 1.0
      %v5438 = vadd.f32 %v5381, 1.0
      %v5439 = vadd.f32 %v5383, 1.0
      %v5440 = vadd.f32 %v5385, 1.0
      %v5441 = vadd.f32 %v5387, 1.0
      %v5442 = vadd.f32 %v5389, 1.0
      %v5443 = vadd.f32 %v5391, 1.0
      %v5444 = vadd.f32 %v5393, 1.0
      %v5445 = vadd.f32 %v5395, 1.0
      %v5446 = vadd.f32 %v5397, 1.0
      %v5447 = vadd.f32 %v5399, 1.0
      %v5448 = vadd.f32 %v5401, 1.0
      %v5449 = vadd.f32 %v5403, 1.0
      %v5450 = vadd.f32 %v5405, 1.0
      %v5451 = vadd.f32 %v5407, 1.0
      %v5452 = vadd.f32 %v5409, 1.0
      %v5453 = vadd.f32 %v5411, 1.0
      %v5454 = vadd.f32 %v5413, 1.0
      %v5455 = vadd.f32 %v5415, 1.0
      %v5456 = vadd.f32 %v5417, 1.0
      %v5457 = vadd.f32 %v5419, 1.0
      %v5458 = vadd.f32 %v5421, 1.0
      %v5459 = vadd.f32 %v5423, 1.0
      %v5460 = vadd.f32 %v5425, 1.0
      %v5461 = vadd.f32 %v5427, 1.0
      %v5462 = vadd.f32 %v5429, 1.0
      %v5463 = vadd.f32 %v5431, 1.0
      %v5464 = vrcp.pop %v5432
      %v5465 = vmul.f32 1.0, %v5464
      %v5466 = vrcp.pop %v5433
      %v5467 = vmul.f32 1.0, %v5466
      %v5468 = vrcp.pop %v5434
      %v5469 = vmul.f32 1.0, %v5468
      %v5470 = vrcp.pop %v5435
      %v5471 = vmul.f32 1.0, %v5470
      %v5472 = vrcp.pop %v5436
      %v5473 = vmul.f32 1.0, %v5472
      %v5474 = vrcp.pop %v5437
      %v5475 = vmul.f32 1.0, %v5474
      %v5476 = vrcp.pop %v5438
      %v5477 = vmul.f32 1.0, %v5476
      %v5478 = vrcp.pop %v5439
      %v5479 = vmul.f32 1.0, %v5478
      %v5480 = vrcp.pop %v5440
      %v5481 = vmul.f32 1.0, %v5480
      %v5482 = vrcp.pop %v5441
      %v5483 = vmul.f32 1.0, %v5482
      %v5484 = vrcp.pop %v5442
      %v5485 = vmul.f32 1.0, %v5484
      %v5486 = vrcp.pop %v5443
      %v5487 = vmul.f32 1.0, %v5486
      %v5488 = vrcp.pop %v5444
      %v5489 = vmul.f32 1.0, %v5488
      %v5490 = vrcp.pop %v5445
      %v5491 = vmul.f32 1.0, %v5490
      %v5492 = vrcp.pop %v5446
      %v5493 = vmul.f32 1.0, %v5492
      %v5494 = vrcp.pop %v5447
      %v5495 = vmul.f32 1.0, %v5494
      %v5496 = vrcp.pop %v5448
      %v5497 = vmul.f32 1.0, %v5496
      %v5498 = vrcp.pop %v5449
      %v5499 = vmul.f32 1.0, %v5498
      %v5500 = vrcp.pop %v5450
      %v5501 = vmul.f32 1.0, %v5500
      %v5502 = vrcp.pop %v5451
      %v5503 = vmul.f32 1.0, %v5502
      %v5504 = vrcp.pop %v5452
      %v5505 = vmul.f32 1.0, %v5504
      %v5506 = vrcp.pop %v5453
      %v5507 = vmul.f32 1.0, %v5506
      %v5508 = vrcp.pop %v5454
      %v5509 = vmul.f32 1.0, %v5508
      %v5510 = vrcp.pop %v5455
      %v5511 = vmul.f32 1.0, %v5510
      %v5512 = vrcp.pop %v5456
      %v5513 = vmul.f32 1.0, %v5512
      %v5514 = vrcp.pop %v5457
      %v5515 = vmul.f32 1.0, %v5514
      %v5516 = vrcp.pop %v5458
      %v5517 = vmul.f32 1.0, %v5516
      %v5518 = vrcp.pop %v5459
      %v5519 = vmul.f32 1.0, %v5518
      %v5520 = vrcp.pop %v5460
      %v5521 = vmul.f32 1.0, %v5520
      %v5522 = vrcp.pop %v5461
      %v5523 = vmul.f32 1.0, %v5522
      %v5524 = vrcp.pop %v5462
      %v5525 = vmul.f32 1.0, %v5524
      %v5526 = vrcp.pop %v5463
      %v5527 = vmul.f32 1.0, %v5526
      %v5528 = vmul.f32 %v5465, 2.0
      %v5529 = vmul.f32 %v5467, 2.0
      %v5530 = vmul.f32 %v5469, 2.0
      %v5531 = vmul.f32 %v5471, 2.0
      %v5532 = vmul.f32 %v5473, 2.0
      %v5533 = vmul.f32 %v5475, 2.0
      %v5534 = vmul.f32 %v5477, 2.0
      %v5535 = vmul.f32 %v5479, 2.0
      %v5536 = vmul.f32 %v5481, 2.0
      %v5537 = vmul.f32 %v5483, 2.0
      %v5538 = vmul.f32 %v5485, 2.0
      %v5539 = vmul.f32 %v5487, 2.0
      %v5540 = vmul.f32 %v5489, 2.0
      %v5541 = vmul.f32 %v5491, 2.0
      %v5542 = vmul.f32 %v5493, 2.0
      %v5543 = vmul.f32 %v5495, 2.0
      %v5544 = vmul.f32 %v5497, 2.0
      %v5545 = vmul.f32 %v5499, 2.0
      %v5546 = vmul.f32 %v5501, 2.0
      %v5547 = vmul.f32 %v5503, 2.0
      %v5548 = vmul.f32 %v5505, 2.0
      %v5549 = vmul.f32 %v5507, 2.0
      %v5550 = vmul.f32 %v5509, 2.0
      %v5551 = vmul.f32 %v5511, 2.0
      %v5552 = vmul.f32 %v5513, 2.0
      %v5553 = vmul.f32 %v5515, 2.0
      %v5554 = vmul.f32 %v5517, 2.0
      %v5555 = vmul.f32 %v5519, 2.0
      %v5556 = vmul.f32 %v5521, 2.0
      %v5557 = vmul.f32 %v5523, 2.0
      %v5558 = vmul.f32 %v5525, 2.0
      %v5559 = vmul.f32 %v5527, 2.0
      %v5560 = vsub.f32 %v5528, 1.0
      %v5561 = vsub.f32 %v5529, 1.0
      %v5562 = vsub.f32 %v5530, 1.0
      %v5563 = vsub.f32 %v5531, 1.0
      %v5564 = vsub.f32 %v5532, 1.0
      %v5565 = vsub.f32 %v5533, 1.0
      %v5566 = vsub.f32 %v5534, 1.0
      %v5567 = vsub.f32 %v5535, 1.0
      %v5568 = vsub.f32 %v5536, 1.0
      %v5569 = vsub.f32 %v5537, 1.0
      %v5570 = vsub.f32 %v5538, 1.0
      %v5571 = vsub.f32 %v5539, 1.0
      %v5572 = vsub.f32 %v5540, 1.0
      %v5573 = vsub.f32 %v5541, 1.0
      %v5574 = vsub.f32 %v5542, 1.0
      %v5575 = vsub.f32 %v5543, 1.0
      %v5576 = vsub.f32 %v5544, 1.0
      %v5577 = vsub.f32 %v5545, 1.0
      %v5578 = vsub.f32 %v5546, 1.0
      %v5579 = vsub.f32 %v5547, 1.0
      %v5580 = vsub.f32 %v5548, 1.0
      %v5581 = vsub.f32 %v5549, 1.0
      %v5582 = vsub.f32 %v5550, 1.0
      %v5583 = vsub.f32 %v5551, 1.0
      %v5584 = vsub.f32 %v5552, 1.0
      %v5585 = vsub.f32 %v5553, 1.0
      %v5586 = vsub.f32 %v5554, 1.0
      %v5587 = vsub.f32 %v5555, 1.0
      %v5588 = vsub.f32 %v5556, 1.0
      %v5589 = vsub.f32 %v5557, 1.0
      %v5590 = vsub.f32 %v5558, 1.0
      %v5591 = vsub.f32 %v5559, 1.0
      %v5592 = vmul.f32 %v5465, %v4518
      %v5593 = vmul.f32 %v5467, %v4519
      %v5594 = vmul.f32 %v5469, %v4520
      %v5595 = vmul.f32 %v5471, %v4521
      %v5596 = vmul.f32 %v5473, %v4522
      %v5597 = vmul.f32 %v5475, %v4523
      %v5598 = vmul.f32 %v5477, %v4524
      %v5599 = vmul.f32 %v5479, %v4525
      %v5600 = vmul.f32 %v5481, %v4526
      %v5601 = vmul.f32 %v5483, %v4527
      %v5602 = vmul.f32 %v5485, %v4528
      %v5603 = vmul.f32 %v5487, %v4529
      %v5604 = vmul.f32 %v5489, %v4530
      %v5605 = vmul.f32 %v5491, %v4531
      %v5606 = vmul.f32 %v5493, %v4532
      %v5607 = vmul.f32 %v5495, %v4533
      %v5608 = vmul.f32 %v5497, %v4534
      %v5609 = vmul.f32 %v5499, %v4535
      %v5610 = vmul.f32 %v5501, %v4536
      %v5611 = vmul.f32 %v5503, %v4537
      %v5612 = vmul.f32 %v5505, %v4538
      %v5613 = vmul.f32 %v5507, %v4539
      %v5614 = vmul.f32 %v5509, %v4540
      %v5615 = vmul.f32 %v5511, %v4541
      %v5616 = vmul.f32 %v5513, %v4542
      %v5617 = vmul.f32 %v5515, %v4543
      %v5618 = vmul.f32 %v5517, %v4544
      %v5619 = vmul.f32 %v5519, %v4545
      %v5620 = vmul.f32 %v5521, %v4546
      %v5621 = vmul.f32 %v5523, %v4547
      %v5622 = vmul.f32 %v5525, %v4548
      %v5623 = vmul.f32 %v5527, %v4549
      %5656 = vrot.lane.b32.xlu0 %v5560, 64
      %v5657 = vpop.permute.xlu0 %5656
      %5658 = vrot.lane.b32.xlu0 %v5561, 64
      %v5659 = vpop.permute.xlu0 %5658
      %5660 = vrot.lane.b32.xlu0 %v5562, 64
      %v5661 = vpop.permute.xlu0 %5660
      %5662 = vrot.lane.b32.xlu0 %v5563, 64
      %v5663 = vpop.permute.xlu0 %5662
      %5664 = vrot.lane.b32.xlu0 %v5564, 64
      %v5665 = vpop.permute.xlu0 %5664
      %5666 = vrot.lane.b32.xlu0 %v5565, 64
      %v5667 = vpop.permute.xlu0 %5666
      %5668 = vrot.lane.b32.xlu0 %v5566, 64
      %v5669 = vpop.permute.xlu0 %5668
      %5670 = vrot.lane.b32.xlu0 %v5567, 64
      %v5671 = vpop.permute.xlu0 %5670
      %5672 = vrot.lane.b32.xlu0 %v5568, 64
      %v5673 = vpop.permute.xlu0 %5672
      %5674 = vrot.lane.b32.xlu0 %v5569, 64
      %v5675 = vpop.permute.xlu0 %5674
      %5676 = vrot.lane.b32.xlu0 %v5570, 64
      %v5677 = vpop.permute.xlu0 %5676
      %5678 = vrot.lane.b32.xlu0 %v5571, 64
      %v5679 = vpop.permute.xlu0 %5678
      %5680 = vrot.lane.b32.xlu0 %v5572, 64
      %v5681 = vpop.permute.xlu0 %5680
      %5682 = vrot.lane.b32.xlu0 %v5573, 64
      %v5683 = vpop.permute.xlu0 %5682
      %5684 = vrot.lane.b32.xlu0 %v5574, 64
      %v5685 = vpop.permute.xlu0 %5684
      %5686 = vrot.lane.b32.xlu0 %v5575, 64
      %v5687 = vpop.permute.xlu0 %5686
      %5688 = vrot.lane.b32.xlu0 %v5576, 64
      %v5689 = vpop.permute.xlu0 %5688
      %5690 = vrot.lane.b32.xlu0 %v5577, 64
      %v5691 = vpop.permute.xlu0 %5690
      %5692 = vrot.lane.b32.xlu0 %v5578, 64
      %v5693 = vpop.permute.xlu0 %5692
      %5694 = vrot.lane.b32.xlu0 %v5579, 64
      %v5695 = vpop.permute.xlu0 %5694
      %5696 = vrot.lane.b32.xlu0 %v5580, 64
      %v5697 = vpop.permute.xlu0 %5696
      %5698 = vrot.lane.b32.xlu0 %v5581, 64
      %v5699 = vpop.permute.xlu0 %5698
      %5700 = vrot.lane.b32.xlu0 %v5582, 64
      %v5701 = vpop.permute.xlu0 %5700
      %5702 = vrot.lane.b32.xlu0 %v5583, 64
      %v5703 = vpop.permute.xlu0 %5702
      %5704 = vrot.lane.b32.xlu0 %v5584, 64
      %v5705 = vpop.permute.xlu0 %5704
      %5706 = vrot.lane.b32.xlu0 %v5585, 64
      %v5707 = vpop.permute.xlu0 %5706
      %5708 = vrot.lane.b32.xlu0 %v5586, 64
      %v5709 = vpop.permute.xlu0 %5708
      %5710 = vrot.lane.b32.xlu0 %v5587, 64
      %v5711 = vpop.permute.xlu0 %5710
      %5712 = vrot.lane.b32.xlu0 %v5588, 64
      %v5713 = vpop.permute.xlu0 %5712
      %5714 = vrot.lane.b32.xlu0 %v5589, 64
      %v5715 = vpop.permute.xlu0 %5714
      %5716 = vrot.lane.b32.xlu0 %v5590, 64
      %v5717 = vpop.permute.xlu0 %5716
      %5718 = vrot.lane.b32.xlu0 %v5591, 64
      %v5719 = vpop.permute.xlu0 %5718
      %v5752 = vmul.f32 %v5465, %v5657
      %v5753 = vmul.f32 %v5467, %v5659
      %v5754 = vmul.f32 %v5469, %v5661
      %v5755 = vmul.f32 %v5471, %v5663
      %v5756 = vmul.f32 %v5473, %v5665
      %v5757 = vmul.f32 %v5475, %v5667
      %v5758 = vmul.f32 %v5477, %v5669
      %v5759 = vmul.f32 %v5479, %v5671
      %v5760 = vmul.f32 %v5481, %v5673
      %v5761 = vmul.f32 %v5483, %v5675
      %v5762 = vmul.f32 %v5485, %v5677
      %v5763 = vmul.f32 %v5487, %v5679
      %v5764 = vmul.f32 %v5489, %v5681
      %v5765 = vmul.f32 %v5491, %v5683
      %v5766 = vmul.f32 %v5493, %v5685
      %v5767 = vmul.f32 %v5495, %v5687
      %v5768 = vmul.f32 %v5497, %v5689
      %v5769 = vmul.f32 %v5499, %v5691
      %v5770 = vmul.f32 %v5501, %v5693
      %v5771 = vmul.f32 %v5503, %v5695
      %v5772 = vmul.f32 %v5505, %v5697
      %v5773 = vmul.f32 %v5507, %v5699
      %v5774 = vmul.f32 %v5509, %v5701
      %v5775 = vmul.f32 %v5511, %v5703
      %v5776 = vmul.f32 %v5513, %v5705
      %v5777 = vmul.f32 %v5515, %v5707
      %v5778 = vmul.f32 %v5517, %v5709
      %v5779 = vmul.f32 %v5519, %v5711
      %v5780 = vmul.f32 %v5521, %v5713
      %v5781 = vmul.f32 %v5523, %v5715
      %v5782 = vmul.f32 %v5525, %v5717
      %v5783 = vmul.f32 %v5527, %v5719
      %5816 = vrot.lane.b32.xlu0 %v5752, 32
      %v5817 = vpop.permute.xlu0 %5816
      %5818 = vrot.lane.b32.xlu0 %v5753, 32
      %v5819 = vpop.permute.xlu0 %5818
      %5820 = vrot.lane.b32.xlu0 %v5754, 32
      %v5821 = vpop.permute.xlu0 %5820
      %5822 = vrot.lane.b32.xlu0 %v5755, 32
      %v5823 = vpop.permute.xlu0 %5822
      %5824 = vrot.lane.b32.xlu0 %v5756, 32
      %v5825 = vpop.permute.xlu0 %5824
      %5826 = vrot.lane.b32.xlu0 %v5757, 32
      %v5827 = vpop.permute.xlu0 %5826
      %5828 = vrot.lane.b32.xlu0 %v5758, 32
      %v5829 = vpop.permute.xlu0 %5828
      %5830 = vrot.lane.b32.xlu0 %v5759, 32
      %v5831 = vpop.permute.xlu0 %5830
      %5832 = vrot.lane.b32.xlu0 %v5760, 32
      %v5833 = vpop.permute.xlu0 %5832
      %5834 = vrot.lane.b32.xlu0 %v5761, 32
      %v5835 = vpop.permute.xlu0 %5834
      %5836 = vrot.lane.b32.xlu0 %v5762, 32
      %v5837 = vpop.permute.xlu0 %5836
      %5838 = vrot.lane.b32.xlu0 %v5763, 32
      %v5839 = vpop.permute.xlu0 %5838
      %5840 = vrot.lane.b32.xlu0 %v5764, 32
      %v5841 = vpop.permute.xlu0 %5840
      %5842 = vrot.lane.b32.xlu0 %v5765, 32
      %v5843 = vpop.permute.xlu0 %5842
      %5844 = vrot.lane.b32.xlu0 %v5766, 32
      %v5845 = vpop.permute.xlu0 %5844
      %5846 = vrot.lane.b32.xlu0 %v5767, 32
      %v5847 = vpop.permute.xlu0 %5846
      %5848 = vrot.lane.b32.xlu0 %v5768, 32
      %v5849 = vpop.permute.xlu0 %5848
      %5850 = vrot.lane.b32.xlu0 %v5769, 32
      %v5851 = vpop.permute.xlu0 %5850
      %5852 = vrot.lane.b32.xlu0 %v5770, 32
      %v5853 = vpop.permute.xlu0 %5852
      %5854 = vrot.lane.b32.xlu0 %v5771, 32
      %v5855 = vpop.permute.xlu0 %5854
      %5856 = vrot.lane.b32.xlu0 %v5772, 32
      %v5857 = vpop.permute.xlu0 %5856
      %5858 = vrot.lane.b32.xlu0 %v5773, 32
      %v5859 = vpop.permute.xlu0 %5858
      %5860 = vrot.lane.b32.xlu0 %v5774, 32
      %v5861 = vpop.permute.xlu0 %5860
      %5862 = vrot.lane.b32.xlu0 %v5775, 32
      %v5863 = vpop.permute.xlu0 %5862
      %5864 = vrot.lane.b32.xlu0 %v5776, 32
      %v5865 = vpop.permute.xlu0 %5864
      %5866 = vrot.lane.b32.xlu0 %v5777, 32
      %v5867 = vpop.permute.xlu0 %5866
      %5868 = vrot.lane.b32.xlu0 %v5778, 32
      %v5869 = vpop.permute.xlu0 %5868
      %5870 = vrot.lane.b32.xlu0 %v5779, 32
      %v5871 = vpop.permute.xlu0 %5870
      %5872 = vrot.lane.b32.xlu0 %v5780, 32
      %v5873 = vpop.permute.xlu0 %5872
      %5874 = vrot.lane.b32.xlu0 %v5781, 32
      %v5875 = vpop.permute.xlu0 %5874
      %5876 = vrot.lane.b32.xlu0 %v5782, 32
      %v5877 = vpop.permute.xlu0 %5876
      %5878 = vrot.lane.b32.xlu0 %v5783, 32
      %v5879 = vpop.permute.xlu0 %5878
      %v5912 = vadd.f32 %v5592, %v5817
      %v5913 = vadd.f32 %v5593, %v5819
      %v5914 = vadd.f32 %v5594, %v5821
      %v5915 = vadd.f32 %v5595, %v5823
      %v5916 = vadd.f32 %v5596, %v5825
      %v5917 = vadd.f32 %v5597, %v5827
      %v5918 = vadd.f32 %v5598, %v5829
      %v5919 = vadd.f32 %v5599, %v5831
      %v5920 = vadd.f32 %v5600, %v5833
      %v5921 = vadd.f32 %v5601, %v5835
      %v5922 = vadd.f32 %v5602, %v5837
      %v5923 = vadd.f32 %v5603, %v5839
      %v5924 = vadd.f32 %v5604, %v5841
      %v5925 = vadd.f32 %v5605, %v5843
      %v5926 = vadd.f32 %v5606, %v5845
      %v5927 = vadd.f32 %v5607, %v5847
      %v5928 = vadd.f32 %v5608, %v5849
      %v5929 = vadd.f32 %v5609, %v5851
      %v5930 = vadd.f32 %v5610, %v5853
      %v5931 = vadd.f32 %v5611, %v5855
      %v5932 = vadd.f32 %v5612, %v5857
      %v5933 = vadd.f32 %v5613, %v5859
      %v5934 = vadd.f32 %v5614, %v5861
      %v5935 = vadd.f32 %v5615, %v5863
      %v5936 = vadd.f32 %v5616, %v5865
      %v5937 = vadd.f32 %v5617, %v5867
      %v5938 = vadd.f32 %v5618, %v5869
      %v5939 = vadd.f32 %v5619, %v5871
      %v5940 = vadd.f32 %v5620, %v5873
      %v5941 = vadd.f32 %v5621, %v5875
      %v5942 = vadd.f32 %v5622, %v5877
      %v5943 = vadd.f32 %v5623, %v5879
      %v5944 = vtanh.pop %v5912
      %v5945 = vtanh.pop %v5913
      %v5946 = vtanh.pop %v5914
      %v5947 = vtanh.pop %v5915
      %v5948 = vtanh.pop %v5916
      %v5949 = vtanh.pop %v5917
      %v5950 = vtanh.pop %v5918
      %v5951 = vtanh.pop %v5919
      %v5952 = vtanh.pop %v5920
      %v5953 = vtanh.pop %v5921
      %v5954 = vtanh.pop %v5922
      %v5955 = vtanh.pop %v5923
      %v5956 = vtanh.pop %v5924
      %v5957 = vtanh.pop %v5925
      %v5958 = vtanh.pop %v5926
      %v5959 = vtanh.pop %v5927
      %v5960 = vtanh.pop %v5928
      %v5961 = vtanh.pop %v5929
      %v5962 = vtanh.pop %v5930
      %v5963 = vtanh.pop %v5931
      %v5964 = vtanh.pop %v5932
      %v5965 = vtanh.pop %v5933
      %v5966 = vtanh.pop %v5934
      %v5967 = vtanh.pop %v5935
      %v5968 = vtanh.pop %v5936
      %v5969 = vtanh.pop %v5937
      %v5970 = vtanh.pop %v5938
      %v5971 = vtanh.pop %v5939
      %v5972 = vtanh.pop %v5940
      %v5973 = vtanh.pop %v5941
      %v5974 = vtanh.pop %v5942
      %v5975 = vtanh.pop %v5943
      %6008 = vrot.lane.b32.xlu0 %v5944, 64
      %v6009 = vpop.permute.xlu0 %6008
      %6010 = vrot.lane.b32.xlu0 %v5945, 64
      %v6011 = vpop.permute.xlu0 %6010
      %6012 = vrot.lane.b32.xlu0 %v5946, 64
      %v6013 = vpop.permute.xlu0 %6012
      %6014 = vrot.lane.b32.xlu0 %v5947, 64
      %v6015 = vpop.permute.xlu0 %6014
      %6016 = vrot.lane.b32.xlu0 %v5948, 64
      %v6017 = vpop.permute.xlu0 %6016
      %6018 = vrot.lane.b32.xlu0 %v5949, 64
      %v6019 = vpop.permute.xlu0 %6018
      %6020 = vrot.lane.b32.xlu0 %v5950, 64
      %v6021 = vpop.permute.xlu0 %6020
      %6022 = vrot.lane.b32.xlu0 %v5951, 64
      %v6023 = vpop.permute.xlu0 %6022
      %6024 = vrot.lane.b32.xlu0 %v5952, 64
      %v6025 = vpop.permute.xlu0 %6024
      %6026 = vrot.lane.b32.xlu0 %v5953, 64
      %v6027 = vpop.permute.xlu0 %6026
      %6028 = vrot.lane.b32.xlu0 %v5954, 64
      %v6029 = vpop.permute.xlu0 %6028
      %6030 = vrot.lane.b32.xlu0 %v5955, 64
      %v6031 = vpop.permute.xlu0 %6030
      %6032 = vrot.lane.b32.xlu0 %v5956, 64
      %v6033 = vpop.permute.xlu0 %6032
      %6034 = vrot.lane.b32.xlu0 %v5957, 64
      %v6035 = vpop.permute.xlu0 %6034
      %6036 = vrot.lane.b32.xlu0 %v5958, 64
      %v6037 = vpop.permute.xlu0 %6036
      %6038 = vrot.lane.b32.xlu0 %v5959, 64
      %v6039 = vpop.permute.xlu0 %6038
      %6040 = vrot.lane.b32.xlu0 %v5960, 64
      %v6041 = vpop.permute.xlu0 %6040
      %6042 = vrot.lane.b32.xlu0 %v5961, 64
      %v6043 = vpop.permute.xlu0 %6042
      %6044 = vrot.lane.b32.xlu0 %v5962, 64
      %v6045 = vpop.permute.xlu0 %6044
      %6046 = vrot.lane.b32.xlu0 %v5963, 64
      %v6047 = vpop.permute.xlu0 %6046
      %6048 = vrot.lane.b32.xlu0 %v5964, 64
      %v6049 = vpop.permute.xlu0 %6048
      %6050 = vrot.lane.b32.xlu0 %v5965, 64
      %v6051 = vpop.permute.xlu0 %6050
      %6052 = vrot.lane.b32.xlu0 %v5966, 64
      %v6053 = vpop.permute.xlu0 %6052
      %6054 = vrot.lane.b32.xlu0 %v5967, 64
      %v6055 = vpop.permute.xlu0 %6054
      %6056 = vrot.lane.b32.xlu0 %v5968, 64
      %v6057 = vpop.permute.xlu0 %6056
      %6058 = vrot.lane.b32.xlu0 %v5969, 64
      %v6059 = vpop.permute.xlu0 %6058
      %6060 = vrot.lane.b32.xlu0 %v5970, 64
      %v6061 = vpop.permute.xlu0 %6060
      %6062 = vrot.lane.b32.xlu0 %v5971, 64
      %v6063 = vpop.permute.xlu0 %6062
      %6064 = vrot.lane.b32.xlu0 %v5972, 64
      %v6065 = vpop.permute.xlu0 %6064
      %6066 = vrot.lane.b32.xlu0 %v5973, 64
      %v6067 = vpop.permute.xlu0 %6066
      %6068 = vrot.lane.b32.xlu0 %v5974, 64
      %v6069 = vpop.permute.xlu0 %6068
      %6070 = vrot.lane.b32.xlu0 %v5975, 64
      %v6071 = vpop.permute.xlu0 %6070
      %v6104 = vmul.f32 %v5465, %v6009
      %v6105 = vmul.f32 %v5467, %v6011
      %v6106 = vmul.f32 %v5469, %v6013
      %v6107 = vmul.f32 %v5471, %v6015
      %v6108 = vmul.f32 %v5473, %v6017
      %v6109 = vmul.f32 %v5475, %v6019
      %v6110 = vmul.f32 %v5477, %v6021
      %v6111 = vmul.f32 %v5479, %v6023
      %v6112 = vmul.f32 %v5481, %v6025
      %v6113 = vmul.f32 %v5483, %v6027
      %v6114 = vmul.f32 %v5485, %v6029
      %v6115 = vmul.f32 %v5487, %v6031
      %v6116 = vmul.f32 %v5489, %v6033
      %v6117 = vmul.f32 %v5491, %v6035
      %v6118 = vmul.f32 %v5493, %v6037
      %v6119 = vmul.f32 %v5495, %v6039
      %v6120 = vmul.f32 %v5497, %v6041
      %v6121 = vmul.f32 %v5499, %v6043
      %v6122 = vmul.f32 %v5501, %v6045
      %v6123 = vmul.f32 %v5503, %v6047
      %v6124 = vmul.f32 %v5505, %v6049
      %v6125 = vmul.f32 %v5507, %v6051
      %v6126 = vmul.f32 %v5509, %v6053
      %v6127 = vmul.f32 %v5511, %v6055
      %v6128 = vmul.f32 %v5513, %v6057
      %v6129 = vmul.f32 %v5515, %v6059
      %v6130 = vmul.f32 %v5517, %v6061
      %v6131 = vmul.f32 %v5519, %v6063
      %v6132 = vmul.f32 %v5521, %v6065
      %v6133 = vmul.f32 %v5523, %v6067
      %v6134 = vmul.f32 %v5525, %v6069
      %v6135 = vmul.f32 %v5527, %v6071
      %v6136 = vmul.f32 %v6104, 0.01
      %v6137 = vmul.f32 %v6105, 0.01
      %v6138 = vmul.f32 %v6106, 0.01
      %v6139 = vmul.f32 %v6107, 0.01
      %v6140 = vmul.f32 %v6108, 0.01
      %v6141 = vmul.f32 %v6109, 0.01
      %v6142 = vmul.f32 %v6110, 0.01
      %v6143 = vmul.f32 %v6111, 0.01
      %v6144 = vmul.f32 %v6112, 0.01
      %v6145 = vmul.f32 %v6113, 0.01
      %v6146 = vmul.f32 %v6114, 0.01
      %v6147 = vmul.f32 %v6115, 0.01
      %v6148 = vmul.f32 %v6116, 0.01
      %v6149 = vmul.f32 %v6117, 0.01
      %v6150 = vmul.f32 %v6118, 0.01
      %v6151 = vmul.f32 %v6119, 0.01
      %v6152 = vmul.f32 %v6120, 0.01
      %v6153 = vmul.f32 %v6121, 0.01
      %v6154 = vmul.f32 %v6122, 0.01
      %v6155 = vmul.f32 %v6123, 0.01
      %v6156 = vmul.f32 %v6124, 0.01
      %v6157 = vmul.f32 %v6125, 0.01
      %v6158 = vmul.f32 %v6126, 0.01
      %v6159 = vmul.f32 %v6127, 0.01
      %v6160 = vmul.f32 %v6128, 0.01
      %v6161 = vmul.f32 %v6129, 0.01
      %v6162 = vmul.f32 %v6130, 0.01
      %v6163 = vmul.f32 %v6131, 0.01
      %v6164 = vmul.f32 %v6132, 0.01
      %v6165 = vmul.f32 %v6133, 0.01
      %v6166 = vmul.f32 %v6134, 0.01
      %v6167 = vmul.f32 %v6135, 0.01
      %v6168 = vmax.f32 %v6104, %v6136
      %v6169 = vmax.f32 %v6105, %v6137
      %v6170 = vmax.f32 %v6106, %v6138
      %v6171 = vmax.f32 %v6107, %v6139
      %v6172 = vmax.f32 %v6108, %v6140
      %v6173 = vmax.f32 %v6109, %v6141
      %v6174 = vmax.f32 %v6110, %v6142
      %v6175 = vmax.f32 %v6111, %v6143
      %v6176 = vmax.f32 %v6112, %v6144
      %v6177 = vmax.f32 %v6113, %v6145
      %v6178 = vmax.f32 %v6114, %v6146
      %v6179 = vmax.f32 %v6115, %v6147
      %v6180 = vmax.f32 %v6116, %v6148
      %v6181 = vmax.f32 %v6117, %v6149
      %v6182 = vmax.f32 %v6118, %v6150
      %v6183 = vmax.f32 %v6119, %v6151
      %v6184 = vmax.f32 %v6120, %v6152
      %v6185 = vmax.f32 %v6121, %v6153
      %v6186 = vmax.f32 %v6122, %v6154
      %v6187 = vmax.f32 %v6123, %v6155
      %v6188 = vmax.f32 %v6124, %v6156
      %v6189 = vmax.f32 %v6125, %v6157
      %v6190 = vmax.f32 %v6126, %v6158
      %v6191 = vmax.f32 %v6127, %v6159
      %v6192 = vmax.f32 %v6128, %v6160
      %v6193 = vmax.f32 %v6129, %v6161
      %v6194 = vmax.f32 %v6130, %v6162
      %v6195 = vmax.f32 %v6131, %v6163
      %v6196 = vmax.f32 %v6132, %v6164
      %v6197 = vmax.f32 %v6133, %v6165
      %v6198 = vmax.f32 %v6134, %v6166
      %v6199 = vmax.f32 %v6135, %v6167
      %v6200 = vpack.c.bf16 %v6169, %v6168
      %v6201 = vpack.c.bf16 %v6171, %v6170
      %v6202 = vpack.c.bf16 %v6173, %v6172
      %v6203 = vpack.c.bf16 %v6175, %v6174
      %v6204 = vpack.c.bf16 %v6177, %v6176
      %v6205 = vpack.c.bf16 %v6179, %v6178
      %v6206 = vpack.c.bf16 %v6181, %v6180
      %v6207 = vpack.c.bf16 %v6183, %v6182
      %v6208 = vpack.c.bf16 %v6185, %v6184
      %v6209 = vpack.c.bf16 %v6187, %v6186
      %v6210 = vpack.c.bf16 %v6189, %v6188
      %v6211 = vpack.c.bf16 %v6191, %v6190
      %v6212 = vpack.c.bf16 %v6193, %v6192
      %v6213 = vpack.c.bf16 %v6195, %v6194
      %v6214 = vpack.c.bf16 %v6197, %v6196
      %v6215 = vpack.c.bf16 %v6199, %v6198
      %v6232 = vunpack.c.l.b16 %v6200
      %v6233 = vunpack.c.h.b16 %v6200
      %v6234 = vunpack.c.l.b16 %v6201
      %v6235 = vunpack.c.h.b16 %v6201
      %v6236 = vunpack.c.l.b16 %v6202
      %v6237 = vunpack.c.h.b16 %v6202
      %v6238 = vunpack.c.l.b16 %v6203
      %v6239 = vunpack.c.h.b16 %v6203
      %v6240 = vunpack.c.l.b16 %v6204
      %v6241 = vunpack.c.h.b16 %v6204
      %v6242 = vunpack.c.l.b16 %v6205
      %v6243 = vunpack.c.h.b16 %v6205
      %v6244 = vunpack.c.l.b16 %v6206
      %v6245 = vunpack.c.h.b16 %v6206
      %v6246 = vunpack.c.l.b16 %v6207
      %v6247 = vunpack.c.h.b16 %v6207
      %v6248 = vunpack.c.l.b16 %v6208
      %v6249 = vunpack.c.h.b16 %v6208
      %v6250 = vunpack.c.l.b16 %v6209
      %v6251 = vunpack.c.h.b16 %v6209
      %v6252 = vunpack.c.l.b16 %v6210
      %v6253 = vunpack.c.h.b16 %v6210
      %v6254 = vunpack.c.l.b16 %v6211
      %v6255 = vunpack.c.h.b16 %v6211
      %v6256 = vunpack.c.l.b16 %v6212
      %v6257 = vunpack.c.h.b16 %v6212
      %v6258 = vunpack.c.l.b16 %v6213
      %v6259 = vunpack.c.h.b16 %v6213
      %v6260 = vunpack.c.l.b16 %v6214
      %v6261 = vunpack.c.h.b16 %v6214
      %v6262 = vunpack.c.l.b16 %v6215
      %v6263 = vunpack.c.h.b16 %v6215
      %v6264 = vpack.c.b16 %v6232, %v6232
      %v6265 = vpack.c.b16 %v6233, %v6233
      %v6266 = vpack.c.b16 %v6234, %v6234
      %v6267 = vpack.c.b16 %v6235, %v6235
      %v6268 = vpack.c.b16 %v6236, %v6236
      %v6269 = vpack.c.b16 %v6237, %v6237
      %v6270 = vpack.c.b16 %v6238, %v6238
      %v6271 = vpack.c.b16 %v6239, %v6239
      %v6272 = vpack.c.b16 %v6240, %v6240
      %v6273 = vpack.c.b16 %v6241, %v6241
      %v6274 = vpack.c.b16 %v6242, %v6242
      %v6275 = vpack.c.b16 %v6243, %v6243
      %v6276 = vpack.c.b16 %v6244, %v6244
      %v6277 = vpack.c.b16 %v6245, %v6245
      %v6278 = vpack.c.b16 %v6246, %v6246
      %v6279 = vpack.c.b16 %v6247, %v6247
      %v6280 = vpack.c.b16 %v6248, %v6248
      %v6281 = vpack.c.b16 %v6249, %v6249
      %v6282 = vpack.c.b16 %v6250, %v6250
      %v6283 = vpack.c.b16 %v6251, %v6251
      %v6284 = vpack.c.b16 %v6252, %v6252
      %v6285 = vpack.c.b16 %v6253, %v6253
      %v6286 = vpack.c.b16 %v6254, %v6254
      %v6287 = vpack.c.b16 %v6255, %v6255
      %v6288 = vpack.c.b16 %v6256, %v6256
      %v6289 = vpack.c.b16 %v6257, %v6257
      %v6290 = vpack.c.b16 %v6258, %v6258
      %v6291 = vpack.c.b16 %v6259, %v6259
      %v6292 = vpack.c.b16 %v6260, %v6260
      %v6293 = vpack.c.b16 %v6261, %v6261
      %v6294 = vpack.c.b16 %v6262, %v6262
      %v6295 = vpack.c.b16 %v6263, %v6263
      %vm6328 = vcmask 1044224
      %6329 = vst.msk [vmem:[#allocation2] sm:$0xf] %vm6328, %v6264
      %6330 = vst.msk [vmem:[#allocation2 + $0x4] sm:$0xf] %vm6328, %v6265
      %6331 = vst.msk [vmem:[#allocation2 + $0x8] sm:$0xf] %vm6328, %v6266
      %6332 = vst.msk [vmem:[#allocation2 + $0xc] sm:$0xf] %vm6328, %v6267
      %6333 = vst.msk [vmem:[#allocation2 + $0x10] sm:$0xf] %vm6328, %v6268
      %6334 = vst.msk [vmem:[#allocation2 + $0x14] sm:$0xf] %vm6328, %v6269
      %6335 = vst.msk [vmem:[#allocation2 + $0x18] sm:$0xf] %vm6328, %v6270
      %6336 = vst.msk [vmem:[#allocation2 + $0x1c] sm:$0xf] %vm6328, %v6271
      %6337 = vst.msk [vmem:[#allocation2 + $0x20] sm:$0xf] %vm6328, %v6272
      %6338 = vst.msk [vmem:[#allocation2 + $0x24] sm:$0xf] %vm6328, %v6273
      %6339 = vst.msk [vmem:[#allocation2 + $0x28] sm:$0xf] %vm6328, %v6274
      %6340 = vst.msk [vmem:[#allocation2 + $0x2c] sm:$0xf] %vm6328, %v6275
      %6341 = vst.msk [vmem:[#allocation2 + $0x30] sm:$0xf] %vm6328, %v6276
      %6342 = vst.msk [vmem:[#allocation2 + $0x34] sm:$0xf] %vm6328, %v6277
      %6343 = vst.msk [vmem:[#allocation2 + $0x38] sm:$0xf] %vm6328, %v6278
      %6344 = vst.msk [vmem:[#allocation2 + $0x3c] sm:$0xf] %vm6328, %v6279
      %6345 = vst.msk [vmem:[#allocation2 + $0x40] sm:$0xf] %vm6328, %v6280
      %6346 = vst.msk [vmem:[#allocation2 + $0x44] sm:$0xf] %vm6328, %v6281
      %6347 = vst.msk [vmem:[#allocation2 + $0x48] sm:$0xf] %vm6328, %v6282
      %6348 = vst.msk [vmem:[#allocation2 + $0x4c] sm:$0xf] %vm6328, %v6283
      %6349 = vst.msk [vmem:[#allocation2 + $0x50] sm:$0xf] %vm6328, %v6284
      %6350 = vst.msk [vmem:[#allocation2 + $0x54] sm:$0xf] %vm6328, %v6285
      %6351 = vst.msk [vmem:[#allocation2 + $0x58] sm:$0xf] %vm6328, %v6286
      %6352 = vst.msk [vmem:[#allocation2 + $0x5c] sm:$0xf] %vm6328, %v6287
      %6353 = vst.msk [vmem:[#allocation2 + $0x60] sm:$0xf] %vm6328, %v6288
      %6354 = vst.msk [vmem:[#allocation2 + $0x64] sm:$0xf] %vm6328, %v6289
      %6355 = vst.msk [vmem:[#allocation2 + $0x68] sm:$0xf] %vm6328, %v6290
      %6356 = vst.msk [vmem:[#allocation2 + $0x6c] sm:$0xf] %vm6328, %v6291
      %6357 = vst.msk [vmem:[#allocation2 + $0x70] sm:$0xf] %vm6328, %v6292
      %6358 = vst.msk [vmem:[#allocation2 + $0x74] sm:$0xf] %vm6328, %v6293
      %6359 = vst.msk [vmem:[#allocation2 + $0x78] sm:$0xf] %vm6328, %v6294
      %6360 = vst.msk [vmem:[#allocation2 + $0x7c] sm:$0xf] %vm6328, %v6295
      %v6361 = vld [vmem:[#allocation2] sm:$0xf]
      %v6362 = vld [vmem:[#allocation2 + $0x4] sm:$0xf]
      %v6363 = vld [vmem:[#allocation2 + $0x8] sm:$0xf]
      %v6364 = vld [vmem:[#allocation2 + $0xc] sm:$0xf]
      %v6365 = vld [vmem:[#allocation2 + $0x10] sm:$0xf]
      %v6366 = vld [vmem:[#allocation2 + $0x14] sm:$0xf]
      %v6367 = vld [vmem:[#allocation2 + $0x18] sm:$0xf]
      %v6368 = vld [vmem:[#allocation2 + $0x1c] sm:$0xf]
      %v6369 = vld [vmem:[#allocation2 + $0x20] sm:$0xf]
      %v6370 = vld [vmem:[#allocation2 + $0x24] sm:$0xf]
      %v6371 = vld [vmem:[#allocation2 + $0x28] sm:$0xf]
      %v6372 = vld [vmem:[#allocation2 + $0x2c] sm:$0xf]
      %v6373 = vld [vmem:[#allocation2 + $0x30] sm:$0xf]
      %v6374 = vld [vmem:[#allocation2 + $0x34] sm:$0xf]
      %v6375 = vld [vmem:[#allocation2 + $0x38] sm:$0xf]
      %v6376 = vld [vmem:[#allocation2 + $0x3c] sm:$0xf]
      %v6377 = vld [vmem:[#allocation2 + $0x40] sm:$0xf]
      %v6378 = vld [vmem:[#allocation2 + $0x44] sm:$0xf]
      %v6379 = vld [vmem:[#allocation2 + $0x48] sm:$0xf]
      %v6380 = vld [vmem:[#allocation2 + $0x4c] sm:$0xf]
      %v6381 = vld [vmem:[#allocation2 + $0x50] sm:$0xf]
      %v6382 = vld [vmem:[#allocation2 + $0x54] sm:$0xf]
      %v6383 = vld [vmem:[#allocation2 + $0x58] sm:$0xf]
      %v6384 = vld [vmem:[#allocation2 + $0x5c] sm:$0xf]
      %v6385 = vld [vmem:[#allocation2 + $0x60] sm:$0xf]
      %v6386 = vld [vmem:[#allocation2 + $0x64] sm:$0xf]
      %v6387 = vld [vmem:[#allocation2 + $0x68] sm:$0xf]
      %v6388 = vld [vmem:[#allocation2 + $0x6c] sm:$0xf]
      %v6389 = vld [vmem:[#allocation2 + $0x70] sm:$0xf]
      %v6390 = vld [vmem:[#allocation2 + $0x74] sm:$0xf]
      %v6391 = vld [vmem:[#allocation2 + $0x78] sm:$0xf]
      %v6392 = vld [vmem:[#allocation2 + $0x7c] sm:$0xf]
      %v6393 = vld [vmem:[%s6] sm:$0xf]
      %v6394 = vld [vmem:[%s6 + $0x4] sm:$0xf]
      %v6395 = vld [vmem:[%s6 + $0x8] sm:$0xf]
      %v6396 = vld [vmem:[%s6 + $0xc] sm:$0xf]
      %v6397 = vld [vmem:[%s6 + $0x10] sm:$0xf]
      %v6398 = vld [vmem:[%s6 + $0x14] sm:$0xf]
      %v6399 = vld [vmem:[%s6 + $0x18] sm:$0xf]
      %v6400 = vld [vmem:[%s6 + $0x1c] sm:$0xf]
      %v6401 = vld [vmem:[%s6 + $0x20] sm:$0xf]
      %v6402 = vld [vmem:[%s6 + $0x24] sm:$0xf]
      %v6403 = vld [vmem:[%s6 + $0x28] sm:$0xf]
      %v6404 = vld [vmem:[%s6 + $0x2c] sm:$0xf]
      %v6405 = vld [vmem:[%s6 + $0x30] sm:$0xf]
      %v6406 = vld [vmem:[%s6 + $0x34] sm:$0xf]
      %v6407 = vld [vmem:[%s6 + $0x38] sm:$0xf]
      %v6408 = vld [vmem:[%s6 + $0x3c] sm:$0xf]
      %v6409 = vld [vmem:[%s7] sm:$0x1]
      %v6411 = vlaneseq
      %v6412 = vshrl.u32 %v6411, 7
      %v6413 = vsub.s32 0, %v6412
      %v6414 = vrot.slane %v6409, %v6413
      %v6448 = vunpack.c.l.b16 %v6361
      %v6449 = vunpack.c.l.b16 %v6362
      %v6450 = vunpack.c.l.b16 %v6363
      %v6451 = vunpack.c.l.b16 %v6364
      %v6452 = vunpack.c.l.b16 %v6365
      %v6453 = vunpack.c.l.b16 %v6366
      %v6454 = vunpack.c.l.b16 %v6367
      %v6455 = vunpack.c.l.b16 %v6368
      %v6456 = vunpack.c.l.b16 %v6369
      %v6457 = vunpack.c.l.b16 %v6370
      %v6458 = vunpack.c.l.b16 %v6371
      %v6459 = vunpack.c.l.b16 %v6372
      %v6460 = vunpack.c.l.b16 %v6373
      %v6461 = vunpack.c.l.b16 %v6374
      %v6462 = vunpack.c.l.b16 %v6375
      %v6463 = vunpack.c.l.b16 %v6376
      %v6464 = vunpack.c.l.b16 %v6377
      %v6465 = vunpack.c.l.b16 %v6378
      %v6466 = vunpack.c.l.b16 %v6379
      %v6467 = vunpack.c.l.b16 %v6380
      %v6468 = vunpack.c.l.b16 %v6381
      %v6469 = vunpack.c.l.b16 %v6382
      %v6470 = vunpack.c.l.b16 %v6383
      %v6471 = vunpack.c.l.b16 %v6384
      %v6472 = vunpack.c.l.b16 %v6385
      %v6473 = vunpack.c.l.b16 %v6386
      %v6474 = vunpack.c.l.b16 %v6387
      %v6475 = vunpack.c.l.b16 %v6388
      %v6476 = vunpack.c.l.b16 %v6389
      %v6477 = vunpack.c.l.b16 %v6390
      %v6478 = vunpack.c.l.b16 %v6391
      %v6479 = vunpack.c.l.b16 %v6392
      %v6480 = vpack.c.b16 %v6449, %v6448
      %v6481 = vpack.c.b16 %v6451, %v6450
      %v6482 = vpack.c.b16 %v6453, %v6452
      %v6483 = vpack.c.b16 %v6455, %v6454
      %v6484 = vpack.c.b16 %v6457, %v6456
      %v6485 = vpack.c.b16 %v6459, %v6458
      %v6486 = vpack.c.b16 %v6461, %v6460
      %v6487 = vpack.c.b16 %v6463, %v6462
      %v6488 = vpack.c.b16 %v6465, %v6464
      %v6489 = vpack.c.b16 %v6467, %v6466
      %v6490 = vpack.c.b16 %v6469, %v6468
      %v6491 = vpack.c.b16 %v6471, %v6470
      %v6492 = vpack.c.b16 %v6473, %v6472
      %v6493 = vpack.c.b16 %v6475, %v6474
      %v6494 = vpack.c.b16 %v6477, %v6476
      %v6495 = vpack.c.b16 %v6479, %v6478
      %v6528 = vunpack.c.l.b16 %v6393
      %v6529 = vunpack.c.l.b16 %v6394
      %v6530 = vunpack.c.l.b16 %v6395
      %v6531 = vunpack.c.l.b16 %v6396
      %v6532 = vunpack.c.l.b16 %v6397
      %v6533 = vunpack.c.l.b16 %v6398
      %v6534 = vunpack.c.l.b16 %v6399
      %v6535 = vunpack.c.l.b16 %v6400
      %v6536 = vunpack.c.l.b16 %v6401
      %v6537 = vunpack.c.l.b16 %v6402
      %v6538 = vunpack.c.l.b16 %v6403
      %v6539 = vunpack.c.l.b16 %v6404
      %v6540 = vunpack.c.l.b16 %v6405
      %v6541 = vunpack.c.l.b16 %v6406
      %v6542 = vunpack.c.l.b16 %v6407
      %v6543 = vunpack.c.l.b16 %v6408
      %v6544 = vpack.c.b16 %v6529, %v6528
      %v6545 = vpack.c.b16 %v6531, %v6530
      %v6546 = vpack.c.b16 %v6533, %v6532
      %v6547 = vpack.c.b16 %v6535, %v6534
      %v6548 = vpack.c.b16 %v6537, %v6536
      %v6549 = vpack.c.b16 %v6539, %v6538
      %v6550 = vpack.c.b16 %v6541, %v6540
      %v6551 = vpack.c.b16 %v6543, %v6542
      %6560 = vmatprep.subr.bf16.mxu0 0
      %6561 = vmatpush1.bf16.msra.mxu0 %v6551
      %6562 = vmatprep.subr.bf16.mxu0 0
      %6563 = vmatpush1.bf16.msra.mxu0 %v6550
      %6564 = vmatprep.subr.bf16.mxu0 0
      %6565 = vmatpush1.bf16.msra.mxu0 %v6549
      %6566 = vmatprep.subr.bf16.mxu0 0
      %6567 = vmatpush1.bf16.msra.mxu0 %v6548
      %6568 = vmatprep.subr.bf16.mxu0 0
      %6569 = vmatpush1.bf16.msra.mxu0 %v6547
      %6570 = vmatprep.subr.bf16.mxu0 0
      %6571 = vmatpush1.bf16.msra.mxu0 %v6546
      %6572 = vmatprep.subr.bf16.mxu0 0
      %6573 = vmatpush1.bf16.msra.mxu0 %v6545
      %6574 = vmatprep.subr.bf16.mxu0 0
      %6575 = vmatpush1.bf16.msra.mxu0 %v6544
      %6576 = vmatprep.subr.bf16.mxu0 0
      %6577 = vmatpush2.bf16.msra.mxu0 0
      %6578 = vmatprep.subr.bf16.mxu0 0
      %6579 = vmatpush2.bf16.msra.mxu0 0
      %6580 = vmatprep.subr.bf16.mxu0 0
      %6581 = vmatpush2.bf16.msra.mxu0 0
      %6582 = vmatprep.subr.bf16.mxu0 0
      %6583 = vmatpush2.bf16.msra.mxu0 0
      %6584 = vmatprep.subr.bf16.mxu0 0
      %6585 = vmatpush2.bf16.msra.mxu0 0
      %6586 = vmatprep.subr.bf16.mxu0 0
      %6587 = vmatpush2.bf16.msra.mxu0 0
      %6588 = vmatprep.subr.bf16.mxu0 0
      %6589 = vmatpush2.bf16.msra.mxu0 0
      %6590 = vmatprep.subr.bf16.mxu0 0
      %6591 = vmatpush2.bf16.msra.mxu0 0
      %6592 = vmatprep.mubr.bf16.mxu0 0
      %6593 = vmatmul.mubr.bf16.gmra.mxu0 %v6480
      %v6594 = vpop.f32.mrf.mxu0
      %v6595 = vadd.f32 %v6414, %v6594
      %v6596 = vpop.f32.mrf.mxu0
      %v6597 = vpop.f32.mrf.mxu0
      %v6598 = vadd.f32 %v6414, %v6597
      %v6599 = vpop.f32.mrf.mxu0
      %6600 = vmatprep.mubr.bf16.mxu0 0
      %6601 = vmatmul.mubr.bf16.gmra.mxu0 %v6481
      %v6602 = vpop.f32.mrf.mxu0
      %v6603 = vadd.f32 %v6414, %v6602
      %v6604 = vpop.f32.mrf.mxu0
      %v6605 = vpop.f32.mrf.mxu0
      %v6606 = vadd.f32 %v6414, %v6605
      %v6607 = vpop.f32.mrf.mxu0
      %6608 = vmatprep.mubr.bf16.mxu0 0
      %6609 = vmatmul.mubr.bf16.gmra.mxu0 %v6482
      %v6610 = vpop.f32.mrf.mxu0
      %v6611 = vadd.f32 %v6414, %v6610
      %v6612 = vpop.f32.mrf.mxu0
      %v6613 = vpop.f32.mrf.mxu0
      %v6614 = vadd.f32 %v6414, %v6613
      %v6615 = vpop.f32.mrf.mxu0
      %6616 = vmatprep.mubr.bf16.mxu0 0
      %6617 = vmatmul.mubr.bf16.gmra.mxu0 %v6483
      %v6618 = vpop.f32.mrf.mxu0
      %v6619 = vadd.f32 %v6414, %v6618
      %v6620 = vpop.f32.mrf.mxu0
      %v6621 = vpop.f32.mrf.mxu0
      %v6622 = vadd.f32 %v6414, %v6621
      %v6623 = vpop.f32.mrf.mxu0
      %6624 = vmatprep.mubr.bf16.mxu0 0
      %6625 = vmatmul.mubr.bf16.gmra.mxu0 %v6484
      %v6626 = vpop.f32.mrf.mxu0
      %v6627 = vadd.f32 %v6414, %v6626
      %v6628 = vpop.f32.mrf.mxu0
      %v6629 = vpop.f32.mrf.mxu0
      %v6630 = vadd.f32 %v6414, %v6629
      %v6631 = vpop.f32.mrf.mxu0
      %6632 = vmatprep.mubr.bf16.mxu0 0
      %6633 = vmatmul.mubr.bf16.gmra.mxu0 %v6485
      %v6634 = vpop.f32.mrf.mxu0
      %v6635 = vadd.f32 %v6414, %v6634
      %v6636 = vpop.f32.mrf.mxu0
      %v6637 = vpop.f32.mrf.mxu0
      %v6638 = vadd.f32 %v6414, %v6637
      %v6639 = vpop.f32.mrf.mxu0
      %6640 = vmatprep.mubr.bf16.mxu0 0
      %6641 = vmatmul.mubr.bf16.gmra.mxu0 %v6486
      %v6642 = vpop.f32.mrf.mxu0
      %v6643 = vadd.f32 %v6414, %v6642
      %v6644 = vpop.f32.mrf.mxu0
      %v6645 = vpop.f32.mrf.mxu0
      %v6646 = vadd.f32 %v6414, %v6645
      %v6647 = vpop.f32.mrf.mxu0
      %6648 = vmatprep.mubr.bf16.mxu0 0
      %6649 = vmatmul.mubr.bf16.gmra.mxu0 %v6487
      %v6650 = vpop.f32.mrf.mxu0
      %v6651 = vadd.f32 %v6414, %v6650
      %v6652 = vpop.f32.mrf.mxu0
      %v6653 = vpop.f32.mrf.mxu0
      %v6654 = vadd.f32 %v6414, %v6653
      %v6655 = vpop.f32.mrf.mxu0
      %6656 = vmatprep.mubr.bf16.mxu0 0
      %6657 = vmatmul.mubr.bf16.gmra.mxu0 %v6488
      %v6658 = vpop.f32.mrf.mxu0
      %v6659 = vadd.f32 %v6414, %v6658
      %v6660 = vpop.f32.mrf.mxu0
      %v6661 = vpop.f32.mrf.mxu0
      %v6662 = vadd.f32 %v6414, %v6661
      %v6663 = vpop.f32.mrf.mxu0
      %6664 = vmatprep.mubr.bf16.mxu0 0
      %6665 = vmatmul.mubr.bf16.gmra.mxu0 %v6489
      %v6666 = vpop.f32.mrf.mxu0
      %v6667 = vadd.f32 %v6414, %v6666
      %v6668 = vpop.f32.mrf.mxu0
      %v6669 = vpop.f32.mrf.mxu0
      %v6670 = vadd.f32 %v6414, %v6669
      %v6671 = vpop.f32.mrf.mxu0
      %6672 = vmatprep.mubr.bf16.mxu0 0
      %6673 = vmatmul.mubr.bf16.gmra.mxu0 %v6490
      %v6674 = vpop.f32.mrf.mxu0
      %v6675 = vadd.f32 %v6414, %v6674
      %v6676 = vpop.f32.mrf.mxu0
      %v6677 = vpop.f32.mrf.mxu0
      %v6678 = vadd.f32 %v6414, %v6677
      %v6679 = vpop.f32.mrf.mxu0
      %6680 = vmatprep.mubr.bf16.mxu0 0
      %6681 = vmatmul.mubr.bf16.gmra.mxu0 %v6491
      %v6682 = vpop.f32.mrf.mxu0
      %v6683 = vadd.f32 %v6414, %v6682
      %v6684 = vpop.f32.mrf.mxu0
      %v6685 = vpop.f32.mrf.mxu0
      %v6686 = vadd.f32 %v6414, %v6685
      %v6687 = vpop.f32.mrf.mxu0
      %6688 = vmatprep.mubr.bf16.mxu0 0
      %6689 = vmatmul.mubr.bf16.gmra.mxu0 %v6492
      %v6690 = vpop.f32.mrf.mxu0
      %v6691 = vadd.f32 %v6414, %v6690
      %v6692 = vpop.f32.mrf.mxu0
      %v6693 = vpop.f32.mrf.mxu0
      %v6694 = vadd.f32 %v6414, %v6693
      %v6695 = vpop.f32.mrf.mxu0
      %6696 = vmatprep.mubr.bf16.mxu0 0
      %6697 = vmatmul.mubr.bf16.gmra.mxu0 %v6493
      %v6698 = vpop.f32.mrf.mxu0
      %v6699 = vadd.f32 %v6414, %v6698
      %v6700 = vpop.f32.mrf.mxu0
      %v6701 = vpop.f32.mrf.mxu0
      %v6702 = vadd.f32 %v6414, %v6701
      %v6703 = vpop.f32.mrf.mxu0
      %6704 = vmatprep.mubr.bf16.mxu0 0
      %6705 = vmatmul.mubr.bf16.gmra.mxu0 %v6494
      %v6706 = vpop.f32.mrf.mxu0
      %v6707 = vadd.f32 %v6414, %v6706
      %v6708 = vpop.f32.mrf.mxu0
      %v6709 = vpop.f32.mrf.mxu0
      %v6710 = vadd.f32 %v6414, %v6709
      %v6711 = vpop.f32.mrf.mxu0
      %6712 = vmatprep.mubr.bf16.mxu0 0
      %6713 = vmatmul.mubr.bf16.gmra.mxu0 %v6495
      %v6714 = vpop.f32.mrf.mxu0
      %v6715 = vadd.f32 %v6414, %v6714
      %v6716 = vpop.f32.mrf.mxu0
      %v6717 = vpop.f32.mrf.mxu0
      %v6718 = vadd.f32 %v6414, %v6717
      %v6719 = vpop.f32.mrf.mxu0
      %6720 = vdwg.mxu0
      %6721 = vst.msk [vmem:[%s351] sm:$0xff] %vm784, %v6595
      %6722 = vst.msk [vmem:[%s351 + $0x8] sm:$0xff] %vm784, %v6598
      %6723 = vst.msk [vmem:[%s351 + $0x10] sm:$0xff] %vm784, %v6603
      %6724 = vst.msk [vmem:[%s351 + $0x18] sm:$0xff] %vm784, %v6606
      %6725 = vst.msk [vmem:[%s351 + $0x20] sm:$0xff] %vm784, %v6611
      %6726 = vst.msk [vmem:[%s351 + $0x28] sm:$0xff] %vm784, %v6614
      %6727 = vst.msk [vmem:[%s351 + $0x30] sm:$0xff] %vm784, %v6619
      %6728 = vst.msk [vmem:[%s351 + $0x38] sm:$0xff] %vm784, %v6622
      %6729 = vst.msk [vmem:[%s351 + $0x40] sm:$0xff] %vm784, %v6627
      %6730 = vst.msk [vmem:[%s351 + $0x48] sm:$0xff] %vm784, %v6630
      %6731 = vst.msk [vmem:[%s351 + $0x50] sm:$0xff] %vm784, %v6635
      %6732 = vst.msk [vmem:[%s351 + $0x58] sm:$0xff] %vm784, %v6638
      %6733 = vst.msk [vmem:[%s351 + $0x60] sm:$0xff] %vm784, %v6643
      %6734 = vst.msk [vmem:[%s351 + $0x68] sm:$0xff] %vm784, %v6646
      %6735 = vst.msk [vmem:[%s351 + $0x70] sm:$0xff] %vm784, %v6651
      %6736 = vst.msk [vmem:[%s351 + $0x78] sm:$0xff] %vm784, %v6654
      %6737 = vst.msk [vmem:[%s351 + $0x80] sm:$0xff] %vm784, %v6659
      %6738 = vst.msk [vmem:[%s351 + $0x88] sm:$0xff] %vm784, %v6662
      %6739 = vst.msk [vmem:[%s351 + $0x90] sm:$0xff] %vm784, %v6667
      %6740 = vst.msk [vmem:[%s351 + $0x98] sm:$0xff] %vm784, %v6670
      %6741 = vst.msk [vmem:[%s351 + $0xa0] sm:$0xff] %vm784, %v6675
      %6742 = vst.msk [vmem:[%s351 + $0xa8] sm:$0xff] %vm784, %v6678
      %6743 = vst.msk [vmem:[%s351 + $0xb0] sm:$0xff] %vm784, %v6683
      %6744 = vst.msk [vmem:[%s351 + $0xb8] sm:$0xff] %vm784, %v6686
      %6745 = vst.msk [vmem:[%s351 + $0xc0] sm:$0xff] %vm784, %v6691
      %6746 = vst.msk [vmem:[%s351 + $0xc8] sm:$0xff] %vm784, %v6694
      %6747 = vst.msk [vmem:[%s351 + $0xd0] sm:$0xff] %vm784, %v6699
      %6748 = vst.msk [vmem:[%s351 + $0xd8] sm:$0xff] %vm784, %v6702
      %6749 = vst.msk [vmem:[%s351 + $0xe0] sm:$0xff] %vm784, %v6707
      %6750 = vst.msk [vmem:[%s351 + $0xe8] sm:$0xff] %vm784, %v6710
      %6751 = vst.msk [vmem:[%s351 + $0xf0] sm:$0xff] %vm784, %v6715
      %6752 = vst.msk [vmem:[%s351 + $0xf8] sm:$0xff] %vm784, %v6718
      %s6753 = smul.u32 32, %s19
      %p6754 = scmp.lt.s32.totalorder %s6753, 63
      %s6755 = scalar_select %p6754, %s6753, 63
      %s6756 = smul.addr %s6755, 8
      %s6757 = scalar_lea.vmem %s8, %s6756
      // Predicated region
      $region53: #{tpu_custom_call.1} parent=51 // pred_check
        %p6758 = pneg %p220
      $region54: #{tpu_custom_call.1} parent=51 // pred_check_branch
        %6760 = sbr.rel (%p6758) target = $region56
      $region55: #{tpu_custom_call.1} parent=51 // pred_region
        %s6761 = smul.u32 32, %s19
      $region56: #{tpu_custom_call.1} parent=51 // pred_fallthru
        _
    $region52: #{tpu_custom_call.1} parent=5 // pred_fallthru
      _
    %p6762 = scmp.le.s32.totalorder 2, %s14
    // Predicated region
    $region57: #{tpu_custom_call.1} parent=5 // pred_check
      %p6763 = pneg %p6762
    $region58: #{tpu_custom_call.1} parent=5 // pred_check_branch
      %6765 = sbr.rel (%p6763) target = $region60
    $region59: #{tpu_custom_call.1} parent=5 // pred_region
      %s6766 = ssub.s32 %s14, 2
      // Predicated region
      $region61: #{tpu_custom_call.1} parent=59 // pred_check
        %p6767 = pneg %p226
      $region62: #{tpu_custom_call.1} parent=59 // pred_check_branch
        %6769 = sbr.rel (%p6767) target = $region64
      $region63: #{tpu_custom_call.1} parent=59 // pred_region
        %s6770 = smul.u32 32, %s20
        %p6771 = scmp.lt.s32.totalorder %s6770, 63
        %s6772 = scalar_select %p6771, %s6770, 63
        %s6773 = smul.addr %s6772, 8
        %s6774 = scalar_lea.vmem %s8, %s6773
      $region64: #{tpu_custom_call.1} parent=59 // pred_fallthru
        _
    $region60: #{tpu_custom_call.1} parent=5 // pred_fallthru
      _
  $region6: #{tpu_custom_call.1} parent=0 // loop_footer
    %s18 = sadd.s32 1, %s14
  $region7: #{tpu_custom_call.1} parent=0 // loop_footer_branch
    %13 = sbr.rel target = $region3
  $region8: #{tpu_custom_call.1} parent=0 // loop_exit
    _

</llo_original>
